<compile_context>
chip_gen: v5e
topology: v5e:2x2
jax: 0.10.0
libtpu: 0.0.40
codegen_flags: <defaults>
</compile_context>

<pallas_src>
import functools

import jax
import jax.numpy as jnp
from jax.experimental import pallas as pl
from jax.experimental.pallas import tpu as pltpu


def _round_up(n, m):
    return ((n + m - 1) // m) * m


def fused_lstm_kernel(x_ref, w_big_ref, b_ref, fc_w_ref, fc_b_ref, out_ref,
                      *, num_layers, hidden_size, d_pad):
    """Whole model in one invocation (no grid).

      x_ref:     (T, d_pad, B)        time-major, features on sublanes, batch on lanes
      w_big_ref: (L*4H, d_pad + L*H)  fused gate weights (see wrapper)
      b_ref:     (L*4H, 1)            per-layer (b_ih + b_hh), stacked
      fc_w_ref:  (H, 1)
      fc_b_ref:  (1, 1)
      out_ref:   (T, B)               ReLU(Linear(h_top))  — lane-dense rows
    """
    T, _, B = x_ref.shape
    H = hidden_size
    G = 4 * H
    L = num_layers

    w_big = w_big_ref[...]
    # Hoist lane-broadcasts out of the recurrence (broadcast_in_dim is not CSE'd).
    b_b = jnp.broadcast_to(b_ref[...], (L * G, B))
    fcw_b = jnp.broadcast_to(fc_w_ref[...], (H, B))
    fcb_b = jnp.broadcast_to(fc_b_ref[...], (1, B))
    zeros_hb = jnp.zeros((H, B), jnp.float32)
    zeros_xb = jnp.zeros((d_pad, B), jnp.float32)

    h = [zeros_hb] * L          # initial h_0 = 0 (matches the module's h_0)
    c = [zeros_hb] * L          # initial c_0 = 0

    def cell(gates, c_prev):
        # PyTorch gate order [i, f, g, o]; slices are sublane-aligned (H=32).
        i_g = jax.nn.sigmoid(gates[0 * H:1 * H, :])
        f_g = jax.nn.sigmoid(gates[1 * H:2 * H, :])
        g_g = jnp.tanh(gates[2 * H:3 * H, :])
        o_g = jax.nn.sigmoid(gates[3 * H:4 * H, :])
        c_new = f_g * c_prev + i_g * g_g
        h_new = o_g * jnp.tanh(c_new)
        return h_new, c_new

    # Wavefront: step s handles layer l's timestep t = s - l (if in range).
    # One fused matmul per step covers every active layer's gates.
    for s in range(T + L - 1):                                  # unrolled
        x_s = x_ref[s] if s < T else zeros_xb                   # (d_pad, B)
        hcat = jnp.concatenate([x_s] + h, axis=0)               # (d_pad+L*H, B)
        gates_all = jnp.dot(w_big, hcat,
                            preferred_element_type=jnp.float32) + b_b
        for l in range(L):
            t_l = s - l
            if 0 <= t_l < T:
                h[l], c[l] = cell(gates_all[l * G:(l + 1) * G, :], c[l])
                if l == L - 1:
                    # FC(H->1) + ReLU on the resident top-layer h:
                    # VPU multiply + sublane reduce, lane-dense row store.
                    y = jnp.sum(h[l] * fcw_b, axis=0, keepdims=True) + fcb_b
                    out_ref[pl.ds(t_l, 1), :] = jnp.maximum(y, 0.0)
        # (inter-layer dropout skipped: eval semantics, see TODO above)


def _prep_inputs(x_btd, params):
    """One-time layout work: batch->lanes transpose, pads, fused W_big."""
    B, T, D_in = x_btd.shape
    layers = params["lstm"]
    L = len(layers)
    H = layers[0]["w_hh"].shape[1]
    D_pad = _round_up(D_in, 8)         # features -> sublanes (4 -> 8)
    B_pad = _round_up(B, 64)           # batch -> lanes (61 -> 64); padded lanes inert

    # (B, T, D) -> (T, D_pad, B_pad)
    x = jnp.transpose(x_btd, (1, 2, 0))
    x = jnp.pad(x, ((0, 0), (0, D_pad - D_in), (0, B_pad - B)))

    # Fused weight: row block l = layer l's 4H gate rows; column blocks =
    # [x (D_pad) | h_0 (H) | ... | h_{L-1} (H)].  Layer 0's W_ih sits in the x
    # columns, layer l>0's W_ih in h_{l-1}'s columns, each W_hh in its own h
    # columns; everything else is zero.
    K = D_pad + L * H
    rows, biases = [], []
    for l, p in enumerate(layers):
        w_ih, w_hh = p["w_ih"], p["w_hh"]          # (4H, d_in_l), (4H, H)
        blk = jnp.zeros((4 * H, K), jnp.float32)
        if l == 0:
            blk = blk.at[:, :w_ih.shape[1]].set(w_ih)
        else:
            off = D_pad + (l - 1) * H
            blk = blk.at[:, off:off + H].set(w_ih)
        off = D_pad + l * H
        blk = blk.at[:, off:off + H].set(w_hh)
        rows.append(blk)
        biases.append(p["b_ih"] + p["b_hh"])
    w_big = jnp.concatenate(rows, axis=0)                       # (L*4H, K)
    b_cat = jnp.concatenate(biases).reshape(L * 4 * H, 1)       # (L*4H, 1)

    fc_w_col = params["fc_w"].reshape(H, 1)                     # (H, 1)
    fc_b = params["fc_b"].reshape(1, 1)                         # (1, 1)
    return x, w_big, b_cat, fc_w_col, fc_b, (B, T, H, L, D_pad, B_pad)


@jax.jit
def lstm_model_forward(x_btd, params):
    """x_btd: (B, T, input_size) like the PyTorch batch_first module.
    Returns (B, T, 1) = ReLU(Linear(LSTM(x)))."""
    x, w_big, b_cat, fc_w, fc_b, meta = _prep_inputs(x_btd, params)
    B, T, H, L, D_pad, B_pad = meta

    kernel = functools.partial(fused_lstm_kernel, num_layers=L,
                               hidden_size=H, d_pad=D_pad)
    vmem = pltpu.MemorySpace.VMEM
    flops = 2 * (T + L - 1) * (L * 4 * H) * (D_pad + L * H) * B_pad
    trans = 5 * L * T * H * B_pad
    nbytes = 4 * (x.size + w_big.size + b_cat.size + fc_w.size + fc_b.size
                  + T * B_pad)

    y = pl.pallas_call(
        kernel,
        out_shape=jax.ShapeDtypeStruct((T, B_pad), jnp.float32),
        in_specs=[pl.BlockSpec(memory_space=vmem)] * 5,
        out_specs=pl.BlockSpec(memory_space=vmem),
        cost_estimate=pl.CostEstimate(flops=flops, transcendentals=trans,
                                      bytes_accessed=nbytes),
    )(x, w_big, b_cat, fc_w, fc_b)

    y = y[:, :B]                                    # drop batch-lane padding
    return jnp.transpose(y, (1, 0))[..., None]      # (B, T, 1)


def init_params(key, input_size, hidden_size, num_layers):
    """Deterministic init mirroring nn.LSTM / nn.Linear shapes (uniform(-k, k))."""
    H = hidden_size
    k = 1.0 / jnp.sqrt(jnp.float32(H))
    params = {"lstm": []}
    for layer in range(num_layers):
        d_in = input_size if layer == 0 else H
        key, k1, k2, k3, k4 = jax.random.split(key, 5)
        params["lstm"].append({
            "w_ih": jax.random.uniform(k1, (4 * H, d_in), jnp.float32, -k, k),
            "w_hh": jax.random.uniform(k2, (4 * H, H), jnp.float32, -k, k),
            "b_ih": jax.random.uniform(k3, (4 * H,), jnp.float32, -k, k),
            "b_hh": jax.random.uniform(k4, (4 * H,), jnp.float32, -k, k),
        })
    key, k5, k6 = jax.random.split(key, 3)
    params["fc_w"] = jax.random.uniform(k5, (1, H), jnp.float32, -k, k)
    params["fc_b"] = jax.random.uniform(k6, (1,), jnp.float32, -k, k)
    return params


def reference_forward(x_btd, params, hidden_size):
    """Pure-JAX reference (lax.scan, eval semantics) for correctness check."""
    H = hidden_size
    x = jnp.transpose(x_btd, (1, 0, 2))              # (T, B, D)
    B = x.shape[1]
    for p in params["lstm"]:
        w_ih_t, w_hh_t = p["w_ih"].T, p["w_hh"].T
        b = (p["b_ih"] + p["b_hh"])[None, :]

        def step(carry, x_t, w_ih_t=w_ih_t, w_hh_t=w_hh_t, b=b):
            h, c = carry
            gates = x_t @ w_ih_t + h @ w_hh_t + b
            i_g = jax.nn.sigmoid(gates[:, 0:H])
            f_g = jax.nn.sigmoid(gates[:, H:2 * H])
            g_g = jnp.tanh(gates[:, 2 * H:3 * H])
            o_g = jax.nn.sigmoid(gates[:, 3 * H:4 * H])
            c = f_g * c + i_g * g_g
            h = o_g * jnp.tanh(c)
            return (h, c), h

        h0 = jnp.zeros((B, H), jnp.float32)
        c0 = jnp.zeros((B, H), jnp.float32)
        _, x = jax.lax.scan(step, (h0, c0), x)
    y = jnp.maximum(x @ params["fc_w"].T + params["fc_b"], 0.0)
    return jnp.transpose(y, (1, 0, 2))


if __name__ == "__main__":
    num_classes = 1
    input_size = 4
    hidden_size = 32
    num_layers = 2
    batch = 61                                       # fixed by the module's h_0/c_0
    seq_len = 8

    key = jax.random.PRNGKey(0)
    key, kx, kp = jax.random.split(key, 3)
    x = jax.random.normal(kx, (batch, seq_len, input_size), jnp.float32)
    params = init_params(kp, input_size, hidden_size, num_layers)

    out = lstm_model_forward(x, params)
    out = jax.block_until_ready(out)

    ref = reference_forward(x, params, hidden_size)
    assert out.shape == (batch, seq_len, 1), out.shape
    assert jnp.allclose(out, ref, atol=1e-4, rtol=1e-4), \
        float(jnp.max(jnp.abs(out - ref)))

    print("KERNEL_OK")
</pallas_src>

<mosaic_0001>
module attributes {stable_mosaic.version = 11 : i64} {
  func.func @fused_lstm_kernel(%arg0: memref<8x8x64xf32, #tpu.memory_space<vmem>>, %arg1: memref<256x72xf32, #tpu.memory_space<vmem>>, %arg2: memref<256x1xf32, #tpu.memory_space<vmem>>, %arg3: memref<32x1xf32, #tpu.memory_space<vmem>>, %arg4: memref<1x1xf32, #tpu.memory_space<vmem>>, %arg5: memref<8x64xf32, #tpu.memory_space<vmem>>) attributes {dimension_semantics = [], scalar_prefetch = 0 : i64, scratch_operands = 0 : i64, tpu.core_type = #tpu.core_type<tc>} {
    %c0 = arith.constant 0 : index
    %c0_0 = arith.constant 0 : index
    %0 = vector.load %arg1[%c0, %c0_0] : memref<256x72xf32, #tpu.memory_space<vmem>>, vector<256x72xf32>
    %c0_1 = arith.constant 0 : index
    %c0_2 = arith.constant 0 : index
    %1 = vector.load %arg2[%c0_1, %c0_2] : memref<256x1xf32, #tpu.memory_space<vmem>>, vector<256x1xf32>
    %2 = vector.shape_cast %1 : vector<256x1xf32> to vector<256x1xf32>
    %3 = vector.broadcast %2 : vector<256x1xf32> to vector<256x64xf32>
    %c0_3 = arith.constant 0 : index
    %c0_4 = arith.constant 0 : index
    %4 = vector.load %arg3[%c0_3, %c0_4] : memref<32x1xf32, #tpu.memory_space<vmem>>, vector<32x1xf32>
    %5 = vector.shape_cast %4 : vector<32x1xf32> to vector<32x1xf32>
    %6 = vector.broadcast %5 : vector<32x1xf32> to vector<32x64xf32>
    %c0_5 = arith.constant 0 : index
    %c0_6 = arith.constant 0 : index
    %7 = vector.load %arg4[%c0_5, %c0_6] : memref<1x1xf32, #tpu.memory_space<vmem>>, vector<1x1xf32>
    %8 = vector.shape_cast %7 : vector<1x1xf32> to vector<1x1xf32>
    %9 = vector.broadcast %8 : vector<1x1xf32> to vector<1x64xf32>
    %cst = arith.constant 0.000000e+00 : f32
    %10 = vector.broadcast %cst : f32 to vector<32x64xf32>
    %cst_7 = arith.constant 0.000000e+00 : f32
    %11 = vector.broadcast %cst_7 : f32 to vector<8x64xf32>
    %c0_8 = arith.constant 0 : index
    %c0_9 = arith.constant 0 : index
    %c0_10 = arith.constant 0 : index
    %12 = vector.load %arg0[%c0_8, %c0_9, %c0_10] : memref<8x8x64xf32, #tpu.memory_space<vmem>>, vector<1x8x64xf32>
    %13 = vector.shape_cast %12 : vector<1x8x64xf32> to vector<8x64xf32>
    %14 = tpu.concatenate %13, %10, %10 in 0 : vector<8x64xf32>, vector<32x64xf32>, vector<32x64xf32> -> vector<72x64xf32>
    %cst_11 = arith.constant dense<0.000000e+00> : vector<256x64xf32>
    %15 = tpu.matmul %0, %14, %cst_11 {dimension_numbers = #tpu.dot_dimension_numbers<[1], [0], [0], [1], [0, 0, 1, 1], [], []>} : vector<256x72xf32>, vector<72x64xf32>, vector<256x64xf32> -> vector<256x64xf32>
    %16 = arith.addf %15, %3 : vector<256x64xf32>
    %17 = vector.extract_strided_slice %16 {offsets = [0, 0], sizes = [128, 64], strides = [1, 1]} : vector<256x64xf32> to vector<128x64xf32>
    %18 = vector.extract_strided_slice %17 {offsets = [0, 0], sizes = [32, 64], strides = [1, 1]} : vector<128x64xf32> to vector<32x64xf32>
    %19 = arith.negf %18 : vector<32x64xf32>
    %20 = math.exp %19 : vector<32x64xf32>
    %cst_12 = arith.constant 1.000000e+00 : f32
    %21 = vector.broadcast %cst_12 : f32 to vector<32x64xf32>
    %22 = arith.addf %21, %20 : vector<32x64xf32>
    %23 = arith.divf %21, %22 : vector<32x64xf32>
    %24 = vector.extract_strided_slice %17 {offsets = [32, 0], sizes = [32, 64], strides = [1, 1]} : vector<128x64xf32> to vector<32x64xf32>
    %25 = arith.negf %24 : vector<32x64xf32>
    %26 = math.exp %25 : vector<32x64xf32>
    %cst_13 = arith.constant 1.000000e+00 : f32
    %27 = vector.broadcast %cst_13 : f32 to vector<32x64xf32>
    %28 = arith.addf %27, %26 : vector<32x64xf32>
    %29 = arith.divf %27, %28 : vector<32x64xf32>
    %30 = vector.extract_strided_slice %17 {offsets = [64, 0], sizes = [32, 64], strides = [1, 1]} : vector<128x64xf32> to vector<32x64xf32>
    %31 = math.tanh %30 : vector<32x64xf32>
    %32 = vector.extract_strided_slice %17 {offsets = [96, 0], sizes = [32, 64], strides = [1, 1]} : vector<128x64xf32> to vector<32x64xf32>
    %33 = arith.negf %32 : vector<32x64xf32>
    %34 = math.exp %33 : vector<32x64xf32>
    %cst_14 = arith.constant 1.000000e+00 : f32
    %35 = vector.broadcast %cst_14 : f32 to vector<32x64xf32>
    %36 = arith.addf %35, %34 : vector<32x64xf32>
    %37 = arith.divf %35, %36 : vector<32x64xf32>
    %38 = arith.mulf %29, %10 : vector<32x64xf32>
    %39 = arith.mulf %23, %31 : vector<32x64xf32>
    %40 = arith.addf %38, %39 : vector<32x64xf32>
    %41 = math.tanh %40 : vector<32x64xf32>
    %42 = arith.mulf %37, %41 : vector<32x64xf32>
    %c1 = arith.constant 1 : index
    %c0_15 = arith.constant 0 : index
    %c0_16 = arith.constant 0 : index
    %43 = vector.load %arg0[%c1, %c0_15, %c0_16] : memref<8x8x64xf32, #tpu.memory_space<vmem>>, vector<1x8x64xf32>
    %44 = vector.shape_cast %43 : vector<1x8x64xf32> to vector<8x64xf32>
    %45 = tpu.concatenate %44, %42, %10 in 0 : vector<8x64xf32>, vector<32x64xf32>, vector<32x64xf32> -> vector<72x64xf32>
    %cst_17 = arith.constant dense<0.000000e+00> : vector<256x64xf32>
    %46 = tpu.matmul %0, %45, %cst_17 {dimension_numbers = #tpu.dot_dimension_numbers<[1], [0], [0], [1], [0, 0, 1, 1], [], []>} : vector<256x72xf32>, vector<72x64xf32>, vector<256x64xf32> -> vector<256x64xf32>
    %47 = arith.addf %46, %3 : vector<256x64xf32>
    %48 = vector.extract_strided_slice %47 {offsets = [0, 0], sizes = [128, 64], strides = [1, 1]} : vector<256x64xf32> to vector<128x64xf32>
    %49 = vector.extract_strided_slice %48 {offsets = [0, 0], sizes = [32, 64], strides = [1, 1]} : vector<128x64xf32> to vector<32x64xf32>
    %50 = arith.negf %49 : vector<32x64xf32>
    %51 = math.exp %50 : vector<32x64xf32>
    %cst_18 = arith.constant 1.000000e+00 : f32
    %52 = vector.broadcast %cst_18 : f32 to vector<32x64xf32>
    %53 = arith.addf %52, %51 : vector<32x64xf32>
    %54 = arith.divf %52, %53 : vector<32x64xf32>
    %55 = vector.extract_strided_slice %48 {offsets = [32, 0], sizes = [32, 64], strides = [1, 1]} : vector<128x64xf32> to vector<32x64xf32>
    %56 = arith.negf %55 : vector<32x64xf32>
    %57 = math.exp %56 : vector<32x64xf32>
    %cst_19 = arith.constant 1.000000e+00 : f32
    %58 = vector.broadcast %cst_19 : f32 to vector<32x64xf32>
    %59 = arith.addf %58, %57 : vector<32x64xf32>
    %60 = arith.divf %58, %59 : vector<32x64xf32>
    %61 = vector.extract_strided_slice %48 {offsets = [64, 0], sizes = [32, 64], strides = [1, 1]} : vector<128x64xf32> to vector<32x64xf32>
    %62 = math.tanh %61 : vector<32x64xf32>
    %63 = vector.extract_strided_slice %48 {offsets = [96, 0], sizes = [32, 64], strides = [1, 1]} : vector<128x64xf32> to vector<32x64xf32>
    %64 = arith.negf %63 : vector<32x64xf32>
    %65 = math.exp %64 : vector<32x64xf32>
    %cst_20 = arith.constant 1.000000e+00 : f32
    %66 = vector.broadcast %cst_20 : f32 to vector<32x64xf32>
    %67 = arith.addf %66, %65 : vector<32x64xf32>
    %68 = arith.divf %66, %67 : vector<32x64xf32>
    %69 = arith.mulf %60, %40 : vector<32x64xf32>
    %70 = arith.mulf %54, %62 : vector<32x64xf32>
    %71 = arith.addf %69, %70 : vector<32x64xf32>
    %72 = math.tanh %71 : vector<32x64xf32>
    %73 = arith.mulf %68, %72 : vector<32x64xf32>
    %74 = vector.extract_strided_slice %47 {offsets = [128, 0], sizes = [128, 64], strides = [1, 1]} : vector<256x64xf32> to vector<128x64xf32>
    %75 = vector.extract_strided_slice %74 {offsets = [0, 0], sizes = [32, 64], strides = [1, 1]} : vector<128x64xf32> to vector<32x64xf32>
    %76 = arith.negf %75 : vector<32x64xf32>
    %77 = math.exp %76 : vector<32x64xf32>
    %cst_21 = arith.constant 1.000000e+00 : f32
    %78 = vector.broadcast %cst_21 : f32 to vector<32x64xf32>
    %79 = arith.addf %78, %77 : vector<32x64xf32>
    %80 = arith.divf %78, %79 : vector<32x64xf32>
    %81 = vector.extract_strided_slice %74 {offsets = [32, 0], sizes = [32, 64], strides = [1, 1]} : vector<128x64xf32> to vector<32x64xf32>
    %82 = arith.negf %81 : vector<32x64xf32>
    %83 = math.exp %82 : vector<32x64xf32>
    %cst_22 = arith.constant 1.000000e+00 : f32
    %84 = vector.broadcast %cst_22 : f32 to vector<32x64xf32>
    %85 = arith.addf %84, %83 : vector<32x64xf32>
    %86 = arith.divf %84, %85 : vector<32x64xf32>
    %87 = vector.extract_strided_slice %74 {offsets = [64, 0], sizes = [32, 64], strides = [1, 1]} : vector<128x64xf32> to vector<32x64xf32>
    %88 = math.tanh %87 : vector<32x64xf32>
    %89 = vector.extract_strided_slice %74 {offsets = [96, 0], sizes = [32, 64], strides = [1, 1]} : vector<128x64xf32> to vector<32x64xf32>
    %90 = arith.negf %89 : vector<32x64xf32>
    %91 = math.exp %90 : vector<32x64xf32>
    %cst_23 = arith.constant 1.000000e+00 : f32
    %92 = vector.broadcast %cst_23 : f32 to vector<32x64xf32>
    %93 = arith.addf %92, %91 : vector<32x64xf32>
    %94 = arith.divf %92, %93 : vector<32x64xf32>
    %95 = arith.mulf %86, %10 : vector<32x64xf32>
    %96 = arith.mulf %80, %88 : vector<32x64xf32>
    %97 = arith.addf %95, %96 : vector<32x64xf32>
    %98 = math.tanh %97 : vector<32x64xf32>
    %99 = arith.mulf %94, %98 : vector<32x64xf32>
    %100 = arith.mulf %99, %6 : vector<32x64xf32>
    %cst_24 = arith.constant dense<0.000000e+00> : vector<64xf32>
    %101 = vector.multi_reduction <add>, %100, %cst_24 [0] : vector<32x64xf32> to vector<64xf32>
    %102 = vector.shape_cast %101 : vector<64xf32> to vector<1x64xf32>
    %103 = arith.addf %102, %9 : vector<1x64xf32>
    %cst_25 = arith.constant 0.000000e+00 : f32
    %104 = vector.broadcast %cst_25 : f32 to vector<1x64xf32>
    %105 = arith.maximumf %103, %104 : vector<1x64xf32>
    %c0_26 = arith.constant 0 : index
    %c0_27 = arith.constant 0 : index
    %106 = vector.load %arg5[%c0_26, %c0_27] : memref<8x64xf32, #tpu.memory_space<vmem>>, vector<1x64xf32>
    tpu.vector_store %arg5[%c0_26, %c0_27], %105 {strides = array<i32>} : memref<8x64xf32, #tpu.memory_space<vmem>>, vector<1x64xf32>,
    %c2 = arith.constant 2 : index
    %c0_28 = arith.constant 0 : index
    %c0_29 = arith.constant 0 : index
    %107 = vector.load %arg0[%c2, %c0_28, %c0_29] : memref<8x8x64xf32, #tpu.memory_space<vmem>>, vector<1x8x64xf32>
    %108 = vector.shape_cast %107 : vector<1x8x64xf32> to vector<8x64xf32>
    %109 = tpu.concatenate %108, %73, %99 in 0 : vector<8x64xf32>, vector<32x64xf32>, vector<32x64xf32> -> vector<72x64xf32>
    %cst_30 = arith.constant dense<0.000000e+00> : vector<256x64xf32>
    %110 = tpu.matmul %0, %109, %cst_30 {dimension_numbers = #tpu.dot_dimension_numbers<[1], [0], [0], [1], [0, 0, 1, 1], [], []>} : vector<256x72xf32>, vector<72x64xf32>, vector<256x64xf32> -> vector<256x64xf32>
    %111 = arith.addf %110, %3 : vector<256x64xf32>
    %112 = vector.extract_strided_slice %111 {offsets = [0, 0], sizes = [128, 64], strides = [1, 1]} : vector<256x64xf32> to vector<128x64xf32>
    %113 = vector.extract_strided_slice %112 {offsets = [0, 0], sizes = [32, 64], strides = [1, 1]} : vector<128x64xf32> to vector<32x64xf32>
    %114 = arith.negf %113 : vector<32x64xf32>
    %115 = math.exp %114 : vector<32x64xf32>
    %cst_31 = arith.constant 1.000000e+00 : f32
    %116 = vector.broadcast %cst_31 : f32 to vector<32x64xf32>
    %117 = arith.addf %116, %115 : vector<32x64xf32>
    %118 = arith.divf %116, %117 : vector<32x64xf32>
    %119 = vector.extract_strided_slice %112 {offsets = [32, 0], sizes = [32, 64], strides = [1, 1]} : vector<128x64xf32> to vector<32x64xf32>
    %120 = arith.negf %119 : vector<32x64xf32>
    %121 = math.exp %120 : vector<32x64xf32>
    %cst_32 = arith.constant 1.000000e+00 : f32
    %122 = vector.broadcast %cst_32 : f32 to vector<32x64xf32>
    %123 = arith.addf %122, %121 : vector<32x64xf32>
    %124 = arith.divf %122, %123 : vector<32x64xf32>
    %125 = vector.extract_strided_slice %112 {offsets = [64, 0], sizes = [32, 64], strides = [1, 1]} : vector<128x64xf32> to vector<32x64xf32>
    %126 = math.tanh %125 : vector<32x64xf32>
    %127 = vector.extract_strided_slice %112 {offsets = [96, 0], sizes = [32, 64], strides = [1, 1]} : vector<128x64xf32> to vector<32x64xf32>
    %128 = arith.negf %127 : vector<32x64xf32>
    %129 = math.exp %128 : vector<32x64xf32>
    %cst_33 = arith.constant 1.000000e+00 : f32
    %130 = vector.broadcast %cst_33 : f32 to vector<32x64xf32>
    %131 = arith.addf %130, %129 : vector<32x64xf32>
    %132 = arith.divf %130, %131 : vector<32x64xf32>
    %133 = arith.mulf %124, %71 : vector<32x64xf32>
    %134 = arith.mulf %118, %126 : vector<32x64xf32>
    %135 = arith.addf %133, %134 : vector<32x64xf32>
    %136 = math.tanh %135 : vector<32x64xf32>
    %137 = arith.mulf %132, %136 : vector<32x64xf32>
    %138 = vector.extract_strided_slice %111 {offsets = [128, 0], sizes = [128, 64], strides = [1, 1]} : vector<256x64xf32> to vector<128x64xf32>
    %139 = vector.extract_strided_slice %138 {offsets = [0, 0], sizes = [32, 64], strides = [1, 1]} : vector<128x64xf32> to vector<32x64xf32>
    %140 = arith.negf %139 : vector<32x64xf32>
    %141 = math.exp %140 : vector<32x64xf32>
    %cst_34 = arith.constant 1.000000e+00 : f32
    %142 = vector.broadcast %cst_34 : f32 to vector<32x64xf32>
    %143 = arith.addf %142, %141 : vector<32x64xf32>
    %144 = arith.divf %142, %143 : vector<32x64xf32>
    %145 = vector.extract_strided_slice %138 {offsets = [32, 0], sizes = [32, 64], strides = [1, 1]} : vector<128x64xf32> to vector<32x64xf32>
    %146 = arith.negf %145 : vector<32x64xf32>
    %147 = math.exp %146 : vector<32x64xf32>
    %cst_35 = arith.constant 1.000000e+00 : f32
    %148 = vector.broadcast %cst_35 : f32 to vector<32x64xf32>
    %149 = arith.addf %148, %147 : vector<32x64xf32>
    %150 = arith.divf %148, %149 : vector<32x64xf32>
    %151 = vector.extract_strided_slice %138 {offsets = [64, 0], sizes = [32, 64], strides = [1, 1]} : vector<128x64xf32> to vector<32x64xf32>
    %152 = math.tanh %151 : vector<32x64xf32>
    %153 = vector.extract_strided_slice %138 {offsets = [96, 0], sizes = [32, 64], strides = [1, 1]} : vector<128x64xf32> to vector<32x64xf32>
    %154 = arith.negf %153 : vector<32x64xf32>
    %155 = math.exp %154 : vector<32x64xf32>
    %cst_36 = arith.constant 1.000000e+00 : f32
    %156 = vector.broadcast %cst_36 : f32 to vector<32x64xf32>
    %157 = arith.addf %156, %155 : vector<32x64xf32>
    %158 = arith.divf %156, %157 : vector<32x64xf32>
    %159 = arith.mulf %150, %97 : vector<32x64xf32>
    %160 = arith.mulf %144, %152 : vector<32x64xf32>
    %161 = arith.addf %159, %160 : vector<32x64xf32>
    %162 = math.tanh %161 : vector<32x64xf32>
    %163 = arith.mulf %158, %162 : vector<32x64xf32>
    %164 = arith.mulf %163, %6 : vector<32x64xf32>
    %cst_37 = arith.constant dense<0.000000e+00> : vector<64xf32>
    %165 = vector.multi_reduction <add>, %164, %cst_37 [0] : vector<32x64xf32> to vector<64xf32>
    %166 = vector.shape_cast %165 : vector<64xf32> to vector<1x64xf32>
    %167 = arith.addf %166, %9 : vector<1x64xf32>
    %cst_38 = arith.constant 0.000000e+00 : f32
    %168 = vector.broadcast %cst_38 : f32 to vector<1x64xf32>
    %169 = arith.maximumf %167, %168 : vector<1x64xf32>
    %c1_39 = arith.constant 1 : index
    %c0_40 = arith.constant 0 : index
    %170 = vector.load %arg5[%c1_39, %c0_40] : memref<8x64xf32, #tpu.memory_space<vmem>>, vector<1x64xf32>
    tpu.vector_store %arg5[%c1_39, %c0_40], %169 {strides = array<i32>} : memref<8x64xf32, #tpu.memory_space<vmem>>, vector<1x64xf32>,
    %c3 = arith.constant 3 : index
    %c0_41 = arith.constant 0 : index
    %c0_42 = arith.constant 0 : index
    %171 = vector.load %arg0[%c3, %c0_41, %c0_42] : memref<8x8x64xf32, #tpu.memory_space<vmem>>, vector<1x8x64xf32>
    %172 = vector.shape_cast %171 : vector<1x8x64xf32> to vector<8x64xf32>
    %173 = tpu.concatenate %172, %137, %163 in 0 : vector<8x64xf32>, vector<32x64xf32>, vector<32x64xf32> -> vector<72x64xf32>
    %cst_43 = arith.constant dense<0.000000e+00> : vector<256x64xf32>
    %174 = tpu.matmul %0, %173, %cst_43 {dimension_numbers = #tpu.dot_dimension_numbers<[1], [0], [0], [1], [0, 0, 1, 1], [], []>} : vector<256x72xf32>, vector<72x64xf32>, vector<256x64xf32> -> vector<256x64xf32>
    %175 = arith.addf %174, %3 : vector<256x64xf32>
    %176 = vector.extract_strided_slice %175 {offsets = [0, 0], sizes = [128, 64], strides = [1, 1]} : vector<256x64xf32> to vector<128x64xf32>
    %177 = vector.extract_strided_slice %176 {offsets = [0, 0], sizes = [32, 64], strides = [1, 1]} : vector<128x64xf32> to vector<32x64xf32>
    %178 = arith.negf %177 : vector<32x64xf32>
    %179 = math.exp %178 : vector<32x64xf32>
    %cst_44 = arith.constant 1.000000e+00 : f32
    %180 = vector.broadcast %cst_44 : f32 to vector<32x64xf32>
    %181 = arith.addf %180, %179 : vector<32x64xf32>
    %182 = arith.divf %180, %181 : vector<32x64xf32>
    %183 = vector.extract_strided_slice %176 {offsets = [32, 0], sizes = [32, 64], strides = [1, 1]} : vector<128x64xf32> to vector<32x64xf32>
    %184 = arith.negf %183 : vector<32x64xf32>
    %185 = math.exp %184 : vector<32x64xf32>
    %cst_45 = arith.constant 1.000000e+00 : f32
    %186 = vector.broadcast %cst_45 : f32 to vector<32x64xf32>
    %187 = arith.addf %186, %185 : vector<32x64xf32>
    %188 = arith.divf %186, %187 : vector<32x64xf32>
    %189 = vector.extract_strided_slice %176 {offsets = [64, 0], sizes = [32, 64], strides = [1, 1]} : vector<128x64xf32> to vector<32x64xf32>
    %190 = math.tanh %189 : vector<32x64xf32>
    %191 = vector.extract_strided_slice %176 {offsets = [96, 0], sizes = [32, 64], strides = [1, 1]} : vector<128x64xf32> to vector<32x64xf32>
    %192 = arith.negf %191 : vector<32x64xf32>
    %193 = math.exp %192 : vector<32x64xf32>
    %cst_46 = arith.constant 1.000000e+00 : f32
    %194 = vector.broadcast %cst_46 : f32 to vector<32x64xf32>
    %195 = arith.addf %194, %193 : vector<32x64xf32>
    %196 = arith.divf %194, %195 : vector<32x64xf32>
    %197 = arith.mulf %188, %135 : vector<32x64xf32>
    %198 = arith.mulf %182, %190 : vector<32x64xf32>
    %199 = arith.addf %197, %198 : vector<32x64xf32>
    %200 = math.tanh %199 : vector<32x64xf32>
    %201 = arith.mulf %196, %200 : vector<32x64xf32>
    %202 = vector.extract_strided_slice %175 {offsets = [128, 0], sizes = [128, 64], strides = [1, 1]} : vector<256x64xf32> to vector<128x64xf32>
    %203 = vector.extract_strided_slice %202 {offsets = [0, 0], sizes = [32, 64], strides = [1, 1]} : vector<128x64xf32> to vector<32x64xf32>
    %204 = arith.negf %203 : vector<32x64xf32>
    %205 = math.exp %204 : vector<32x64xf32>
    %cst_47 = arith.constant 1.000000e+00 : f32
    %206 = vector.broadcast %cst_47 : f32 to vector<32x64xf32>
    %207 = arith.addf %206, %205 : vector<32x64xf32>
    %208 = arith.divf %206, %207 : vector<32x64xf32>
    %209 = vector.extract_strided_slice %202 {offsets = [32, 0], sizes = [32, 64], strides = [1, 1]} : vector<128x64xf32> to vector<32x64xf32>
    %210 = arith.negf %209 : vector<32x64xf32>
    %211 = math.exp %210 : vector<32x64xf32>
    %cst_48 = arith.constant 1.000000e+00 : f32
    %212 = vector.broadcast %cst_48 : f32 to vector<32x64xf32>
    %213 = arith.addf %212, %211 : vector<32x64xf32>
    %214 = arith.divf %212, %213 : vector<32x64xf32>
    %215 = vector.extract_strided_slice %202 {offsets = [64, 0], sizes = [32, 64], strides = [1, 1]} : vector<128x64xf32> to vector<32x64xf32>
    %216 = math.tanh %215 : vector<32x64xf32>
    %217 = vector.extract_strided_slice %202 {offsets = [96, 0], sizes = [32, 64], strides = [1, 1]} : vector<128x64xf32> to vector<32x64xf32>
    %218 = arith.negf %217 : vector<32x64xf32>
    %219 = math.exp %218 : vector<32x64xf32>
    %cst_49 = arith.constant 1.000000e+00 : f32
    %220 = vector.broadcast %cst_49 : f32 to vector<32x64xf32>
    %221 = arith.addf %220, %219 : vector<32x64xf32>
    %222 = arith.divf %220, %221 : vector<32x64xf32>
    %223 = arith.mulf %214, %161 : vector<32x64xf32>
    %224 = arith.mulf %208, %216 : vector<32x64xf32>
    %225 = arith.addf %223, %224 : vector<32x64xf32>
    %226 = math.tanh %225 : vector<32x64xf32>
    %227 = arith.mulf %222, %226 : vector<32x64xf32>
    %228 = arith.mulf %227, %6 : vector<32x64xf32>
    %cst_50 = arith.constant dense<0.000000e+00> : vector<64xf32>
    %229 = vector.multi_reduction <add>, %228, %cst_50 [0] : vector<32x64xf32> to vector<64xf32>
    %230 = vector.shape_cast %229 : vector<64xf32> to vector<1x64xf32>
    %231 = arith.addf %230, %9 : vector<1x64xf32>
    %cst_51 = arith.constant 0.000000e+00 : f32
    %232 = vector.broadcast %cst_51 : f32 to vector<1x64xf32>
    %233 = arith.maximumf %231, %232 : vector<1x64xf32>
    %c2_52 = arith.constant 2 : index
    %c0_53 = arith.constant 0 : index
    %234 = vector.load %arg5[%c2_52, %c0_53] : memref<8x64xf32, #tpu.memory_space<vmem>>, vector<1x64xf32>
    tpu.vector_store %arg5[%c2_52, %c0_53], %233 {strides = array<i32>} : memref<8x64xf32, #tpu.memory_space<vmem>>, vector<1x64xf32>,
    %c4 = arith.constant 4 : index
    %c0_54 = arith.constant 0 : index
    %c0_55 = arith.constant 0 : index
    %235 = vector.load %arg0[%c4, %c0_54, %c0_55] : memref<8x8x64xf32, #tpu.memory_space<vmem>>, vector<1x8x64xf32>
    %236 = vector.shape_cast %235 : vector<1x8x64xf32> to vector<8x64xf32>
    %237 = tpu.concatenate %236, %201, %227 in 0 : vector<8x64xf32>, vector<32x64xf32>, vector<32x64xf32> -> vector<72x64xf32>
    %cst_56 = arith.constant dense<0.000000e+00> : vector<256x64xf32>
    %238 = tpu.matmul %0, %237, %cst_56 {dimension_numbers = #tpu.dot_dimension_numbers<[1], [0], [0], [1], [0, 0, 1, 1], [], []>} : vector<256x72xf32>, vector<72x64xf32>, vector<256x64xf32> -> vector<256x64xf32>
    %239 = arith.addf %238, %3 : vector<256x64xf32>
    %240 = vector.extract_strided_slice %239 {offsets = [0, 0], sizes = [128, 64], strides = [1, 1]} : vector<256x64xf32> to vector<128x64xf32>
    %241 = vector.extract_strided_slice %240 {offsets = [0, 0], sizes = [32, 64], strides = [1, 1]} : vector<128x64xf32> to vector<32x64xf32>
    %242 = arith.negf %241 : vector<32x64xf32>
    %243 = math.exp %242 : vector<32x64xf32>
    %cst_57 = arith.constant 1.000000e+00 : f32
    %244 = vector.broadcast %cst_57 : f32 to vector<32x64xf32>
    %245 = arith.addf %244, %243 : vector<32x64xf32>
    %246 = arith.divf %244, %245 : vector<32x64xf32>
    %247 = vector.extract_strided_slice %240 {offsets = [32, 0], sizes = [32, 64], strides = [1, 1]} : vector<128x64xf32> to vector<32x64xf32>
    %248 = arith.negf %247 : vector<32x64xf32>
    %249 = math.exp %248 : vector<32x64xf32>
    %cst_58 = arith.constant 1.000000e+00 : f32
    %250 = vector.broadcast %cst_58 : f32 to vector<32x64xf32>
    %251 = arith.addf %250, %249 : vector<32x64xf32>
    %252 = arith.divf %250, %251 : vector<32x64xf32>
    %253 = vector.extract_strided_slice %240 {offsets = [64, 0], sizes = [32, 64], strides = [1, 1]} : vector<128x64xf32> to vector<32x64xf32>
    %254 = math.tanh %253 : vector<32x64xf32>
    %255 = vector.extract_strided_slice %240 {offsets = [96, 0], sizes = [32, 64], strides = [1, 1]} : vector<128x64xf32> to vector<32x64xf32>
    %256 = arith.negf %255 : vector<32x64xf32>
    %257 = math.exp %256 : vector<32x64xf32>
    %cst_59 = arith.constant 1.000000e+00 : f32
    %258 = vector.broadcast %cst_59 : f32 to vector<32x64xf32>
    %259 = arith.addf %258, %257 : vector<32x64xf32>
    %260 = arith.divf %258, %259 : vector<32x64xf32>
    %261 = arith.mulf %252, %199 : vector<32x64xf32>
    %262 = arith.mulf %246, %254 : vector<32x64xf32>
    %263 = arith.addf %261, %262 : vector<32x64xf32>
    %264 = math.tanh %263 : vector<32x64xf32>
    %265 = arith.mulf %260, %264 : vector<32x64xf32>
    %266 = vector.extract_strided_slice %239 {offsets = [128, 0], sizes = [128, 64], strides = [1, 1]} : vector<256x64xf32> to vector<128x64xf32>
    %267 = vector.extract_strided_slice %266 {offsets = [0, 0], sizes = [32, 64], strides = [1, 1]} : vector<128x64xf32> to vector<32x64xf32>
    %268 = arith.negf %267 : vector<32x64xf32>
    %269 = math.exp %268 : vector<32x64xf32>
    %cst_60 = arith.constant 1.000000e+00 : f32
    %270 = vector.broadcast %cst_60 : f32 to vector<32x64xf32>
    %271 = arith.addf %270, %269 : vector<32x64xf32>
    %272 = arith.divf %270, %271 : vector<32x64xf32>
    %273 = vector.extract_strided_slice %266 {offsets = [32, 0], sizes = [32, 64], strides = [1, 1]} : vector<128x64xf32> to vector<32x64xf32>
    %274 = arith.negf %273 : vector<32x64xf32>
    %275 = math.exp %274 : vector<32x64xf32>
    %cst_61 = arith.constant 1.000000e+00 : f32
    %276 = vector.broadcast %cst_61 : f32 to vector<32x64xf32>
    %277 = arith.addf %276, %275 : vector<32x64xf32>
    %278 = arith.divf %276, %277 : vector<32x64xf32>
    %279 = vector.extract_strided_slice %266 {offsets = [64, 0], sizes = [32, 64], strides = [1, 1]} : vector<128x64xf32> to vector<32x64xf32>
    %280 = math.tanh %279 : vector<32x64xf32>
    %281 = vector.extract_strided_slice %266 {offsets = [96, 0], sizes = [32, 64], strides = [1, 1]} : vector<128x64xf32> to vector<32x64xf32>
    %282 = arith.negf %281 : vector<32x64xf32>
    %283 = math.exp %282 : vector<32x64xf32>
    %cst_62 = arith.constant 1.000000e+00 : f32
    %284 = vector.broadcast %cst_62 : f32 to vector<32x64xf32>
    %285 = arith.addf %284, %283 : vector<32x64xf32>
    %286 = arith.divf %284, %285 : vector<32x64xf32>
    %287 = arith.mulf %278, %225 : vector<32x64xf32>
    %288 = arith.mulf %272, %280 : vector<32x64xf32>
    %289 = arith.addf %287, %288 : vector<32x64xf32>
    %290 = math.tanh %289 : vector<32x64xf32>
    %291 = arith.mulf %286, %290 : vector<32x64xf32>
    %292 = arith.mulf %291, %6 : vector<32x64xf32>
    %cst_63 = arith.constant dense<0.000000e+00> : vector<64xf32>
    %293 = vector.multi_reduction <add>, %292, %cst_63 [0] : vector<32x64xf32> to vector<64xf32>
    %294 = vector.shape_cast %293 : vector<64xf32> to vector<1x64xf32>
    %295 = arith.addf %294, %9 : vector<1x64xf32>
    %cst_64 = arith.constant 0.000000e+00 : f32
    %296 = vector.broadcast %cst_64 : f32 to vector<1x64xf32>
    %297 = arith.maximumf %295, %296 : vector<1x64xf32>
    %c3_65 = arith.constant 3 : index
    %c0_66 = arith.constant 0 : index
    %298 = vector.load %arg5[%c3_65, %c0_66] : memref<8x64xf32, #tpu.memory_space<vmem>>, vector<1x64xf32>
    tpu.vector_store %arg5[%c3_65, %c0_66], %297 {strides = array<i32>} : memref<8x64xf32, #tpu.memory_space<vmem>>, vector<1x64xf32>,
    %c5 = arith.constant 5 : index
    %c0_67 = arith.constant 0 : index
    %c0_68 = arith.constant 0 : index
    %299 = vector.load %arg0[%c5, %c0_67, %c0_68] : memref<8x8x64xf32, #tpu.memory_space<vmem>>, vector<1x8x64xf32>
    %300 = vector.shape_cast %299 : vector<1x8x64xf32> to vector<8x64xf32>
    %301 = tpu.concatenate %300, %265, %291 in 0 : vector<8x64xf32>, vector<32x64xf32>, vector<32x64xf32> -> vector<72x64xf32>
    %cst_69 = arith.constant dense<0.000000e+00> : vector<256x64xf32>
    %302 = tpu.matmul %0, %301, %cst_69 {dimension_numbers = #tpu.dot_dimension_numbers<[1], [0], [0], [1], [0, 0, 1, 1], [], []>} : vector<256x72xf32>, vector<72x64xf32>, vector<256x64xf32> -> vector<256x64xf32>
    %303 = arith.addf %302, %3 : vector<256x64xf32>
    %304 = vector.extract_strided_slice %303 {offsets = [0, 0], sizes = [128, 64], strides = [1, 1]} : vector<256x64xf32> to vector<128x64xf32>
    %305 = vector.extract_strided_slice %304 {offsets = [0, 0], sizes = [32, 64], strides = [1, 1]} : vector<128x64xf32> to vector<32x64xf32>
    %306 = arith.negf %305 : vector<32x64xf32>
    %307 = math.exp %306 : vector<32x64xf32>
    %cst_70 = arith.constant 1.000000e+00 : f32
    %308 = vector.broadcast %cst_70 : f32 to vector<32x64xf32>
    %309 = arith.addf %308, %307 : vector<32x64xf32>
    %310 = arith.divf %308, %309 : vector<32x64xf32>
    %311 = vector.extract_strided_slice %304 {offsets = [32, 0], sizes = [32, 64], strides = [1, 1]} : vector<128x64xf32> to vector<32x64xf32>
    %312 = arith.negf %311 : vector<32x64xf32>
    %313 = math.exp %312 : vector<32x64xf32>
    %cst_71 = arith.constant 1.000000e+00 : f32
    %314 = vector.broadcast %cst_71 : f32 to vector<32x64xf32>
    %315 = arith.addf %314, %313 : vector<32x64xf32>
    %316 = arith.divf %314, %315 : vector<32x64xf32>
    %317 = vector.extract_strided_slice %304 {offsets = [64, 0], sizes = [32, 64], strides = [1, 1]} : vector<128x64xf32> to vector<32x64xf32>
    %318 = math.tanh %317 : vector<32x64xf32>
    %319 = vector.extract_strided_slice %304 {offsets = [96, 0], sizes = [32, 64], strides = [1, 1]} : vector<128x64xf32> to vector<32x64xf32>
    %320 = arith.negf %319 : vector<32x64xf32>
    %321 = math.exp %320 : vector<32x64xf32>
    %cst_72 = arith.constant 1.000000e+00 : f32
    %322 = vector.broadcast %cst_72 : f32 to vector<32x64xf32>
    %323 = arith.addf %322, %321 : vector<32x64xf32>
    %324 = arith.divf %322, %323 : vector<32x64xf32>
    %325 = arith.mulf %316, %263 : vector<32x64xf32>
    %326 = arith.mulf %310, %318 : vector<32x64xf32>
    %327 = arith.addf %325, %326 : vector<32x64xf32>
    %328 = math.tanh %327 : vector<32x64xf32>
    %329 = arith.mulf %324, %328 : vector<32x64xf32>
    %330 = vector.extract_strided_slice %303 {offsets = [128, 0], sizes = [128, 64], strides = [1, 1]} : vector<256x64xf32> to vector<128x64xf32>
    %331 = vector.extract_strided_slice %330 {offsets = [0, 0], sizes = [32, 64], strides = [1, 1]} : vector<128x64xf32> to vector<32x64xf32>
    %332 = arith.negf %331 : vector<32x64xf32>
    %333 = math.exp %332 : vector<32x64xf32>
    %cst_73 = arith.constant 1.000000e+00 : f32
    %334 = vector.broadcast %cst_73 : f32 to vector<32x64xf32>
    %335 = arith.addf %334, %333 : vector<32x64xf32>
    %336 = arith.divf %334, %335 : vector<32x64xf32>
    %337 = vector.extract_strided_slice %330 {offsets = [32, 0], sizes = [32, 64], strides = [1, 1]} : vector<128x64xf32> to vector<32x64xf32>
    %338 = arith.negf %337 : vector<32x64xf32>
    %339 = math.exp %338 : vector<32x64xf32>
    %cst_74 = arith.constant 1.000000e+00 : f32
    %340 = vector.broadcast %cst_74 : f32 to vector<32x64xf32>
    %341 = arith.addf %340, %339 : vector<32x64xf32>
    %342 = arith.divf %340, %341 : vector<32x64xf32>
    %343 = vector.extract_strided_slice %330 {offsets = [64, 0], sizes = [32, 64], strides = [1, 1]} : vector<128x64xf32> to vector<32x64xf32>
    %344 = math.tanh %343 : vector<32x64xf32>
    %345 = vector.extract_strided_slice %330 {offsets = [96, 0], sizes = [32, 64], strides = [1, 1]} : vector<128x64xf32> to vector<32x64xf32>
    %346 = arith.negf %345 : vector<32x64xf32>
    %347 = math.exp %346 : vector<32x64xf32>
    %cst_75 = arith.constant 1.000000e+00 : f32
    %348 = vector.broadcast %cst_75 : f32 to vector<32x64xf32>
    %349 = arith.addf %348, %347 : vector<32x64xf32>
    %350 = arith.divf %348, %349 : vector<32x64xf32>
    %351 = arith.mulf %342, %289 : vector<32x64xf32>
    %352 = arith.mulf %336, %344 : vector<32x64xf32>
    %353 = arith.addf %351, %352 : vector<32x64xf32>
    %354 = math.tanh %353 : vector<32x64xf32>
    %355 = arith.mulf %350, %354 : vector<32x64xf32>
    %356 = arith.mulf %355, %6 : vector<32x64xf32>
    %cst_76 = arith.constant dense<0.000000e+00> : vector<64xf32>
    %357 = vector.multi_reduction <add>, %356, %cst_76 [0] : vector<32x64xf32> to vector<64xf32>
    %358 = vector.shape_cast %357 : vector<64xf32> to vector<1x64xf32>
    %359 = arith.addf %358, %9 : vector<1x64xf32>
    %cst_77 = arith.constant 0.000000e+00 : f32
    %360 = vector.broadcast %cst_77 : f32 to vector<1x64xf32>
    %361 = arith.maximumf %359, %360 : vector<1x64xf32>
    %c4_78 = arith.constant 4 : index
    %c0_79 = arith.constant 0 : index
    %362 = vector.load %arg5[%c4_78, %c0_79] : memref<8x64xf32, #tpu.memory_space<vmem>>, vector<1x64xf32>
    tpu.vector_store %arg5[%c4_78, %c0_79], %361 {strides = array<i32>} : memref<8x64xf32, #tpu.memory_space<vmem>>, vector<1x64xf32>,
    %c6 = arith.constant 6 : index
    %c0_80 = arith.constant 0 : index
    %c0_81 = arith.constant 0 : index
    %363 = vector.load %arg0[%c6, %c0_80, %c0_81] : memref<8x8x64xf32, #tpu.memory_space<vmem>>, vector<1x8x64xf32>
    %364 = vector.shape_cast %363 : vector<1x8x64xf32> to vector<8x64xf32>
    %365 = tpu.concatenate %364, %329, %355 in 0 : vector<8x64xf32>, vector<32x64xf32>, vector<32x64xf32> -> vector<72x64xf32>
    %cst_82 = arith.constant dense<0.000000e+00> : vector<256x64xf32>
    %366 = tpu.matmul %0, %365, %cst_82 {dimension_numbers = #tpu.dot_dimension_numbers<[1], [0], [0], [1], [0, 0, 1, 1], [], []>} : vector<256x72xf32>, vector<72x64xf32>, vector<256x64xf32> -> vector<256x64xf32>
    %367 = arith.addf %366, %3 : vector<256x64xf32>
    %368 = vector.extract_strided_slice %367 {offsets = [0, 0], sizes = [128, 64], strides = [1, 1]} : vector<256x64xf32> to vector<128x64xf32>
    %369 = vector.extract_strided_slice %368 {offsets = [0, 0], sizes = [32, 64], strides = [1, 1]} : vector<128x64xf32> to vector<32x64xf32>
    %370 = arith.negf %369 : vector<32x64xf32>
    %371 = math.exp %370 : vector<32x64xf32>
    %cst_83 = arith.constant 1.000000e+00 : f32
    %372 = vector.broadcast %cst_83 : f32 to vector<32x64xf32>
    %373 = arith.addf %372, %371 : vector<32x64xf32>
    %374 = arith.divf %372, %373 : vector<32x64xf32>
    %375 = vector.extract_strided_slice %368 {offsets = [32, 0], sizes = [32, 64], strides = [1, 1]} : vector<128x64xf32> to vector<32x64xf32>
    %376 = arith.negf %375 : vector<32x64xf32>
    %377 = math.exp %376 : vector<32x64xf32>
    %cst_84 = arith.constant 1.000000e+00 : f32
    %378 = vector.broadcast %cst_84 : f32 to vector<32x64xf32>
    %379 = arith.addf %378, %377 : vector<32x64xf32>
    %380 = arith.divf %378, %379 : vector<32x64xf32>
    %381 = vector.extract_strided_slice %368 {offsets = [64, 0], sizes = [32, 64], strides = [1, 1]} : vector<128x64xf32> to vector<32x64xf32>
    %382 = math.tanh %381 : vector<32x64xf32>
    %383 = vector.extract_strided_slice %368 {offsets = [96, 0], sizes = [32, 64], strides = [1, 1]} : vector<128x64xf32> to vector<32x64xf32>
    %384 = arith.negf %383 : vector<32x64xf32>
    %385 = math.exp %384 : vector<32x64xf32>
    %cst_85 = arith.constant 1.000000e+00 : f32
    %386 = vector.broadcast %cst_85 : f32 to vector<32x64xf32>
    %387 = arith.addf %386, %385 : vector<32x64xf32>
    %388 = arith.divf %386, %387 : vector<32x64xf32>
    %389 = arith.mulf %380, %327 : vector<32x64xf32>
    %390 = arith.mulf %374, %382 : vector<32x64xf32>
    %391 = arith.addf %389, %390 : vector<32x64xf32>
    %392 = math.tanh %391 : vector<32x64xf32>
    %393 = arith.mulf %388, %392 : vector<32x64xf32>
    %394 = vector.extract_strided_slice %367 {offsets = [128, 0], sizes = [128, 64], strides = [1, 1]} : vector<256x64xf32> to vector<128x64xf32>
    %395 = vector.extract_strided_slice %394 {offsets = [0, 0], sizes = [32, 64], strides = [1, 1]} : vector<128x64xf32> to vector<32x64xf32>
    %396 = arith.negf %395 : vector<32x64xf32>
    %397 = math.exp %396 : vector<32x64xf32>
    %cst_86 = arith.constant 1.000000e+00 : f32
    %398 = vector.broadcast %cst_86 : f32 to vector<32x64xf32>
    %399 = arith.addf %398, %397 : vector<32x64xf32>
    %400 = arith.divf %398, %399 : vector<32x64xf32>
    %401 = vector.extract_strided_slice %394 {offsets = [32, 0], sizes = [32, 64], strides = [1, 1]} : vector<128x64xf32> to vector<32x64xf32>
    %402 = arith.negf %401 : vector<32x64xf32>
    %403 = math.exp %402 : vector<32x64xf32>
    %cst_87 = arith.constant 1.000000e+00 : f32
    %404 = vector.broadcast %cst_87 : f32 to vector<32x64xf32>
    %405 = arith.addf %404, %403 : vector<32x64xf32>
    %406 = arith.divf %404, %405 : vector<32x64xf32>
    %407 = vector.extract_strided_slice %394 {offsets = [64, 0], sizes = [32, 64], strides = [1, 1]} : vector<128x64xf32> to vector<32x64xf32>
    %408 = math.tanh %407 : vector<32x64xf32>
    %409 = vector.extract_strided_slice %394 {offsets = [96, 0], sizes = [32, 64], strides = [1, 1]} : vector<128x64xf32> to vector<32x64xf32>
    %410 = arith.negf %409 : vector<32x64xf32>
    %411 = math.exp %410 : vector<32x64xf32>
    %cst_88 = arith.constant 1.000000e+00 : f32
    %412 = vector.broadcast %cst_88 : f32 to vector<32x64xf32>
    %413 = arith.addf %412, %411 : vector<32x64xf32>
    %414 = arith.divf %412, %413 : vector<32x64xf32>
    %415 = arith.mulf %406, %353 : vector<32x64xf32>
    %416 = arith.mulf %400, %408 : vector<32x64xf32>
    %417 = arith.addf %415, %416 : vector<32x64xf32>
    %418 = math.tanh %417 : vector<32x64xf32>
    %419 = arith.mulf %414, %418 : vector<32x64xf32>
    %420 = arith.mulf %419, %6 : vector<32x64xf32>
    %cst_89 = arith.constant dense<0.000000e+00> : vector<64xf32>
    %421 = vector.multi_reduction <add>, %420, %cst_89 [0] : vector<32x64xf32> to vector<64xf32>
    %422 = vector.shape_cast %421 : vector<64xf32> to vector<1x64xf32>
    %423 = arith.addf %422, %9 : vector<1x64xf32>
    %cst_90 = arith.constant 0.000000e+00 : f32
    %424 = vector.broadcast %cst_90 : f32 to vector<1x64xf32>
    %425 = arith.maximumf %423, %424 : vector<1x64xf32>
    %c5_91 = arith.constant 5 : index
    %c0_92 = arith.constant 0 : index
    %426 = vector.load %arg5[%c5_91, %c0_92] : memref<8x64xf32, #tpu.memory_space<vmem>>, vector<1x64xf32>
    tpu.vector_store %arg5[%c5_91, %c0_92], %425 {strides = array<i32>} : memref<8x64xf32, #tpu.memory_space<vmem>>, vector<1x64xf32>,
    %c7 = arith.constant 7 : index
    %c0_93 = arith.constant 0 : index
    %c0_94 = arith.constant 0 : index
    %427 = vector.load %arg0[%c7, %c0_93, %c0_94] : memref<8x8x64xf32, #tpu.memory_space<vmem>>, vector<1x8x64xf32>
    %428 = vector.shape_cast %427 : vector<1x8x64xf32> to vector<8x64xf32>
    %429 = tpu.concatenate %428, %393, %419 in 0 : vector<8x64xf32>, vector<32x64xf32>, vector<32x64xf32> -> vector<72x64xf32>
    %cst_95 = arith.constant dense<0.000000e+00> : vector<256x64xf32>
    %430 = tpu.matmul %0, %429, %cst_95 {dimension_numbers = #tpu.dot_dimension_numbers<[1], [0], [0], [1], [0, 0, 1, 1], [], []>} : vector<256x72xf32>, vector<72x64xf32>, vector<256x64xf32> -> vector<256x64xf32>
    %431 = arith.addf %430, %3 : vector<256x64xf32>
    %432 = vector.extract_strided_slice %431 {offsets = [0, 0], sizes = [128, 64], strides = [1, 1]} : vector<256x64xf32> to vector<128x64xf32>
    %433 = vector.extract_strided_slice %432 {offsets = [0, 0], sizes = [32, 64], strides = [1, 1]} : vector<128x64xf32> to vector<32x64xf32>
    %434 = arith.negf %433 : vector<32x64xf32>
    %435 = math.exp %434 : vector<32x64xf32>
    %cst_96 = arith.constant 1.000000e+00 : f32
    %436 = vector.broadcast %cst_96 : f32 to vector<32x64xf32>
    %437 = arith.addf %436, %435 : vector<32x64xf32>
    %438 = arith.divf %436, %437 : vector<32x64xf32>
    %439 = vector.extract_strided_slice %432 {offsets = [32, 0], sizes = [32, 64], strides = [1, 1]} : vector<128x64xf32> to vector<32x64xf32>
    %440 = arith.negf %439 : vector<32x64xf32>
    %441 = math.exp %440 : vector<32x64xf32>
    %cst_97 = arith.constant 1.000000e+00 : f32
    %442 = vector.broadcast %cst_97 : f32 to vector<32x64xf32>
    %443 = arith.addf %442, %441 : vector<32x64xf32>
    %444 = arith.divf %442, %443 : vector<32x64xf32>
    %445 = vector.extract_strided_slice %432 {offsets = [64, 0], sizes = [32, 64], strides = [1, 1]} : vector<128x64xf32> to vector<32x64xf32>
    %446 = math.tanh %445 : vector<32x64xf32>
    %447 = vector.extract_strided_slice %432 {offsets = [96, 0], sizes = [32, 64], strides = [1, 1]} : vector<128x64xf32> to vector<32x64xf32>
    %448 = arith.negf %447 : vector<32x64xf32>
    %449 = math.exp %448 : vector<32x64xf32>
    %cst_98 = arith.constant 1.000000e+00 : f32
    %450 = vector.broadcast %cst_98 : f32 to vector<32x64xf32>
    %451 = arith.addf %450, %449 : vector<32x64xf32>
    %452 = arith.divf %450, %451 : vector<32x64xf32>
    %453 = arith.mulf %444, %391 : vector<32x64xf32>
    %454 = arith.mulf %438, %446 : vector<32x64xf32>
    %455 = arith.addf %453, %454 : vector<32x64xf32>
    %456 = math.tanh %455 : vector<32x64xf32>
    %457 = arith.mulf %452, %456 : vector<32x64xf32>
    %458 = vector.extract_strided_slice %431 {offsets = [128, 0], sizes = [128, 64], strides = [1, 1]} : vector<256x64xf32> to vector<128x64xf32>
    %459 = vector.extract_strided_slice %458 {offsets = [0, 0], sizes = [32, 64], strides = [1, 1]} : vector<128x64xf32> to vector<32x64xf32>
    %460 = arith.negf %459 : vector<32x64xf32>
    %461 = math.exp %460 : vector<32x64xf32>
    %cst_99 = arith.constant 1.000000e+00 : f32
    %462 = vector.broadcast %cst_99 : f32 to vector<32x64xf32>
    %463 = arith.addf %462, %461 : vector<32x64xf32>
    %464 = arith.divf %462, %463 : vector<32x64xf32>
    %465 = vector.extract_strided_slice %458 {offsets = [32, 0], sizes = [32, 64], strides = [1, 1]} : vector<128x64xf32> to vector<32x64xf32>
    %466 = arith.negf %465 : vector<32x64xf32>
    %467 = math.exp %466 : vector<32x64xf32>
    %cst_100 = arith.constant 1.000000e+00 : f32
    %468 = vector.broadcast %cst_100 : f32 to vector<32x64xf32>
    %469 = arith.addf %468, %467 : vector<32x64xf32>
    %470 = arith.divf %468, %469 : vector<32x64xf32>
    %471 = vector.extract_strided_slice %458 {offsets = [64, 0], sizes = [32, 64], strides = [1, 1]} : vector<128x64xf32> to vector<32x64xf32>
    %472 = math.tanh %471 : vector<32x64xf32>
    %473 = vector.extract_strided_slice %458 {offsets = [96, 0], sizes = [32, 64], strides = [1, 1]} : vector<128x64xf32> to vector<32x64xf32>
    %474 = arith.negf %473 : vector<32x64xf32>
    %475 = math.exp %474 : vector<32x64xf32>
    %cst_101 = arith.constant 1.000000e+00 : f32
    %476 = vector.broadcast %cst_101 : f32 to vector<32x64xf32>
    %477 = arith.addf %476, %475 : vector<32x64xf32>
    %478 = arith.divf %476, %477 : vector<32x64xf32>
    %479 = arith.mulf %470, %417 : vector<32x64xf32>
    %480 = arith.mulf %464, %472 : vector<32x64xf32>
    %481 = arith.addf %479, %480 : vector<32x64xf32>
    %482 = math.tanh %481 : vector<32x64xf32>
    %483 = arith.mulf %478, %482 : vector<32x64xf32>
    %484 = arith.mulf %483, %6 : vector<32x64xf32>
    %cst_102 = arith.constant dense<0.000000e+00> : vector<64xf32>
    %485 = vector.multi_reduction <add>, %484, %cst_102 [0] : vector<32x64xf32> to vector<64xf32>
    %486 = vector.shape_cast %485 : vector<64xf32> to vector<1x64xf32>
    %487 = arith.addf %486, %9 : vector<1x64xf32>
    %cst_103 = arith.constant 0.000000e+00 : f32
    %488 = vector.broadcast %cst_103 : f32 to vector<1x64xf32>
    %489 = arith.maximumf %487, %488 : vector<1x64xf32>
    %c6_104 = arith.constant 6 : index
    %c0_105 = arith.constant 0 : index
    %490 = vector.load %arg5[%c6_104, %c0_105] : memref<8x64xf32, #tpu.memory_space<vmem>>, vector<1x64xf32>
    tpu.vector_store %arg5[%c6_104, %c0_105], %489 {strides = array<i32>} : memref<8x64xf32, #tpu.memory_space<vmem>>, vector<1x64xf32>,
    %491 = tpu.concatenate %11, %457, %483 in 0 : vector<8x64xf32>, vector<32x64xf32>, vector<32x64xf32> -> vector<72x64xf32>
    %cst_106 = arith.constant dense<0.000000e+00> : vector<256x64xf32>
    %492 = tpu.matmul %0, %491, %cst_106 {dimension_numbers = #tpu.dot_dimension_numbers<[1], [0], [0], [1], [0, 0, 1, 1], [], []>} : vector<256x72xf32>, vector<72x64xf32>, vector<256x64xf32> -> vector<256x64xf32>
    %493 = arith.addf %492, %3 : vector<256x64xf32>
    %494 = vector.extract_strided_slice %493 {offsets = [128, 0], sizes = [128, 64], strides = [1, 1]} : vector<256x64xf32> to vector<128x64xf32>
    %495 = vector.extract_strided_slice %494 {offsets = [0, 0], sizes = [32, 64], strides = [1, 1]} : vector<128x64xf32> to vector<32x64xf32>
    %496 = arith.negf %495 : vector<32x64xf32>
    %497 = math.exp %496 : vector<32x64xf32>
    %cst_107 = arith.constant 1.000000e+00 : f32
    %498 = vector.broadcast %cst_107 : f32 to vector<32x64xf32>
    %499 = arith.addf %498, %497 : vector<32x64xf32>
    %500 = arith.divf %498, %499 : vector<32x64xf32>
    %501 = vector.extract_strided_slice %494 {offsets = [32, 0], sizes = [32, 64], strides = [1, 1]} : vector<128x64xf32> to vector<32x64xf32>
    %502 = arith.negf %501 : vector<32x64xf32>
    %503 = math.exp %502 : vector<32x64xf32>
    %cst_108 = arith.constant 1.000000e+00 : f32
    %504 = vector.broadcast %cst_108 : f32 to vector<32x64xf32>
    %505 = arith.addf %504, %503 : vector<32x64xf32>
    %506 = arith.divf %504, %505 : vector<32x64xf32>
    %507 = vector.extract_strided_slice %494 {offsets = [64, 0], sizes = [32, 64], strides = [1, 1]} : vector<128x64xf32> to vector<32x64xf32>
    %508 = math.tanh %507 : vector<32x64xf32>
    %509 = vector.extract_strided_slice %494 {offsets = [96, 0], sizes = [32, 64], strides = [1, 1]} : vector<128x64xf32> to vector<32x64xf32>
    %510 = arith.negf %509 : vector<32x64xf32>
    %511 = math.exp %510 : vector<32x64xf32>
    %cst_109 = arith.constant 1.000000e+00 : f32
    %512 = vector.broadcast %cst_109 : f32 to vector<32x64xf32>
    %513 = arith.addf %512, %511 : vector<32x64xf32>
    %514 = arith.divf %512, %513 : vector<32x64xf32>
    %515 = arith.mulf %506, %481 : vector<32x64xf32>
    %516 = arith.mulf %500, %508 : vector<32x64xf32>
    %517 = arith.addf %515, %516 : vector<32x64xf32>
    %518 = math.tanh %517 : vector<32x64xf32>
    %519 = arith.mulf %514, %518 : vector<32x64xf32>
    %520 = arith.mulf %519, %6 : vector<32x64xf32>
    %cst_110 = arith.constant dense<0.000000e+00> : vector<64xf32>
    %521 = vector.multi_reduction <add>, %520, %cst_110 [0] : vector<32x64xf32> to vector<64xf32>
    %522 = vector.shape_cast %521 : vector<64xf32> to vector<1x64xf32>
    %523 = arith.addf %522, %9 : vector<1x64xf32>
    %cst_111 = arith.constant 0.000000e+00 : f32
    %524 = vector.broadcast %cst_111 : f32 to vector<1x64xf32>
    %525 = arith.maximumf %523, %524 : vector<1x64xf32>
    %c7_112 = arith.constant 7 : index
    %c0_113 = arith.constant 0 : index
    %526 = vector.load %arg5[%c7_112, %c0_113] : memref<8x64xf32, #tpu.memory_space<vmem>>, vector<1x64xf32>
    tpu.vector_store %arg5[%c7_112, %c0_113], %525 {strides = array<i32>} : memref<8x64xf32, #tpu.memory_space<vmem>>, vector<1x64xf32>,
    return
  }
}

</mosaic_0001>

<llo_original>
// kernel: lstm_model_forward.1
$region0: #{lstm_model_forward.1}
  #allocation0 [shape = 'u32[]', space=smem, size = 0x4, offset = 0x4, fixed_abs, tag = 'smem constant byte address 0x4 - core index']
  #allocation1 [shape = 'u32[72,128]{1,0:T(1,128)}', space=vmem, size = 0x9000, scoped, tag = 'internal scratch']
  #allocation2 [shape = 'f32[1,1]{1,0:T(1,128)S(1)}', space=vmem, size = 0x200, scoped, tag = 'scoped memory for lstm_model_forward.1']
  %s0 = inlined_call_operand.vmem [shape: f32[8,8,64], index: 0, kind: input, shape index: {}]
  %s1 = inlined_call_operand.vmem [shape: f32[256,72], index: 1, kind: input, shape index: {}]
  %s2 = inlined_call_operand.vmem [shape: f32[256,1], index: 2, kind: input, shape index: {}]
  %s3 = inlined_call_operand.vmem [shape: f32[32,1], index: 3, kind: input, shape index: {}]
  %s4 = inlined_call_operand.<no memory space> [shape: f32[1,1], index: 4, kind: input, shape index: {}]
  %s5 = inlined_call_operand.hbm [shape: f32[8,64], index: 5, kind: output, shape index: {}]
  %s6 = sld [smem:[#allocation0]]
  $region30: #{lstm_model_forward.1} parent=0
    _
  %s8 = ssub.s32 1, %s6
  %s9 = scalar_select 0, %s8, %s6
  %v10 = vstv %s4
  %11 = vst [vmem:[#allocation2] sm:$0x1] %v10
  $region1: #{lstm_model_forward.1} parent=0
    #allocation3 [shape = 'u8[4096]{0}', space=vmem, size = 0x1000, scoped, tag = 'output window, operand 0, single buffered']
    #allocation4 [shape = 's32[1]{0}', space=sflag, size = 0x4, scoped, tag = 'scoped memory for lstm_model_forward.1']
    %12 = vsyncpa [#allocation4], 0
    // Predicated region
    $region2: #{lstm_model_forward.1} parent=1 // pred_check
      _
    $region3: #{lstm_model_forward.1} parent=1 // pred_check_branch
      %14 = sbr.rel (0) target = $region5
    $region4: #{lstm_model_forward.1} parent=1 // pred_region
      _
    $region5: #{lstm_model_forward.1} parent=1 // pred_fallthru
      _
    // Predicated region
    $region6: #{lstm_model_forward.1} parent=1 // pred_check
      _
    $region7: #{lstm_model_forward.1} parent=1 // pred_check_branch
      %16 = sbr.rel (0) target = $region9
    $region8: #{lstm_model_forward.1} parent=1 // pred_region
      _
    $region9: #{lstm_model_forward.1} parent=1 // pred_fallthru
      _
    // Predicated region
    $region10: #{lstm_model_forward.1} parent=1 // pred_check
      _
    $region11: #{lstm_model_forward.1} parent=1 // pred_check_branch
      %18 = sbr.rel (0) target = $region13
    $region12: #{lstm_model_forward.1} parent=1 // pred_region
      _
    $region13: #{lstm_model_forward.1} parent=1 // pred_fallthru
      _
    // Predicated region
    $region14: #{lstm_model_forward.1} parent=1 // pred_check
      _
    $region15: #{lstm_model_forward.1} parent=1 // pred_check_branch
      %20 = sbr.rel (0) target = $region17
    $region16: #{lstm_model_forward.1} parent=1 // pred_region
      _
    $region17: #{lstm_model_forward.1} parent=1 // pred_fallthru
      _
    // Predicated region
    $region18: #{lstm_model_forward.1} parent=1 // pred_check
      _
    $region19: #{lstm_model_forward.1} parent=1 // pred_check_branch
      %22 = sbr.rel (0) target = $region21
    $region20: #{lstm_model_forward.1} parent=1 // pred_region
      _
    $region21: #{lstm_model_forward.1} parent=1 // pred_fallthru
      _
    %v23 = vld [vmem:[%s1] sm:$0xff]
    %v24 = vld [vmem:[%s1 + $0x8] sm:$0xff]
    %v25 = vld [vmem:[%s1 + $0x10] sm:$0xff]
    %v26 = vld [vmem:[%s1 + $0x18] sm:$0xff]
    %v27 = vld [vmem:[%s1 + $0x20] sm:$0xff]
    %v28 = vld [vmem:[%s1 + $0x28] sm:$0xff]
    %v29 = vld [vmem:[%s1 + $0x30] sm:$0xff]
    %v30 = vld [vmem:[%s1 + $0x38] sm:$0xff]
    %v31 = vld [vmem:[%s1 + $0x40] sm:$0xff]
    %v32 = vld [vmem:[%s1 + $0x48] sm:$0xff]
    %v33 = vld [vmem:[%s1 + $0x50] sm:$0xff]
    %v34 = vld [vmem:[%s1 + $0x58] sm:$0xff]
    %v35 = vld [vmem:[%s1 + $0x60] sm:$0xff]
    %v36 = vld [vmem:[%s1 + $0x68] sm:$0xff]
    %v37 = vld [vmem:[%s1 + $0x70] sm:$0xff]
    %v38 = vld [vmem:[%s1 + $0x78] sm:$0xff]
    %v39 = vld [vmem:[%s1 + $0x80] sm:$0xff]
    %v40 = vld [vmem:[%s1 + $0x88] sm:$0xff]
    %v41 = vld [vmem:[%s1 + $0x90] sm:$0xff]
    %v42 = vld [vmem:[%s1 + $0x98] sm:$0xff]
    %v43 = vld [vmem:[%s1 + $0xa0] sm:$0xff]
    %v44 = vld [vmem:[%s1 + $0xa8] sm:$0xff]
    %v45 = vld [vmem:[%s1 + $0xb0] sm:$0xff]
    %v46 = vld [vmem:[%s1 + $0xb8] sm:$0xff]
    %v47 = vld [vmem:[%s1 + $0xc0] sm:$0xff]
    %v48 = vld [vmem:[%s1 + $0xc8] sm:$0xff]
    %v49 = vld [vmem:[%s1 + $0xd0] sm:$0xff]
    %v50 = vld [vmem:[%s1 + $0xd8] sm:$0xff]
    %v51 = vld [vmem:[%s1 + $0xe0] sm:$0xff]
    %v52 = vld [vmem:[%s1 + $0xe8] sm:$0xff]
    %v53 = vld [vmem:[%s1 + $0xf0] sm:$0xff]
    %v54 = vld [vmem:[%s1 + $0xf8] sm:$0xff]
    %v55 = vld [vmem:[%s2] sm:$0xff]
    %v56 = vld [vmem:[%s2 + $0x8] sm:$0xff]
    %v57 = vld [vmem:[%s2 + $0x10] sm:$0xff]
    %v58 = vld [vmem:[%s2 + $0x18] sm:$0xff]
    %v59 = vld [vmem:[%s2 + $0x20] sm:$0xff]
    %v60 = vld [vmem:[%s2 + $0x28] sm:$0xff]
    %v61 = vld [vmem:[%s2 + $0x30] sm:$0xff]
    %v62 = vld [vmem:[%s2 + $0x38] sm:$0xff]
    %v63 = vld [vmem:[%s2 + $0x40] sm:$0xff]
    %v64 = vld [vmem:[%s2 + $0x48] sm:$0xff]
    %v65 = vld [vmem:[%s2 + $0x50] sm:$0xff]
    %v66 = vld [vmem:[%s2 + $0x58] sm:$0xff]
    %v67 = vld [vmem:[%s2 + $0x60] sm:$0xff]
    %v68 = vld [vmem:[%s2 + $0x68] sm:$0xff]
    %v69 = vld [vmem:[%s2 + $0x70] sm:$0xff]
    %v70 = vld [vmem:[%s2 + $0x78] sm:$0xff]
    %v71 = vld [vmem:[%s2 + $0x80] sm:$0xff]
    %v72 = vld [vmem:[%s2 + $0x88] sm:$0xff]
    %v73 = vld [vmem:[%s2 + $0x90] sm:$0xff]
    %v74 = vld [vmem:[%s2 + $0x98] sm:$0xff]
    %v75 = vld [vmem:[%s2 + $0xa0] sm:$0xff]
    %v76 = vld [vmem:[%s2 + $0xa8] sm:$0xff]
    %v77 = vld [vmem:[%s2 + $0xb0] sm:$0xff]
    %v78 = vld [vmem:[%s2 + $0xb8] sm:$0xff]
    %v79 = vld [vmem:[%s2 + $0xc0] sm:$0xff]
    %v80 = vld [vmem:[%s2 + $0xc8] sm:$0xff]
    %v81 = vld [vmem:[%s2 + $0xd0] sm:$0xff]
    %v82 = vld [vmem:[%s2 + $0xd8] sm:$0xff]
    %v83 = vld [vmem:[%s2 + $0xe0] sm:$0xff]
    %v84 = vld [vmem:[%s2 + $0xe8] sm:$0xff]
    %v85 = vld [vmem:[%s2 + $0xf0] sm:$0xff]
    %v86 = vld [vmem:[%s2 + $0xf8] sm:$0xff]
    %88 = vset.pattern.permute.xlu0 0
    %89 = vperm.xlu0 %88, %v55
    %v90 = vpop.permute.xlu0 %89
    %93 = vset.pattern.permute.xlu0 0
    %94 = vperm.xlu0 %93, %v56
    %v95 = vpop.permute.xlu0 %94
    %98 = vset.pattern.permute.xlu0 0
    %99 = vperm.xlu0 %98, %v57
    %v100 = vpop.permute.xlu0 %99
    %103 = vset.pattern.permute.xlu0 0
    %104 = vperm.xlu0 %103, %v58
    %v105 = vpop.permute.xlu0 %104
    %108 = vset.pattern.permute.xlu0 0
    %109 = vperm.xlu0 %108, %v59
    %v110 = vpop.permute.xlu0 %109
    %113 = vset.pattern.permute.xlu0 0
    %114 = vperm.xlu0 %113, %v60
    %v115 = vpop.permute.xlu0 %114
    %118 = vset.pattern.permute.xlu0 0
    %119 = vperm.xlu0 %118, %v61
    %v120 = vpop.permute.xlu0 %119
    %123 = vset.pattern.permute.xlu0 0
    %124 = vperm.xlu0 %123, %v62
    %v125 = vpop.permute.xlu0 %124
    %128 = vset.pattern.permute.xlu0 0
    %129 = vperm.xlu0 %128, %v63
    %v130 = vpop.permute.xlu0 %129
    %133 = vset.pattern.permute.xlu0 0
    %134 = vperm.xlu0 %133, %v64
    %v135 = vpop.permute.xlu0 %134
    %138 = vset.pattern.permute.xlu0 0
    %139 = vperm.xlu0 %138, %v65
    %v140 = vpop.permute.xlu0 %139
    %143 = vset.pattern.permute.xlu0 0
    %144 = vperm.xlu0 %143, %v66
    %v145 = vpop.permute.xlu0 %144
    %148 = vset.pattern.permute.xlu0 0
    %149 = vperm.xlu0 %148, %v67
    %v150 = vpop.permute.xlu0 %149
    %153 = vset.pattern.permute.xlu0 0
    %154 = vperm.xlu0 %153, %v68
    %v155 = vpop.permute.xlu0 %154
    %158 = vset.pattern.permute.xlu0 0
    %159 = vperm.xlu0 %158, %v69
    %v160 = vpop.permute.xlu0 %159
    %163 = vset.pattern.permute.xlu0 0
    %164 = vperm.xlu0 %163, %v70
    %v165 = vpop.permute.xlu0 %164
    %168 = vset.pattern.permute.xlu0 0
    %169 = vperm.xlu0 %168, %v71
    %v170 = vpop.permute.xlu0 %169
    %173 = vset.pattern.permute.xlu0 0
    %174 = vperm.xlu0 %173, %v72
    %v175 = vpop.permute.xlu0 %174
    %178 = vset.pattern.permute.xlu0 0
    %179 = vperm.xlu0 %178, %v73
    %v180 = vpop.permute.xlu0 %179
    %183 = vset.pattern.permute.xlu0 0
    %184 = vperm.xlu0 %183, %v74
    %v185 = vpop.permute.xlu0 %184
    %188 = vset.pattern.permute.xlu0 0
    %189 = vperm.xlu0 %188, %v75
    %v190 = vpop.permute.xlu0 %189
    %193 = vset.pattern.permute.xlu0 0
    %194 = vperm.xlu0 %193, %v76
    %v195 = vpop.permute.xlu0 %194
    %198 = vset.pattern.permute.xlu0 0
    %199 = vperm.xlu0 %198, %v77
    %v200 = vpop.permute.xlu0 %199
    %203 = vset.pattern.permute.xlu0 0
    %204 = vperm.xlu0 %203, %v78
    %v205 = vpop.permute.xlu0 %204
    %208 = vset.pattern.permute.xlu0 0
    %209 = vperm.xlu0 %208, %v79
    %v210 = vpop.permute.xlu0 %209
    %213 = vset.pattern.permute.xlu0 0
    %214 = vperm.xlu0 %213, %v80
    %v215 = vpop.permute.xlu0 %214
    %218 = vset.pattern.permute.xlu0 0
    %219 = vperm.xlu0 %218, %v81
    %v220 = vpop.permute.xlu0 %219
    %223 = vset.pattern.permute.xlu0 0
    %224 = vperm.xlu0 %223, %v82
    %v225 = vpop.permute.xlu0 %224
    %228 = vset.pattern.permute.xlu0 0
    %229 = vperm.xlu0 %228, %v83
    %v230 = vpop.permute.xlu0 %229
    %233 = vset.pattern.permute.xlu0 0
    %234 = vperm.xlu0 %233, %v84
    %v235 = vpop.permute.xlu0 %234
    %238 = vset.pattern.permute.xlu0 0
    %239 = vperm.xlu0 %238, %v85
    %v240 = vpop.permute.xlu0 %239
    %243 = vset.pattern.permute.xlu0 0
    %244 = vperm.xlu0 %243, %v86
    %v245 = vpop.permute.xlu0 %244
    %v247 = vld [vmem:[%s3] sm:$0xff]
    %v248 = vld [vmem:[%s3 + $0x8] sm:$0xff]
    %v249 = vld [vmem:[%s3 + $0x10] sm:$0xff]
    %v250 = vld [vmem:[%s3 + $0x18] sm:$0xff]
    %252 = vset.pattern.permute.xlu0 0
    %253 = vperm.xlu0 %252, %v247
    %v254 = vpop.permute.xlu0 %253
    %257 = vset.pattern.permute.xlu0 0
    %258 = vperm.xlu0 %257, %v248
    %v259 = vpop.permute.xlu0 %258
    %262 = vset.pattern.permute.xlu0 0
    %263 = vperm.xlu0 %262, %v249
    %v264 = vpop.permute.xlu0 %263
    %267 = vset.pattern.permute.xlu0 0
    %268 = vperm.xlu0 %267, %v250
    %v269 = vpop.permute.xlu0 %268
    %v271 = vld [vmem:[#allocation2] sm:$0x1]
    %273 = vset.pattern.permute.xlu0 0
    %274 = vperm.xlu0 %273, %v271
    %v275 = vpop.permute.xlu0 %274
    %v277 = vperm.slane %v275, 0
    %v278 = vld [vmem:[%s0] sm:$0xff]
    %vm279 = vcmask 588800
    %v281 = vsel %vm279, %v23, 0
    %v284 = vsel %vm279, %v24, 0
    %v287 = vsel %vm279, %v25, 0
    %v290 = vsel %vm279, %v26, 0
    %v293 = vsel %vm279, %v27, 0
    %v296 = vsel %vm279, %v28, 0
    %v299 = vsel %vm279, %v29, 0
    %v302 = vsel %vm279, %v30, 0
    %v305 = vsel %vm279, %v31, 0
    %v308 = vsel %vm279, %v32, 0
    %v311 = vsel %vm279, %v33, 0
    %v314 = vsel %vm279, %v34, 0
    %v317 = vsel %vm279, %v35, 0
    %v320 = vsel %vm279, %v36, 0
    %v323 = vsel %vm279, %v37, 0
    %v326 = vsel %vm279, %v38, 0
    %v329 = vsel %vm279, %v39, 0
    %v332 = vsel %vm279, %v40, 0
    %v335 = vsel %vm279, %v41, 0
    %v338 = vsel %vm279, %v42, 0
    %v341 = vsel %vm279, %v43, 0
    %v344 = vsel %vm279, %v44, 0
    %v347 = vsel %vm279, %v45, 0
    %v350 = vsel %vm279, %v46, 0
    %v353 = vsel %vm279, %v47, 0
    %v356 = vsel %vm279, %v48, 0
    %v359 = vsel %vm279, %v49, 0
    %v362 = vsel %vm279, %v50, 0
    %v365 = vsel %vm279, %v51, 0
    %v368 = vsel %vm279, %v52, 0
    %v371 = vsel %vm279, %v53, 0
    %v374 = vsel %vm279, %v54, 0
    %376 = vmatpush.msra.mxu0 0.0
    %377 = vmatpush.msra.mxu0 0.0
    %378 = vmatpush.msra.mxu0 0.0
    %379 = vmatpush.msra.mxu0 0.0
    %380 = vmatpush.msra.mxu0 0.0
    %381 = vmatpush.msra.mxu0 0.0
    %382 = vmatpush.msra.mxu0 0.0
    %383 = vmatpush.msra.mxu0 0.0
    %384 = vmatpush.msra.mxu0 0.0
    %385 = vmatpush.msra.mxu0 0.0
    %386 = vmatpush.msra.mxu0 0.0
    %387 = vmatpush.msra.mxu0 0.0
    %388 = vmatpush.msra.mxu0 0.0
    %389 = vmatpush.msra.mxu0 0.0
    %390 = vmatpush.msra.mxu0 0.0
    %391 = vmatpush.msra.mxu0 %v278
    %392 = vmatmul.f32.gmra.mxu0 %v281
    %v393 = vpop.f32.mrf.mxu0
    %v394 = vadd.f32 %v90, %v393
    %395 = vmatmul.f32.gmra.mxu0 %v284
    %v396 = vpop.f32.mrf.mxu0
    %v397 = vadd.f32 %v95, %v396
    %398 = vmatmul.f32.gmra.mxu0 %v287
    %v399 = vpop.f32.mrf.mxu0
    %v400 = vadd.f32 %v100, %v399
    %401 = vmatmul.f32.gmra.mxu0 %v290
    %v402 = vpop.f32.mrf.mxu0
    %v403 = vadd.f32 %v105, %v402
    %404 = vmatmul.f32.gmra.mxu0 %v293
    %v405 = vpop.f32.mrf.mxu0
    %v406 = vadd.f32 %v110, %v405
    %407 = vmatmul.f32.gmra.mxu0 %v296
    %v408 = vpop.f32.mrf.mxu0
    %v409 = vadd.f32 %v115, %v408
    %410 = vmatmul.f32.gmra.mxu0 %v299
    %v411 = vpop.f32.mrf.mxu0
    %v412 = vadd.f32 %v120, %v411
    %413 = vmatmul.f32.gmra.mxu0 %v302
    %v414 = vpop.f32.mrf.mxu0
    %v415 = vadd.f32 %v125, %v414
    %416 = vmatmul.f32.gmra.mxu0 %v305
    %v417 = vpop.f32.mrf.mxu0
    %v418 = vadd.f32 %v130, %v417
    %419 = vmatmul.f32.gmra.mxu0 %v308
    %v420 = vpop.f32.mrf.mxu0
    %v421 = vadd.f32 %v135, %v420
    %422 = vmatmul.f32.gmra.mxu0 %v311
    %v423 = vpop.f32.mrf.mxu0
    %v424 = vadd.f32 %v140, %v423
    %425 = vmatmul.f32.gmra.mxu0 %v314
    %v426 = vpop.f32.mrf.mxu0
    %v427 = vadd.f32 %v145, %v426
    %428 = vmatmul.f32.gmra.mxu0 %v317
    %v429 = vpop.f32.mrf.mxu0
    %v430 = vadd.f32 %v150, %v429
    %431 = vmatmul.f32.gmra.mxu0 %v320
    %v432 = vpop.f32.mrf.mxu0
    %v433 = vadd.f32 %v155, %v432
    %434 = vmatmul.f32.gmra.mxu0 %v323
    %v435 = vpop.f32.mrf.mxu0
    %v436 = vadd.f32 %v160, %v435
    %437 = vmatmul.f32.gmra.mxu0 %v326
    %v438 = vpop.f32.mrf.mxu0
    %v439 = vadd.f32 %v165, %v438
    %440 = vmatmul.f32.gmra.mxu0 %v329
    %v441 = vpop.f32.mrf.mxu0
    %442 = vmatmul.f32.gmra.mxu0 %v332
    %v443 = vpop.f32.mrf.mxu0
    %444 = vmatmul.f32.gmra.mxu0 %v335
    %v445 = vpop.f32.mrf.mxu0
    %446 = vmatmul.f32.gmra.mxu0 %v338
    %v447 = vpop.f32.mrf.mxu0
    %448 = vmatmul.f32.gmra.mxu0 %v341
    %v449 = vpop.f32.mrf.mxu0
    %450 = vmatmul.f32.gmra.mxu0 %v344
    %v451 = vpop.f32.mrf.mxu0
    %452 = vmatmul.f32.gmra.mxu0 %v347
    %v453 = vpop.f32.mrf.mxu0
    %454 = vmatmul.f32.gmra.mxu0 %v350
    %v455 = vpop.f32.mrf.mxu0
    %456 = vmatmul.f32.gmra.mxu0 %v353
    %v457 = vpop.f32.mrf.mxu0
    %458 = vmatmul.f32.gmra.mxu0 %v356
    %v459 = vpop.f32.mrf.mxu0
    %460 = vmatmul.f32.gmra.mxu0 %v359
    %v461 = vpop.f32.mrf.mxu0
    %462 = vmatmul.f32.gmra.mxu0 %v362
    %v463 = vpop.f32.mrf.mxu0
    %464 = vmatmul.f32.gmra.mxu0 %v365
    %v465 = vpop.f32.mrf.mxu0
    %466 = vmatmul.f32.gmra.mxu0 %v368
    %v467 = vpop.f32.mrf.mxu0
    %468 = vmatmul.f32.gmra.mxu0 %v371
    %v469 = vpop.f32.mrf.mxu0
    %470 = vmatmul.f32.gmra.mxu0 %v374
    %v471 = vpop.f32.mrf.mxu0
    %472 = vdwg.mxu0
    %v473 = vxor.u32 %v394, 2147483648
    %v474 = vxor.u32 %v397, 2147483648
    %v475 = vxor.u32 %v400, 2147483648
    %v476 = vxor.u32 %v403, 2147483648
    %v477 = vmul.f32 %v473, 1.442695
    %v478 = vpow.pop %v477
    %v479 = vmul.f32 %v474, 1.442695
    %v480 = vpow.pop %v479
    %v481 = vmul.f32 %v475, 1.442695
    %v482 = vpow.pop %v481
    %v483 = vmul.f32 %v476, 1.442695
    %v484 = vpow.pop %v483
    %v485 = vadd.f32 %v478, 1.0
    %v486 = vadd.f32 %v480, 1.0
    %v487 = vadd.f32 %v482, 1.0
    %v488 = vadd.f32 %v484, 1.0
    %v489 = vrcp.pop %v485
    %v490 = vmul.f32 %v485, %v489
    %v491 = vsub.f32 1.0, %v490
    %v492 = vmul.f32 %v489, %v491
    %v493 = vadd.f32 %v489, %v492
    %vm494 = vweird.f32 %v485
    %vm495 = vweird.f32 %v489
    %vm496 = vmor %vm494, %vm495
    %v497 = vsel %vm496, %v489, %v493
    %v498 = vand.u32 2147483647, %v485
    %vm499 = vcmp.eq.f32.partialorder %v498, 8.507059e+37
    %v500 = vand.u32 %v485, 2147483648
    %v501 = vor.u32 1.1754944e-38, %v500
    %v502 = vsel %vm499, %v501, %v497
    %v503 = vmul.f32 1.0, %v502
    %v504 = vrcp.pop %v486
    %v505 = vmul.f32 %v486, %v504
    %v506 = vsub.f32 1.0, %v505
    %v507 = vmul.f32 %v504, %v506
    %v508 = vadd.f32 %v504, %v507
    %vm509 = vweird.f32 %v486
    %vm510 = vweird.f32 %v504
    %vm511 = vmor %vm509, %vm510
    %v512 = vsel %vm511, %v504, %v508
    %v513 = vand.u32 2147483647, %v486
    %vm514 = vcmp.eq.f32.partialorder %v513, 8.507059e+37
    %v515 = vand.u32 %v486, 2147483648
    %v516 = vor.u32 1.1754944e-38, %v515
    %v517 = vsel %vm514, %v516, %v512
    %v518 = vmul.f32 1.0, %v517
    %v519 = vrcp.pop %v487
    %v520 = vmul.f32 %v487, %v519
    %v521 = vsub.f32 1.0, %v520
    %v522 = vmul.f32 %v519, %v521
    %v523 = vadd.f32 %v519, %v522
    %vm524 = vweird.f32 %v487
    %vm525 = vweird.f32 %v519
    %vm526 = vmor %vm524, %vm525
    %v527 = vsel %vm526, %v519, %v523
    %v528 = vand.u32 2147483647, %v487
    %vm529 = vcmp.eq.f32.partialorder %v528, 8.507059e+37
    %v530 = vand.u32 %v487, 2147483648
    %v531 = vor.u32 1.1754944e-38, %v530
    %v532 = vsel %vm529, %v531, %v527
    %v533 = vmul.f32 1.0, %v532
    %v534 = vrcp.pop %v488
    %v535 = vmul.f32 %v488, %v534
    %v536 = vsub.f32 1.0, %v535
    %v537 = vmul.f32 %v534, %v536
    %v538 = vadd.f32 %v534, %v537
    %vm539 = vweird.f32 %v488
    %vm540 = vweird.f32 %v534
    %vm541 = vmor %vm539, %vm540
    %v542 = vsel %vm541, %v534, %v538
    %v543 = vand.u32 2147483647, %v488
    %vm544 = vcmp.eq.f32.partialorder %v543, 8.507059e+37
    %v545 = vand.u32 %v488, 2147483648
    %v546 = vor.u32 1.1754944e-38, %v545
    %v547 = vsel %vm544, %v546, %v542
    %v548 = vmul.f32 1.0, %v547
    %v549 = vxor.u32 %v406, 2147483648
    %v550 = vxor.u32 %v409, 2147483648
    %v551 = vxor.u32 %v412, 2147483648
    %v552 = vxor.u32 %v415, 2147483648
    %v553 = vmul.f32 %v549, 1.442695
    %v554 = vpow.pop %v553
    %v555 = vmul.f32 %v550, 1.442695
    %v556 = vpow.pop %v555
    %v557 = vmul.f32 %v551, 1.442695
    %v558 = vpow.pop %v557
    %v559 = vmul.f32 %v552, 1.442695
    %v560 = vpow.pop %v559
    %v561 = vadd.f32 %v554, 1.0
    %v562 = vadd.f32 %v556, 1.0
    %v563 = vadd.f32 %v558, 1.0
    %v564 = vadd.f32 %v560, 1.0
    %v565 = vrcp.pop %v561
    %v566 = vmul.f32 %v561, %v565
    %v567 = vsub.f32 1.0, %v566
    %v568 = vmul.f32 %v565, %v567
    %v569 = vadd.f32 %v565, %v568
    %vm570 = vweird.f32 %v561
    %vm571 = vweird.f32 %v565
    %vm572 = vmor %vm570, %vm571
    %v573 = vsel %vm572, %v565, %v569
    %v574 = vand.u32 2147483647, %v561
    %vm575 = vcmp.eq.f32.partialorder %v574, 8.507059e+37
    %v576 = vand.u32 %v561, 2147483648
    %v577 = vor.u32 1.1754944e-38, %v576
    %v578 = vsel %vm575, %v577, %v573
    %v579 = vmul.f32 1.0, %v578
    %v580 = vrcp.pop %v562
    %v581 = vmul.f32 %v562, %v580
    %v582 = vsub.f32 1.0, %v581
    %v583 = vmul.f32 %v580, %v582
    %v584 = vadd.f32 %v580, %v583
    %vm585 = vweird.f32 %v562
    %vm586 = vweird.f32 %v580
    %vm587 = vmor %vm585, %vm586
    %v588 = vsel %vm587, %v580, %v584
    %v589 = vand.u32 2147483647, %v562
    %vm590 = vcmp.eq.f32.partialorder %v589, 8.507059e+37
    %v591 = vand.u32 %v562, 2147483648
    %v592 = vor.u32 1.1754944e-38, %v591
    %v593 = vsel %vm590, %v592, %v588
    %v594 = vmul.f32 1.0, %v593
    %v595 = vrcp.pop %v563
    %v596 = vmul.f32 %v563, %v595
    %v597 = vsub.f32 1.0, %v596
    %v598 = vmul.f32 %v595, %v597
    %v599 = vadd.f32 %v595, %v598
    %vm600 = vweird.f32 %v563
    %vm601 = vweird.f32 %v595
    %vm602 = vmor %vm600, %vm601
    %v603 = vsel %vm602, %v595, %v599
    %v604 = vand.u32 2147483647, %v563
    %vm605 = vcmp.eq.f32.partialorder %v604, 8.507059e+37
    %v606 = vand.u32 %v563, 2147483648
    %v607 = vor.u32 1.1754944e-38, %v606
    %v608 = vsel %vm605, %v607, %v603
    %v609 = vmul.f32 1.0, %v608
    %v610 = vrcp.pop %v564
    %v611 = vmul.f32 %v564, %v610
    %v612 = vsub.f32 1.0, %v611
    %v613 = vmul.f32 %v610, %v612
    %v614 = vadd.f32 %v610, %v613
    %vm615 = vweird.f32 %v564
    %vm616 = vweird.f32 %v610
    %vm617 = vmor %vm615, %vm616
    %v618 = vsel %vm617, %v610, %v614
    %v619 = vand.u32 2147483647, %v564
    %vm620 = vcmp.eq.f32.partialorder %v619, 8.507059e+37
    %v621 = vand.u32 %v564, 2147483648
    %v622 = vor.u32 1.1754944e-38, %v621
    %v623 = vsel %vm620, %v622, %v618
    %v624 = vmul.f32 1.0, %v623
    %v625 = vtanh.pop %v418
    %v626 = vtanh.pop %v421
    %v627 = vtanh.pop %v424
    %v628 = vtanh.pop %v427
    %v629 = vxor.u32 %v430, 2147483648
    %v630 = vxor.u32 %v433, 2147483648
    %v631 = vxor.u32 %v436, 2147483648
    %v632 = vxor.u32 %v439, 2147483648
    %v633 = vmul.f32 %v629, 1.442695
    %v634 = vpow.pop %v633
    %v635 = vmul.f32 %v630, 1.442695
    %v636 = vpow.pop %v635
    %v637 = vmul.f32 %v631, 1.442695
    %v638 = vpow.pop %v637
    %v639 = vmul.f32 %v632, 1.442695
    %v640 = vpow.pop %v639
    %v641 = vadd.f32 %v634, 1.0
    %v642 = vadd.f32 %v636, 1.0
    %v643 = vadd.f32 %v638, 1.0
    %v644 = vadd.f32 %v640, 1.0
    %v645 = vrcp.pop %v641
    %v646 = vmul.f32 %v641, %v645
    %v647 = vsub.f32 1.0, %v646
    %v648 = vmul.f32 %v645, %v647
    %v649 = vadd.f32 %v645, %v648
    %vm650 = vweird.f32 %v641
    %vm651 = vweird.f32 %v645
    %vm652 = vmor %vm650, %vm651
    %v653 = vsel %vm652, %v645, %v649
    %v654 = vand.u32 2147483647, %v641
    %vm655 = vcmp.eq.f32.partialorder %v654, 8.507059e+37
    %v656 = vand.u32 %v641, 2147483648
    %v657 = vor.u32 1.1754944e-38, %v656
    %v658 = vsel %vm655, %v657, %v653
    %v659 = vmul.f32 1.0, %v658
    %v660 = vrcp.pop %v642
    %v661 = vmul.f32 %v642, %v660
    %v662 = vsub.f32 1.0, %v661
    %v663 = vmul.f32 %v660, %v662
    %v664 = vadd.f32 %v660, %v663
    %vm665 = vweird.f32 %v642
    %vm666 = vweird.f32 %v660
    %vm667 = vmor %vm665, %vm666
    %v668 = vsel %vm667, %v660, %v664
    %v669 = vand.u32 2147483647, %v642
    %vm670 = vcmp.eq.f32.partialorder %v669, 8.507059e+37
    %v671 = vand.u32 %v642, 2147483648
    %v672 = vor.u32 1.1754944e-38, %v671
    %v673 = vsel %vm670, %v672, %v668
    %v674 = vmul.f32 1.0, %v673
    %v675 = vrcp.pop %v643
    %v676 = vmul.f32 %v643, %v675
    %v677 = vsub.f32 1.0, %v676
    %v678 = vmul.f32 %v675, %v677
    %v679 = vadd.f32 %v675, %v678
    %vm680 = vweird.f32 %v643
    %vm681 = vweird.f32 %v675
    %vm682 = vmor %vm680, %vm681
    %v683 = vsel %vm682, %v675, %v679
    %v684 = vand.u32 2147483647, %v643
    %vm685 = vcmp.eq.f32.partialorder %v684, 8.507059e+37
    %v686 = vand.u32 %v643, 2147483648
    %v687 = vor.u32 1.1754944e-38, %v686
    %v688 = vsel %vm685, %v687, %v683
    %v689 = vmul.f32 1.0, %v688
    %v690 = vrcp.pop %v644
    %v691 = vmul.f32 %v644, %v690
    %v692 = vsub.f32 1.0, %v691
    %v693 = vmul.f32 %v690, %v692
    %v694 = vadd.f32 %v690, %v693
    %vm695 = vweird.f32 %v644
    %vm696 = vweird.f32 %v690
    %vm697 = vmor %vm695, %vm696
    %v698 = vsel %vm697, %v690, %v694
    %v699 = vand.u32 2147483647, %v644
    %vm700 = vcmp.eq.f32.partialorder %v699, 8.507059e+37
    %v701 = vand.u32 %v644, 2147483648
    %v702 = vor.u32 1.1754944e-38, %v701
    %v703 = vsel %vm700, %v702, %v698
    %v704 = vmul.f32 1.0, %v703
    %v705 = vmul.f32 %v579, 0.0
    %v706 = vmul.f32 %v594, 0.0
    %v707 = vmul.f32 %v609, 0.0
    %v708 = vmul.f32 %v624, 0.0
    %v709 = vmul.f32 %v503, %v625
    %v710 = vmul.f32 %v518, %v626
    %v711 = vmul.f32 %v533, %v627
    %v712 = vmul.f32 %v548, %v628
    %v713 = vadd.f32 %v705, %v709
    %v714 = vadd.f32 %v706, %v710
    %v715 = vadd.f32 %v707, %v711
    %v716 = vadd.f32 %v708, %v712
    %v717 = vtanh.pop %v713
    %v718 = vtanh.pop %v714
    %v719 = vtanh.pop %v715
    %v720 = vtanh.pop %v716
    %v721 = vmul.f32 %v659, %v717
    %v722 = vmul.f32 %v674, %v718
    %v723 = vmul.f32 %v689, %v719
    %v724 = vmul.f32 %v704, %v720
    %s725 = scalar_lea.vmem %s0, 8
    %v726 = vld [vmem:[%s725] sm:$0xff]
    %727 = vmatpush.msra.mxu0 0.0
    %728 = vmatpush.msra.mxu0 0.0
    %729 = vmatpush.msra.mxu0 0.0
    %730 = vmatpush.msra.mxu0 0.0
    %731 = vmatpush.msra.mxu0 0.0
    %732 = vmatpush.msra.mxu0 0.0
    %733 = vmatpush.msra.mxu0 0.0
    %734 = vmatpush.msra.mxu0 0.0
    %735 = vmatpush.msra.mxu0 0.0
    %736 = vmatpush.msra.mxu0 0.0
    %737 = vmatpush.msra.mxu0 0.0
    %738 = vmatpush.msra.mxu0 %v724
    %739 = vmatpush.msra.mxu0 %v723
    %740 = vmatpush.msra.mxu0 %v722
    %741 = vmatpush.msra.mxu0 %v721
    %742 = vmatpush.msra.mxu0 %v726
    %743 = vmatmul.f32.gmra.mxu0 %v281
    %v744 = vpop.f32.mrf.mxu0
    %v745 = vadd.f32 %v90, %v744
    %746 = vmatmul.f32.gmra.mxu0 %v284
    %v747 = vpop.f32.mrf.mxu0
    %v748 = vadd.f32 %v95, %v747
    %749 = vmatmul.f32.gmra.mxu0 %v287
    %v750 = vpop.f32.mrf.mxu0
    %v751 = vadd.f32 %v100, %v750
    %752 = vmatmul.f32.gmra.mxu0 %v290
    %v753 = vpop.f32.mrf.mxu0
    %v754 = vadd.f32 %v105, %v753
    %755 = vmatmul.f32.gmra.mxu0 %v293
    %v756 = vpop.f32.mrf.mxu0
    %v757 = vadd.f32 %v110, %v756
    %758 = vmatmul.f32.gmra.mxu0 %v296
    %v759 = vpop.f32.mrf.mxu0
    %v760 = vadd.f32 %v115, %v759
    %761 = vmatmul.f32.gmra.mxu0 %v299
    %v762 = vpop.f32.mrf.mxu0
    %v763 = vadd.f32 %v120, %v762
    %764 = vmatmul.f32.gmra.mxu0 %v302
    %v765 = vpop.f32.mrf.mxu0
    %v766 = vadd.f32 %v125, %v765
    %767 = vmatmul.f32.gmra.mxu0 %v305
    %v768 = vpop.f32.mrf.mxu0
    %v769 = vadd.f32 %v130, %v768
    %770 = vmatmul.f32.gmra.mxu0 %v308
    %v771 = vpop.f32.mrf.mxu0
    %v772 = vadd.f32 %v135, %v771
    %773 = vmatmul.f32.gmra.mxu0 %v311
    %v774 = vpop.f32.mrf.mxu0
    %v775 = vadd.f32 %v140, %v774
    %776 = vmatmul.f32.gmra.mxu0 %v314
    %v777 = vpop.f32.mrf.mxu0
    %v778 = vadd.f32 %v145, %v777
    %779 = vmatmul.f32.gmra.mxu0 %v317
    %v780 = vpop.f32.mrf.mxu0
    %v781 = vadd.f32 %v150, %v780
    %782 = vmatmul.f32.gmra.mxu0 %v320
    %v783 = vpop.f32.mrf.mxu0
    %v784 = vadd.f32 %v155, %v783
    %785 = vmatmul.f32.gmra.mxu0 %v323
    %v786 = vpop.f32.mrf.mxu0
    %v787 = vadd.f32 %v160, %v786
    %788 = vmatmul.f32.gmra.mxu0 %v326
    %v789 = vpop.f32.mrf.mxu0
    %v790 = vadd.f32 %v165, %v789
    %791 = vmatmul.f32.gmra.mxu0 %v329
    %v792 = vpop.f32.mrf.mxu0
    %v793 = vadd.f32 %v170, %v792
    %794 = vmatmul.f32.gmra.mxu0 %v332
    %v795 = vpop.f32.mrf.mxu0
    %v796 = vadd.f32 %v175, %v795
    %797 = vmatmul.f32.gmra.mxu0 %v335
    %v798 = vpop.f32.mrf.mxu0
    %v799 = vadd.f32 %v180, %v798
    %800 = vmatmul.f32.gmra.mxu0 %v338
    %v801 = vpop.f32.mrf.mxu0
    %v802 = vadd.f32 %v185, %v801
    %803 = vmatmul.f32.gmra.mxu0 %v341
    %v804 = vpop.f32.mrf.mxu0
    %v805 = vadd.f32 %v190, %v804
    %806 = vmatmul.f32.gmra.mxu0 %v344
    %v807 = vpop.f32.mrf.mxu0
    %v808 = vadd.f32 %v195, %v807
    %809 = vmatmul.f32.gmra.mxu0 %v347
    %v810 = vpop.f32.mrf.mxu0
    %v811 = vadd.f32 %v200, %v810
    %812 = vmatmul.f32.gmra.mxu0 %v350
    %v813 = vpop.f32.mrf.mxu0
    %v814 = vadd.f32 %v205, %v813
    %815 = vmatmul.f32.gmra.mxu0 %v353
    %v816 = vpop.f32.mrf.mxu0
    %v817 = vadd.f32 %v210, %v816
    %818 = vmatmul.f32.gmra.mxu0 %v356
    %v819 = vpop.f32.mrf.mxu0
    %v820 = vadd.f32 %v215, %v819
    %821 = vmatmul.f32.gmra.mxu0 %v359
    %v822 = vpop.f32.mrf.mxu0
    %v823 = vadd.f32 %v220, %v822
    %824 = vmatmul.f32.gmra.mxu0 %v362
    %v825 = vpop.f32.mrf.mxu0
    %v826 = vadd.f32 %v225, %v825
    %827 = vmatmul.f32.gmra.mxu0 %v365
    %v828 = vpop.f32.mrf.mxu0
    %v829 = vadd.f32 %v230, %v828
    %830 = vmatmul.f32.gmra.mxu0 %v368
    %v831 = vpop.f32.mrf.mxu0
    %v832 = vadd.f32 %v235, %v831
    %833 = vmatmul.f32.gmra.mxu0 %v371
    %v834 = vpop.f32.mrf.mxu0
    %v835 = vadd.f32 %v240, %v834
    %836 = vmatmul.f32.gmra.mxu0 %v374
    %v837 = vpop.f32.mrf.mxu0
    %v838 = vadd.f32 %v245, %v837
    %839 = vdwg.mxu0
    %v840 = vxor.u32 %v745, 2147483648
    %v841 = vxor.u32 %v748, 2147483648
    %v842 = vxor.u32 %v751, 2147483648
    %v843 = vxor.u32 %v754, 2147483648
    %v844 = vmul.f32 %v840, 1.442695
    %v845 = vpow.pop %v844
    %v846 = vmul.f32 %v841, 1.442695
    %v847 = vpow.pop %v846
    %v848 = vmul.f32 %v842, 1.442695
    %v849 = vpow.pop %v848
    %v850 = vmul.f32 %v843, 1.442695
    %v851 = vpow.pop %v850
    %v852 = vadd.f32 %v845, 1.0
    %v853 = vadd.f32 %v847, 1.0
    %v854 = vadd.f32 %v849, 1.0
    %v855 = vadd.f32 %v851, 1.0
    %v856 = vrcp.pop %v852
    %v857 = vmul.f32 %v852, %v856
    %v858 = vsub.f32 1.0, %v857
    %v859 = vmul.f32 %v856, %v858
    %v860 = vadd.f32 %v856, %v859
    %vm861 = vweird.f32 %v852
    %vm862 = vweird.f32 %v856
    %vm863 = vmor %vm861, %vm862
    %v864 = vsel %vm863, %v856, %v860
    %v865 = vand.u32 2147483647, %v852
    %vm866 = vcmp.eq.f32.partialorder %v865, 8.507059e+37
    %v867 = vand.u32 %v852, 2147483648
    %v868 = vor.u32 1.1754944e-38, %v867
    %v869 = vsel %vm866, %v868, %v864
    %v870 = vmul.f32 1.0, %v869
    %v871 = vrcp.pop %v853
    %v872 = vmul.f32 %v853, %v871
    %v873 = vsub.f32 1.0, %v872
    %v874 = vmul.f32 %v871, %v873
    %v875 = vadd.f32 %v871, %v874
    %vm876 = vweird.f32 %v853
    %vm877 = vweird.f32 %v871
    %vm878 = vmor %vm876, %vm877
    %v879 = vsel %vm878, %v871, %v875
    %v880 = vand.u32 2147483647, %v853
    %vm881 = vcmp.eq.f32.partialorder %v880, 8.507059e+37
    %v882 = vand.u32 %v853, 2147483648
    %v883 = vor.u32 1.1754944e-38, %v882
    %v884 = vsel %vm881, %v883, %v879
    %v885 = vmul.f32 1.0, %v884
    %v886 = vrcp.pop %v854
    %v887 = vmul.f32 %v854, %v886
    %v888 = vsub.f32 1.0, %v887
    %v889 = vmul.f32 %v886, %v888
    %v890 = vadd.f32 %v886, %v889
    %vm891 = vweird.f32 %v854
    %vm892 = vweird.f32 %v886
    %vm893 = vmor %vm891, %vm892
    %v894 = vsel %vm893, %v886, %v890
    %v895 = vand.u32 2147483647, %v854
    %vm896 = vcmp.eq.f32.partialorder %v895, 8.507059e+37
    %v897 = vand.u32 %v854, 2147483648
    %v898 = vor.u32 1.1754944e-38, %v897
    %v899 = vsel %vm896, %v898, %v894
    %v900 = vmul.f32 1.0, %v899
    %v901 = vrcp.pop %v855
    %v902 = vmul.f32 %v855, %v901
    %v903 = vsub.f32 1.0, %v902
    %v904 = vmul.f32 %v901, %v903
    %v905 = vadd.f32 %v901, %v904
    %vm906 = vweird.f32 %v855
    %vm907 = vweird.f32 %v901
    %vm908 = vmor %vm906, %vm907
    %v909 = vsel %vm908, %v901, %v905
    %v910 = vand.u32 2147483647, %v855
    %vm911 = vcmp.eq.f32.partialorder %v910, 8.507059e+37
    %v912 = vand.u32 %v855, 2147483648
    %v913 = vor.u32 1.1754944e-38, %v912
    %v914 = vsel %vm911, %v913, %v909
    %v915 = vmul.f32 1.0, %v914
    %v916 = vxor.u32 %v757, 2147483648
    %v917 = vxor.u32 %v760, 2147483648
    %v918 = vxor.u32 %v763, 2147483648
    %v919 = vxor.u32 %v766, 2147483648
    %v920 = vmul.f32 %v916, 1.442695
    %v921 = vpow.pop %v920
    %v922 = vmul.f32 %v917, 1.442695
    %v923 = vpow.pop %v922
    %v924 = vmul.f32 %v918, 1.442695
    %v925 = vpow.pop %v924
    %v926 = vmul.f32 %v919, 1.442695
    %v927 = vpow.pop %v926
    %v928 = vadd.f32 %v921, 1.0
    %v929 = vadd.f32 %v923, 1.0
    %v930 = vadd.f32 %v925, 1.0
    %v931 = vadd.f32 %v927, 1.0
    %v932 = vrcp.pop %v928
    %v933 = vmul.f32 %v928, %v932
    %v934 = vsub.f32 1.0, %v933
    %v935 = vmul.f32 %v932, %v934
    %v936 = vadd.f32 %v932, %v935
    %vm937 = vweird.f32 %v928
    %vm938 = vweird.f32 %v932
    %vm939 = vmor %vm937, %vm938
    %v940 = vsel %vm939, %v932, %v936
    %v941 = vand.u32 2147483647, %v928
    %vm942 = vcmp.eq.f32.partialorder %v941, 8.507059e+37
    %v943 = vand.u32 %v928, 2147483648
    %v944 = vor.u32 1.1754944e-38, %v943
    %v945 = vsel %vm942, %v944, %v940
    %v946 = vmul.f32 1.0, %v945
    %v947 = vrcp.pop %v929
    %v948 = vmul.f32 %v929, %v947
    %v949 = vsub.f32 1.0, %v948
    %v950 = vmul.f32 %v947, %v949
    %v951 = vadd.f32 %v947, %v950
    %vm952 = vweird.f32 %v929
    %vm953 = vweird.f32 %v947
    %vm954 = vmor %vm952, %vm953
    %v955 = vsel %vm954, %v947, %v951
    %v956 = vand.u32 2147483647, %v929
    %vm957 = vcmp.eq.f32.partialorder %v956, 8.507059e+37
    %v958 = vand.u32 %v929, 2147483648
    %v959 = vor.u32 1.1754944e-38, %v958
    %v960 = vsel %vm957, %v959, %v955
    %v961 = vmul.f32 1.0, %v960
    %v962 = vrcp.pop %v930
    %v963 = vmul.f32 %v930, %v962
    %v964 = vsub.f32 1.0, %v963
    %v965 = vmul.f32 %v962, %v964
    %v966 = vadd.f32 %v962, %v965
    %vm967 = vweird.f32 %v930
    %vm968 = vweird.f32 %v962
    %vm969 = vmor %vm967, %vm968
    %v970 = vsel %vm969, %v962, %v966
    %v971 = vand.u32 2147483647, %v930
    %vm972 = vcmp.eq.f32.partialorder %v971, 8.507059e+37
    %v973 = vand.u32 %v930, 2147483648
    %v974 = vor.u32 1.1754944e-38, %v973
    %v975 = vsel %vm972, %v974, %v970
    %v976 = vmul.f32 1.0, %v975
    %v977 = vrcp.pop %v931
    %v978 = vmul.f32 %v931, %v977
    %v979 = vsub.f32 1.0, %v978
    %v980 = vmul.f32 %v977, %v979
    %v981 = vadd.f32 %v977, %v980
    %vm982 = vweird.f32 %v931
    %vm983 = vweird.f32 %v977
    %vm984 = vmor %vm982, %vm983
    %v985 = vsel %vm984, %v977, %v981
    %v986 = vand.u32 2147483647, %v931
    %vm987 = vcmp.eq.f32.partialorder %v986, 8.507059e+37
    %v988 = vand.u32 %v931, 2147483648
    %v989 = vor.u32 1.1754944e-38, %v988
    %v990 = vsel %vm987, %v989, %v985
    %v991 = vmul.f32 1.0, %v990
    %v992 = vtanh.pop %v769
    %v993 = vtanh.pop %v772
    %v994 = vtanh.pop %v775
    %v995 = vtanh.pop %v778
    %v996 = vxor.u32 %v781, 2147483648
    %v997 = vxor.u32 %v784, 2147483648
    %v998 = vxor.u32 %v787, 2147483648
    %v999 = vxor.u32 %v790, 2147483648
    %v1000 = vmul.f32 %v996, 1.442695
    %v1001 = vpow.pop %v1000
    %v1002 = vmul.f32 %v997, 1.442695
    %v1003 = vpow.pop %v1002
    %v1004 = vmul.f32 %v998, 1.442695
    %v1005 = vpow.pop %v1004
    %v1006 = vmul.f32 %v999, 1.442695
    %v1007 = vpow.pop %v1006
    %v1008 = vadd.f32 %v1001, 1.0
    %v1009 = vadd.f32 %v1003, 1.0
    %v1010 = vadd.f32 %v1005, 1.0
    %v1011 = vadd.f32 %v1007, 1.0
    %v1012 = vrcp.pop %v1008
    %v1013 = vmul.f32 %v1008, %v1012
    %v1014 = vsub.f32 1.0, %v1013
    %v1015 = vmul.f32 %v1012, %v1014
    %v1016 = vadd.f32 %v1012, %v1015
    %vm1017 = vweird.f32 %v1008
    %vm1018 = vweird.f32 %v1012
    %vm1019 = vmor %vm1017, %vm1018
    %v1020 = vsel %vm1019, %v1012, %v1016
    %v1021 = vand.u32 2147483647, %v1008
    %vm1022 = vcmp.eq.f32.partialorder %v1021, 8.507059e+37
    %v1023 = vand.u32 %v1008, 2147483648
    %v1024 = vor.u32 1.1754944e-38, %v1023
    %v1025 = vsel %vm1022, %v1024, %v1020
    %v1026 = vmul.f32 1.0, %v1025
    %v1027 = vrcp.pop %v1009
    %v1028 = vmul.f32 %v1009, %v1027
    %v1029 = vsub.f32 1.0, %v1028
    %v1030 = vmul.f32 %v1027, %v1029
    %v1031 = vadd.f32 %v1027, %v1030
    %vm1032 = vweird.f32 %v1009
    %vm1033 = vweird.f32 %v1027
    %vm1034 = vmor %vm1032, %vm1033
    %v1035 = vsel %vm1034, %v1027, %v1031
    %v1036 = vand.u32 2147483647, %v1009
    %vm1037 = vcmp.eq.f32.partialorder %v1036, 8.507059e+37
    %v1038 = vand.u32 %v1009, 2147483648
    %v1039 = vor.u32 1.1754944e-38, %v1038
    %v1040 = vsel %vm1037, %v1039, %v1035
    %v1041 = vmul.f32 1.0, %v1040
    %v1042 = vrcp.pop %v1010
    %v1043 = vmul.f32 %v1010, %v1042
    %v1044 = vsub.f32 1.0, %v1043
    %v1045 = vmul.f32 %v1042, %v1044
    %v1046 = vadd.f32 %v1042, %v1045
    %vm1047 = vweird.f32 %v1010
    %vm1048 = vweird.f32 %v1042
    %vm1049 = vmor %vm1047, %vm1048
    %v1050 = vsel %vm1049, %v1042, %v1046
    %v1051 = vand.u32 2147483647, %v1010
    %vm1052 = vcmp.eq.f32.partialorder %v1051, 8.507059e+37
    %v1053 = vand.u32 %v1010, 2147483648
    %v1054 = vor.u32 1.1754944e-38, %v1053
    %v1055 = vsel %vm1052, %v1054, %v1050
    %v1056 = vmul.f32 1.0, %v1055
    %v1057 = vrcp.pop %v1011
    %v1058 = vmul.f32 %v1011, %v1057
    %v1059 = vsub.f32 1.0, %v1058
    %v1060 = vmul.f32 %v1057, %v1059
    %v1061 = vadd.f32 %v1057, %v1060
    %vm1062 = vweird.f32 %v1011
    %vm1063 = vweird.f32 %v1057
    %vm1064 = vmor %vm1062, %vm1063
    %v1065 = vsel %vm1064, %v1057, %v1061
    %v1066 = vand.u32 2147483647, %v1011
    %vm1067 = vcmp.eq.f32.partialorder %v1066, 8.507059e+37
    %v1068 = vand.u32 %v1011, 2147483648
    %v1069 = vor.u32 1.1754944e-38, %v1068
    %v1070 = vsel %vm1067, %v1069, %v1065
    %v1071 = vmul.f32 1.0, %v1070
    %v1072 = vmul.f32 %v946, %v713
    %v1073 = vmul.f32 %v961, %v714
    %v1074 = vmul.f32 %v976, %v715
    %v1075 = vmul.f32 %v991, %v716
    %v1076 = vmul.f32 %v870, %v992
    %v1077 = vmul.f32 %v885, %v993
    %v1078 = vmul.f32 %v900, %v994
    %v1079 = vmul.f32 %v915, %v995
    %v1080 = vadd.f32 %v1072, %v1076
    %v1081 = vadd.f32 %v1073, %v1077
    %v1082 = vadd.f32 %v1074, %v1078
    %v1083 = vadd.f32 %v1075, %v1079
    %v1084 = vtanh.pop %v1080
    %v1085 = vtanh.pop %v1081
    %v1086 = vtanh.pop %v1082
    %v1087 = vtanh.pop %v1083
    %v1088 = vmul.f32 %v1026, %v1084
    %v1089 = vmul.f32 %v1041, %v1085
    %v1090 = vmul.f32 %v1056, %v1086
    %v1091 = vmul.f32 %v1071, %v1087
    %v1092 = vxor.u32 %v793, 2147483648
    %v1093 = vxor.u32 %v796, 2147483648
    %v1094 = vxor.u32 %v799, 2147483648
    %v1095 = vxor.u32 %v802, 2147483648
    %v1096 = vmul.f32 %v1092, 1.442695
    %v1097 = vpow.pop %v1096
    %v1098 = vmul.f32 %v1093, 1.442695
    %v1099 = vpow.pop %v1098
    %v1100 = vmul.f32 %v1094, 1.442695
    %v1101 = vpow.pop %v1100
    %v1102 = vmul.f32 %v1095, 1.442695
    %v1103 = vpow.pop %v1102
    %v1104 = vadd.f32 %v1097, 1.0
    %v1105 = vadd.f32 %v1099, 1.0
    %v1106 = vadd.f32 %v1101, 1.0
    %v1107 = vadd.f32 %v1103, 1.0
    %v1108 = vrcp.pop %v1104
    %v1109 = vmul.f32 %v1104, %v1108
    %v1110 = vsub.f32 1.0, %v1109
    %v1111 = vmul.f32 %v1108, %v1110
    %v1112 = vadd.f32 %v1108, %v1111
    %vm1113 = vweird.f32 %v1104
    %vm1114 = vweird.f32 %v1108
    %vm1115 = vmor %vm1113, %vm1114
    %v1116 = vsel %vm1115, %v1108, %v1112
    %v1117 = vand.u32 2147483647, %v1104
    %vm1118 = vcmp.eq.f32.partialorder %v1117, 8.507059e+37
    %v1119 = vand.u32 %v1104, 2147483648
    %v1120 = vor.u32 1.1754944e-38, %v1119
    %v1121 = vsel %vm1118, %v1120, %v1116
    %v1122 = vmul.f32 1.0, %v1121
    %v1123 = vrcp.pop %v1105
    %v1124 = vmul.f32 %v1105, %v1123
    %v1125 = vsub.f32 1.0, %v1124
    %v1126 = vmul.f32 %v1123, %v1125
    %v1127 = vadd.f32 %v1123, %v1126
    %vm1128 = vweird.f32 %v1105
    %vm1129 = vweird.f32 %v1123
    %vm1130 = vmor %vm1128, %vm1129
    %v1131 = vsel %vm1130, %v1123, %v1127
    %v1132 = vand.u32 2147483647, %v1105
    %vm1133 = vcmp.eq.f32.partialorder %v1132, 8.507059e+37
    %v1134 = vand.u32 %v1105, 2147483648
    %v1135 = vor.u32 1.1754944e-38, %v1134
    %v1136 = vsel %vm1133, %v1135, %v1131
    %v1137 = vmul.f32 1.0, %v1136
    %v1138 = vrcp.pop %v1106
    %v1139 = vmul.f32 %v1106, %v1138
    %v1140 = vsub.f32 1.0, %v1139
    %v1141 = vmul.f32 %v1138, %v1140
    %v1142 = vadd.f32 %v1138, %v1141
    %vm1143 = vweird.f32 %v1106
    %vm1144 = vweird.f32 %v1138
    %vm1145 = vmor %vm1143, %vm1144
    %v1146 = vsel %vm1145, %v1138, %v1142
    %v1147 = vand.u32 2147483647, %v1106
    %vm1148 = vcmp.eq.f32.partialorder %v1147, 8.507059e+37
    %v1149 = vand.u32 %v1106, 2147483648
    %v1150 = vor.u32 1.1754944e-38, %v1149
    %v1151 = vsel %vm1148, %v1150, %v1146
    %v1152 = vmul.f32 1.0, %v1151
    %v1153 = vrcp.pop %v1107
    %v1154 = vmul.f32 %v1107, %v1153
    %v1155 = vsub.f32 1.0, %v1154
    %v1156 = vmul.f32 %v1153, %v1155
    %v1157 = vadd.f32 %v1153, %v1156
    %vm1158 = vweird.f32 %v1107
    %vm1159 = vweird.f32 %v1153
    %vm1160 = vmor %vm1158, %vm1159
    %v1161 = vsel %vm1160, %v1153, %v1157
    %v1162 = vand.u32 2147483647, %v1107
    %vm1163 = vcmp.eq.f32.partialorder %v1162, 8.507059e+37
    %v1164 = vand.u32 %v1107, 2147483648
    %v1165 = vor.u32 1.1754944e-38, %v1164
    %v1166 = vsel %vm1163, %v1165, %v1161
    %v1167 = vmul.f32 1.0, %v1166
    %v1168 = vxor.u32 %v805, 2147483648
    %v1169 = vxor.u32 %v808, 2147483648
    %v1170 = vxor.u32 %v811, 2147483648
    %v1171 = vxor.u32 %v814, 2147483648
    %v1172 = vmul.f32 %v1168, 1.442695
    %v1173 = vpow.pop %v1172
    %v1174 = vmul.f32 %v1169, 1.442695
    %v1175 = vpow.pop %v1174
    %v1176 = vmul.f32 %v1170, 1.442695
    %v1177 = vpow.pop %v1176
    %v1178 = vmul.f32 %v1171, 1.442695
    %v1179 = vpow.pop %v1178
    %v1180 = vadd.f32 %v1173, 1.0
    %v1181 = vadd.f32 %v1175, 1.0
    %v1182 = vadd.f32 %v1177, 1.0
    %v1183 = vadd.f32 %v1179, 1.0
    %v1184 = vrcp.pop %v1180
    %v1185 = vmul.f32 %v1180, %v1184
    %v1186 = vsub.f32 1.0, %v1185
    %v1187 = vmul.f32 %v1184, %v1186
    %v1188 = vadd.f32 %v1184, %v1187
    %vm1189 = vweird.f32 %v1180
    %vm1190 = vweird.f32 %v1184
    %vm1191 = vmor %vm1189, %vm1190
    %v1192 = vsel %vm1191, %v1184, %v1188
    %v1193 = vand.u32 2147483647, %v1180
    %vm1194 = vcmp.eq.f32.partialorder %v1193, 8.507059e+37
    %v1195 = vand.u32 %v1180, 2147483648
    %v1196 = vor.u32 1.1754944e-38, %v1195
    %v1197 = vsel %vm1194, %v1196, %v1192
    %v1198 = vmul.f32 1.0, %v1197
    %v1199 = vrcp.pop %v1181
    %v1200 = vmul.f32 %v1181, %v1199
    %v1201 = vsub.f32 1.0, %v1200
    %v1202 = vmul.f32 %v1199, %v1201
    %v1203 = vadd.f32 %v1199, %v1202
    %vm1204 = vweird.f32 %v1181
    %vm1205 = vweird.f32 %v1199
    %vm1206 = vmor %vm1204, %vm1205
    %v1207 = vsel %vm1206, %v1199, %v1203
    %v1208 = vand.u32 2147483647, %v1181
    %vm1209 = vcmp.eq.f32.partialorder %v1208, 8.507059e+37
    %v1210 = vand.u32 %v1181, 2147483648
    %v1211 = vor.u32 1.1754944e-38, %v1210
    %v1212 = vsel %vm1209, %v1211, %v1207
    %v1213 = vmul.f32 1.0, %v1212
    %v1214 = vrcp.pop %v1182
    %v1215 = vmul.f32 %v1182, %v1214
    %v1216 = vsub.f32 1.0, %v1215
    %v1217 = vmul.f32 %v1214, %v1216
    %v1218 = vadd.f32 %v1214, %v1217
    %vm1219 = vweird.f32 %v1182
    %vm1220 = vweird.f32 %v1214
    %vm1221 = vmor %vm1219, %vm1220
    %v1222 = vsel %vm1221, %v1214, %v1218
    %v1223 = vand.u32 2147483647, %v1182
    %vm1224 = vcmp.eq.f32.partialorder %v1223, 8.507059e+37
    %v1225 = vand.u32 %v1182, 2147483648
    %v1226 = vor.u32 1.1754944e-38, %v1225
    %v1227 = vsel %vm1224, %v1226, %v1222
    %v1228 = vmul.f32 1.0, %v1227
    %v1229 = vrcp.pop %v1183
    %v1230 = vmul.f32 %v1183, %v1229
    %v1231 = vsub.f32 1.0, %v1230
    %v1232 = vmul.f32 %v1229, %v1231
    %v1233 = vadd.f32 %v1229, %v1232
    %vm1234 = vweird.f32 %v1183
    %vm1235 = vweird.f32 %v1229
    %vm1236 = vmor %vm1234, %vm1235
    %v1237 = vsel %vm1236, %v1229, %v1233
    %v1238 = vand.u32 2147483647, %v1183
    %vm1239 = vcmp.eq.f32.partialorder %v1238, 8.507059e+37
    %v1240 = vand.u32 %v1183, 2147483648
    %v1241 = vor.u32 1.1754944e-38, %v1240
    %v1242 = vsel %vm1239, %v1241, %v1237
    %v1243 = vmul.f32 1.0, %v1242
    %v1244 = vtanh.pop %v817
    %v1245 = vtanh.pop %v820
    %v1246 = vtanh.pop %v823
    %v1247 = vtanh.pop %v826
    %v1248 = vxor.u32 %v829, 2147483648
    %v1249 = vxor.u32 %v832, 2147483648
    %v1250 = vxor.u32 %v835, 2147483648
    %v1251 = vxor.u32 %v838, 2147483648
    %v1252 = vmul.f32 %v1248, 1.442695
    %v1253 = vpow.pop %v1252
    %v1254 = vmul.f32 %v1249, 1.442695
    %v1255 = vpow.pop %v1254
    %v1256 = vmul.f32 %v1250, 1.442695
    %v1257 = vpow.pop %v1256
    %v1258 = vmul.f32 %v1251, 1.442695
    %v1259 = vpow.pop %v1258
    %v1260 = vadd.f32 %v1253, 1.0
    %v1261 = vadd.f32 %v1255, 1.0
    %v1262 = vadd.f32 %v1257, 1.0
    %v1263 = vadd.f32 %v1259, 1.0
    %v1264 = vrcp.pop %v1260
    %v1265 = vmul.f32 %v1260, %v1264
    %v1266 = vsub.f32 1.0, %v1265
    %v1267 = vmul.f32 %v1264, %v1266
    %v1268 = vadd.f32 %v1264, %v1267
    %vm1269 = vweird.f32 %v1260
    %vm1270 = vweird.f32 %v1264
    %vm1271 = vmor %vm1269, %vm1270
    %v1272 = vsel %vm1271, %v1264, %v1268
    %v1273 = vand.u32 2147483647, %v1260
    %vm1274 = vcmp.eq.f32.partialorder %v1273, 8.507059e+37
    %v1275 = vand.u32 %v1260, 2147483648
    %v1276 = vor.u32 1.1754944e-38, %v1275
    %v1277 = vsel %vm1274, %v1276, %v1272
    %v1278 = vmul.f32 1.0, %v1277
    %v1279 = vrcp.pop %v1261
    %v1280 = vmul.f32 %v1261, %v1279
    %v1281 = vsub.f32 1.0, %v1280
    %v1282 = vmul.f32 %v1279, %v1281
    %v1283 = vadd.f32 %v1279, %v1282
    %vm1284 = vweird.f32 %v1261
    %vm1285 = vweird.f32 %v1279
    %vm1286 = vmor %vm1284, %vm1285
    %v1287 = vsel %vm1286, %v1279, %v1283
    %v1288 = vand.u32 2147483647, %v1261
    %vm1289 = vcmp.eq.f32.partialorder %v1288, 8.507059e+37
    %v1290 = vand.u32 %v1261, 2147483648
    %v1291 = vor.u32 1.1754944e-38, %v1290
    %v1292 = vsel %vm1289, %v1291, %v1287
    %v1293 = vmul.f32 1.0, %v1292
    %v1294 = vrcp.pop %v1262
    %v1295 = vmul.f32 %v1262, %v1294
    %v1296 = vsub.f32 1.0, %v1295
    %v1297 = vmul.f32 %v1294, %v1296
    %v1298 = vadd.f32 %v1294, %v1297
    %vm1299 = vweird.f32 %v1262
    %vm1300 = vweird.f32 %v1294
    %vm1301 = vmor %vm1299, %vm1300
    %v1302 = vsel %vm1301, %v1294, %v1298
    %v1303 = vand.u32 2147483647, %v1262
    %vm1304 = vcmp.eq.f32.partialorder %v1303, 8.507059e+37
    %v1305 = vand.u32 %v1262, 2147483648
    %v1306 = vor.u32 1.1754944e-38, %v1305
    %v1307 = vsel %vm1304, %v1306, %v1302
    %v1308 = vmul.f32 1.0, %v1307
    %v1309 = vrcp.pop %v1263
    %v1310 = vmul.f32 %v1263, %v1309
    %v1311 = vsub.f32 1.0, %v1310
    %v1312 = vmul.f32 %v1309, %v1311
    %v1313 = vadd.f32 %v1309, %v1312
    %vm1314 = vweird.f32 %v1263
    %vm1315 = vweird.f32 %v1309
    %vm1316 = vmor %vm1314, %vm1315
    %v1317 = vsel %vm1316, %v1309, %v1313
    %v1318 = vand.u32 2147483647, %v1263
    %vm1319 = vcmp.eq.f32.partialorder %v1318, 8.507059e+37
    %v1320 = vand.u32 %v1263, 2147483648
    %v1321 = vor.u32 1.1754944e-38, %v1320
    %v1322 = vsel %vm1319, %v1321, %v1317
    %v1323 = vmul.f32 1.0, %v1322
    %v1324 = vmul.f32 %v1198, 0.0
    %v1325 = vmul.f32 %v1213, 0.0
    %v1326 = vmul.f32 %v1228, 0.0
    %v1327 = vmul.f32 %v1243, 0.0
    %v1328 = vmul.f32 %v1122, %v1244
    %v1329 = vmul.f32 %v1137, %v1245
    %v1330 = vmul.f32 %v1152, %v1246
    %v1331 = vmul.f32 %v1167, %v1247
    %v1332 = vadd.f32 %v1324, %v1328
    %v1333 = vadd.f32 %v1325, %v1329
    %v1334 = vadd.f32 %v1326, %v1330
    %v1335 = vadd.f32 %v1327, %v1331
    %v1336 = vtanh.pop %v1332
    %v1337 = vtanh.pop %v1333
    %v1338 = vtanh.pop %v1334
    %v1339 = vtanh.pop %v1335
    %v1340 = vmul.f32 %v1278, %v1336
    %v1341 = vmul.f32 %v1293, %v1337
    %v1342 = vmul.f32 %v1308, %v1338
    %v1343 = vmul.f32 %v1323, %v1339
    %v1344 = vmul.f32 %v1340, %v254
    %v1345 = vmul.f32 %v1341, %v259
    %v1346 = vmul.f32 %v1342, %v264
    %v1347 = vmul.f32 %v1343, %v269
    %vm1348 = vcmask 523264
    %v1349 = vsel %vm1348, %v1344, 0.0
    %v1350 = vsel %vm1348, %v1345, 0.0
    %v1351 = vadd.f32 %v1349, %v1350
    %v1352 = vsel %vm1348, %v1346, 0.0
    %v1353 = vadd.f32 %v1351, %v1352
    %v1354 = vsel %vm1348, %v1347, 0.0
    %v1355 = vadd.f32 %v1353, %v1354
    %v1356 = vrot.slane %v1355, 4
    %v1357 = vadd.f32 %v1355, %v1356
    %v1358 = vrot.slane %v1357, 2
    %v1359 = vadd.f32 %v1357, %v1358
    %v1360 = vrot.slane %v1359, 1
    %v1361 = vadd.f32 %v1359, %v1360
    %v1362 = vadd.f32 %v1361, %v277
    %v1363 = vmax.f32 %v1362, 0.0
    %vm1364 = vcmask 516096
    %1365 = vst.msk [vmem:[#allocation3] sm:$0x1] %vm1364, %v1363
    %s1366 = scalar_lea.vmem %s0, 16
    %v1367 = vld [vmem:[%s1366] sm:$0xff]
    %1368 = vmatpush.msra.mxu0 0.0
    %1369 = vmatpush.msra.mxu0 0.0
    %1370 = vmatpush.msra.mxu0 0.0
    %1371 = vmatpush.msra.mxu0 0.0
    %1372 = vmatpush.msra.mxu0 0.0
    %1373 = vmatpush.msra.mxu0 0.0
    %1374 = vmatpush.msra.mxu0 0.0
    %1375 = vmatpush.msra.mxu0 %v1343
    %1376 = vmatpush.msra.mxu0 %v1342
    %1377 = vmatpush.msra.mxu0 %v1341
    %1378 = vmatpush.msra.mxu0 %v1340
    %1379 = vmatpush.msra.mxu0 %v1091
    %1380 = vmatpush.msra.mxu0 %v1090
    %1381 = vmatpush.msra.mxu0 %v1089
    %1382 = vmatpush.msra.mxu0 %v1088
    %1383 = vmatpush.msra.mxu0 %v1367
    %1384 = vmatmul.f32.gmra.mxu0 %v281
    %v1385 = vpop.f32.mrf.mxu0
    %v1386 = vadd.f32 %v90, %v1385
    %1387 = vmatmul.f32.gmra.mxu0 %v284
    %v1388 = vpop.f32.mrf.mxu0
    %v1389 = vadd.f32 %v95, %v1388
    %1390 = vmatmul.f32.gmra.mxu0 %v287
    %v1391 = vpop.f32.mrf.mxu0
    %v1392 = vadd.f32 %v100, %v1391
    %1393 = vmatmul.f32.gmra.mxu0 %v290
    %v1394 = vpop.f32.mrf.mxu0
    %v1395 = vadd.f32 %v105, %v1394
    %1396 = vmatmul.f32.gmra.mxu0 %v293
    %v1397 = vpop.f32.mrf.mxu0
    %v1398 = vadd.f32 %v110, %v1397
    %1399 = vmatmul.f32.gmra.mxu0 %v296
    %v1400 = vpop.f32.mrf.mxu0
    %v1401 = vadd.f32 %v115, %v1400
    %1402 = vmatmul.f32.gmra.mxu0 %v299
    %v1403 = vpop.f32.mrf.mxu0
    %v1404 = vadd.f32 %v120, %v1403
    %1405 = vmatmul.f32.gmra.mxu0 %v302
    %v1406 = vpop.f32.mrf.mxu0
    %v1407 = vadd.f32 %v125, %v1406
    %1408 = vmatmul.f32.gmra.mxu0 %v305
    %v1409 = vpop.f32.mrf.mxu0
    %v1410 = vadd.f32 %v130, %v1409
    %1411 = vmatmul.f32.gmra.mxu0 %v308
    %v1412 = vpop.f32.mrf.mxu0
    %v1413 = vadd.f32 %v135, %v1412
    %1414 = vmatmul.f32.gmra.mxu0 %v311
    %v1415 = vpop.f32.mrf.mxu0
    %v1416 = vadd.f32 %v140, %v1415
    %1417 = vmatmul.f32.gmra.mxu0 %v314
    %v1418 = vpop.f32.mrf.mxu0
    %v1419 = vadd.f32 %v145, %v1418
    %1420 = vmatmul.f32.gmra.mxu0 %v317
    %v1421 = vpop.f32.mrf.mxu0
    %v1422 = vadd.f32 %v150, %v1421
    %1423 = vmatmul.f32.gmra.mxu0 %v320
    %v1424 = vpop.f32.mrf.mxu0
    %v1425 = vadd.f32 %v155, %v1424
    %1426 = vmatmul.f32.gmra.mxu0 %v323
    %v1427 = vpop.f32.mrf.mxu0
    %v1428 = vadd.f32 %v160, %v1427
    %1429 = vmatmul.f32.gmra.mxu0 %v326
    %v1430 = vpop.f32.mrf.mxu0
    %v1431 = vadd.f32 %v165, %v1430
    %1432 = vmatmul.f32.gmra.mxu0 %v329
    %v1433 = vpop.f32.mrf.mxu0
    %v1434 = vadd.f32 %v170, %v1433
    %1435 = vmatmul.f32.gmra.mxu0 %v332
    %v1436 = vpop.f32.mrf.mxu0
    %v1437 = vadd.f32 %v175, %v1436
    %1438 = vmatmul.f32.gmra.mxu0 %v335
    %v1439 = vpop.f32.mrf.mxu0
    %v1440 = vadd.f32 %v180, %v1439
    %1441 = vmatmul.f32.gmra.mxu0 %v338
    %v1442 = vpop.f32.mrf.mxu0
    %v1443 = vadd.f32 %v185, %v1442
    %1444 = vmatmul.f32.gmra.mxu0 %v341
    %v1445 = vpop.f32.mrf.mxu0
    %v1446 = vadd.f32 %v190, %v1445
    %1447 = vmatmul.f32.gmra.mxu0 %v344
    %v1448 = vpop.f32.mrf.mxu0
    %v1449 = vadd.f32 %v195, %v1448
    %1450 = vmatmul.f32.gmra.mxu0 %v347
    %v1451 = vpop.f32.mrf.mxu0
    %v1452 = vadd.f32 %v200, %v1451
    %1453 = vmatmul.f32.gmra.mxu0 %v350
    %v1454 = vpop.f32.mrf.mxu0
    %v1455 = vadd.f32 %v205, %v1454
    %1456 = vmatmul.f32.gmra.mxu0 %v353
    %v1457 = vpop.f32.mrf.mxu0
    %v1458 = vadd.f32 %v210, %v1457
    %1459 = vmatmul.f32.gmra.mxu0 %v356
    %v1460 = vpop.f32.mrf.mxu0
    %v1461 = vadd.f32 %v215, %v1460
    %1462 = vmatmul.f32.gmra.mxu0 %v359
    %v1463 = vpop.f32.mrf.mxu0
    %v1464 = vadd.f32 %v220, %v1463
    %1465 = vmatmul.f32.gmra.mxu0 %v362
    %v1466 = vpop.f32.mrf.mxu0
    %v1467 = vadd.f32 %v225, %v1466
    %1468 = vmatmul.f32.gmra.mxu0 %v365
    %v1469 = vpop.f32.mrf.mxu0
    %v1470 = vadd.f32 %v230, %v1469
    %1471 = vmatmul.f32.gmra.mxu0 %v368
    %v1472 = vpop.f32.mrf.mxu0
    %v1473 = vadd.f32 %v235, %v1472
    %1474 = vmatmul.f32.gmra.mxu0 %v371
    %v1475 = vpop.f32.mrf.mxu0
    %v1476 = vadd.f32 %v240, %v1475
    %1477 = vmatmul.f32.gmra.mxu0 %v374
    %v1478 = vpop.f32.mrf.mxu0
    %v1479 = vadd.f32 %v245, %v1478
    %1480 = vdwg.mxu0
    %v1481 = vxor.u32 %v1386, 2147483648
    %v1482 = vxor.u32 %v1389, 2147483648
    %v1483 = vxor.u32 %v1392, 2147483648
    %v1484 = vxor.u32 %v1395, 2147483648
    %v1485 = vmul.f32 %v1481, 1.442695
    %v1486 = vpow.pop %v1485
    %v1487 = vmul.f32 %v1482, 1.442695
    %v1488 = vpow.pop %v1487
    %v1489 = vmul.f32 %v1483, 1.442695
    %v1490 = vpow.pop %v1489
    %v1491 = vmul.f32 %v1484, 1.442695
    %v1492 = vpow.pop %v1491
    %v1493 = vadd.f32 %v1486, 1.0
    %v1494 = vadd.f32 %v1488, 1.0
    %v1495 = vadd.f32 %v1490, 1.0
    %v1496 = vadd.f32 %v1492, 1.0
    %v1497 = vrcp.pop %v1493
    %v1498 = vmul.f32 %v1493, %v1497
    %v1499 = vsub.f32 1.0, %v1498
    %v1500 = vmul.f32 %v1497, %v1499
    %v1501 = vadd.f32 %v1497, %v1500
    %vm1502 = vweird.f32 %v1493
    %vm1503 = vweird.f32 %v1497
    %vm1504 = vmor %vm1502, %vm1503
    %v1505 = vsel %vm1504, %v1497, %v1501
    %v1506 = vand.u32 2147483647, %v1493
    %vm1507 = vcmp.eq.f32.partialorder %v1506, 8.507059e+37
    %v1508 = vand.u32 %v1493, 2147483648
    %v1509 = vor.u32 1.1754944e-38, %v1508
    %v1510 = vsel %vm1507, %v1509, %v1505
    %v1511 = vmul.f32 1.0, %v1510
    %v1512 = vrcp.pop %v1494
    %v1513 = vmul.f32 %v1494, %v1512
    %v1514 = vsub.f32 1.0, %v1513
    %v1515 = vmul.f32 %v1512, %v1514
    %v1516 = vadd.f32 %v1512, %v1515
    %vm1517 = vweird.f32 %v1494
    %vm1518 = vweird.f32 %v1512
    %vm1519 = vmor %vm1517, %vm1518
    %v1520 = vsel %vm1519, %v1512, %v1516
    %v1521 = vand.u32 2147483647, %v1494
    %vm1522 = vcmp.eq.f32.partialorder %v1521, 8.507059e+37
    %v1523 = vand.u32 %v1494, 2147483648
    %v1524 = vor.u32 1.1754944e-38, %v1523
    %v1525 = vsel %vm1522, %v1524, %v1520
    %v1526 = vmul.f32 1.0, %v1525
    %v1527 = vrcp.pop %v1495
    %v1528 = vmul.f32 %v1495, %v1527
    %v1529 = vsub.f32 1.0, %v1528
    %v1530 = vmul.f32 %v1527, %v1529
    %v1531 = vadd.f32 %v1527, %v1530
    %vm1532 = vweird.f32 %v1495
    %vm1533 = vweird.f32 %v1527
    %vm1534 = vmor %vm1532, %vm1533
    %v1535 = vsel %vm1534, %v1527, %v1531
    %v1536 = vand.u32 2147483647, %v1495
    %vm1537 = vcmp.eq.f32.partialorder %v1536, 8.507059e+37
    %v1538 = vand.u32 %v1495, 2147483648
    %v1539 = vor.u32 1.1754944e-38, %v1538
    %v1540 = vsel %vm1537, %v1539, %v1535
    %v1541 = vmul.f32 1.0, %v1540
    %v1542 = vrcp.pop %v1496
    %v1543 = vmul.f32 %v1496, %v1542
    %v1544 = vsub.f32 1.0, %v1543
    %v1545 = vmul.f32 %v1542, %v1544
    %v1546 = vadd.f32 %v1542, %v1545
    %vm1547 = vweird.f32 %v1496
    %vm1548 = vweird.f32 %v1542
    %vm1549 = vmor %vm1547, %vm1548
    %v1550 = vsel %vm1549, %v1542, %v1546
    %v1551 = vand.u32 2147483647, %v1496
    %vm1552 = vcmp.eq.f32.partialorder %v1551, 8.507059e+37
    %v1553 = vand.u32 %v1496, 2147483648
    %v1554 = vor.u32 1.1754944e-38, %v1553
    %v1555 = vsel %vm1552, %v1554, %v1550
    %v1556 = vmul.f32 1.0, %v1555
    %v1557 = vxor.u32 %v1398, 2147483648
    %v1558 = vxor.u32 %v1401, 2147483648
    %v1559 = vxor.u32 %v1404, 2147483648
    %v1560 = vxor.u32 %v1407, 2147483648
    %v1561 = vmul.f32 %v1557, 1.442695
    %v1562 = vpow.pop %v1561
    %v1563 = vmul.f32 %v1558, 1.442695
    %v1564 = vpow.pop %v1563
    %v1565 = vmul.f32 %v1559, 1.442695
    %v1566 = vpow.pop %v1565
    %v1567 = vmul.f32 %v1560, 1.442695
    %v1568 = vpow.pop %v1567
    %v1569 = vadd.f32 %v1562, 1.0
    %v1570 = vadd.f32 %v1564, 1.0
    %v1571 = vadd.f32 %v1566, 1.0
    %v1572 = vadd.f32 %v1568, 1.0
    %v1573 = vrcp.pop %v1569
    %v1574 = vmul.f32 %v1569, %v1573
    %v1575 = vsub.f32 1.0, %v1574
    %v1576 = vmul.f32 %v1573, %v1575
    %v1577 = vadd.f32 %v1573, %v1576
    %vm1578 = vweird.f32 %v1569
    %vm1579 = vweird.f32 %v1573
    %vm1580 = vmor %vm1578, %vm1579
    %v1581 = vsel %vm1580, %v1573, %v1577
    %v1582 = vand.u32 2147483647, %v1569
    %vm1583 = vcmp.eq.f32.partialorder %v1582, 8.507059e+37
    %v1584 = vand.u32 %v1569, 2147483648
    %v1585 = vor.u32 1.1754944e-38, %v1584
    %v1586 = vsel %vm1583, %v1585, %v1581
    %v1587 = vmul.f32 1.0, %v1586
    %v1588 = vrcp.pop %v1570
    %v1589 = vmul.f32 %v1570, %v1588
    %v1590 = vsub.f32 1.0, %v1589
    %v1591 = vmul.f32 %v1588, %v1590
    %v1592 = vadd.f32 %v1588, %v1591
    %vm1593 = vweird.f32 %v1570
    %vm1594 = vweird.f32 %v1588
    %vm1595 = vmor %vm1593, %vm1594
    %v1596 = vsel %vm1595, %v1588, %v1592
    %v1597 = vand.u32 2147483647, %v1570
    %vm1598 = vcmp.eq.f32.partialorder %v1597, 8.507059e+37
    %v1599 = vand.u32 %v1570, 2147483648
    %v1600 = vor.u32 1.1754944e-38, %v1599
    %v1601 = vsel %vm1598, %v1600, %v1596
    %v1602 = vmul.f32 1.0, %v1601
    %v1603 = vrcp.pop %v1571
    %v1604 = vmul.f32 %v1571, %v1603
    %v1605 = vsub.f32 1.0, %v1604
    %v1606 = vmul.f32 %v1603, %v1605
    %v1607 = vadd.f32 %v1603, %v1606
    %vm1608 = vweird.f32 %v1571
    %vm1609 = vweird.f32 %v1603
    %vm1610 = vmor %vm1608, %vm1609
    %v1611 = vsel %vm1610, %v1603, %v1607
    %v1612 = vand.u32 2147483647, %v1571
    %vm1613 = vcmp.eq.f32.partialorder %v1612, 8.507059e+37
    %v1614 = vand.u32 %v1571, 2147483648
    %v1615 = vor.u32 1.1754944e-38, %v1614
    %v1616 = vsel %vm1613, %v1615, %v1611
    %v1617 = vmul.f32 1.0, %v1616
    %v1618 = vrcp.pop %v1572
    %v1619 = vmul.f32 %v1572, %v1618
    %v1620 = vsub.f32 1.0, %v1619
    %v1621 = vmul.f32 %v1618, %v1620
    %v1622 = vadd.f32 %v1618, %v1621
    %vm1623 = vweird.f32 %v1572
    %vm1624 = vweird.f32 %v1618
    %vm1625 = vmor %vm1623, %vm1624
    %v1626 = vsel %vm1625, %v1618, %v1622
    %v1627 = vand.u32 2147483647, %v1572
    %vm1628 = vcmp.eq.f32.partialorder %v1627, 8.507059e+37
    %v1629 = vand.u32 %v1572, 2147483648
    %v1630 = vor.u32 1.1754944e-38, %v1629
    %v1631 = vsel %vm1628, %v1630, %v1626
    %v1632 = vmul.f32 1.0, %v1631
    %v1633 = vtanh.pop %v1410
    %v1634 = vtanh.pop %v1413
    %v1635 = vtanh.pop %v1416
    %v1636 = vtanh.pop %v1419
    %v1637 = vxor.u32 %v1422, 2147483648
    %v1638 = vxor.u32 %v1425, 2147483648
    %v1639 = vxor.u32 %v1428, 2147483648
    %v1640 = vxor.u32 %v1431, 2147483648
    %v1641 = vmul.f32 %v1637, 1.442695
    %v1642 = vpow.pop %v1641
    %v1643 = vmul.f32 %v1638, 1.442695
    %v1644 = vpow.pop %v1643
    %v1645 = vmul.f32 %v1639, 1.442695
    %v1646 = vpow.pop %v1645
    %v1647 = vmul.f32 %v1640, 1.442695
    %v1648 = vpow.pop %v1647
    %v1649 = vadd.f32 %v1642, 1.0
    %v1650 = vadd.f32 %v1644, 1.0
    %v1651 = vadd.f32 %v1646, 1.0
    %v1652 = vadd.f32 %v1648, 1.0
    %v1653 = vrcp.pop %v1649
    %v1654 = vmul.f32 %v1649, %v1653
    %v1655 = vsub.f32 1.0, %v1654
    %v1656 = vmul.f32 %v1653, %v1655
    %v1657 = vadd.f32 %v1653, %v1656
    %vm1658 = vweird.f32 %v1649
    %vm1659 = vweird.f32 %v1653
    %vm1660 = vmor %vm1658, %vm1659
    %v1661 = vsel %vm1660, %v1653, %v1657
    %v1662 = vand.u32 2147483647, %v1649
    %vm1663 = vcmp.eq.f32.partialorder %v1662, 8.507059e+37
    %v1664 = vand.u32 %v1649, 2147483648
    %v1665 = vor.u32 1.1754944e-38, %v1664
    %v1666 = vsel %vm1663, %v1665, %v1661
    %v1667 = vmul.f32 1.0, %v1666
    %v1668 = vrcp.pop %v1650
    %v1669 = vmul.f32 %v1650, %v1668
    %v1670 = vsub.f32 1.0, %v1669
    %v1671 = vmul.f32 %v1668, %v1670
    %v1672 = vadd.f32 %v1668, %v1671
    %vm1673 = vweird.f32 %v1650
    %vm1674 = vweird.f32 %v1668
    %vm1675 = vmor %vm1673, %vm1674
    %v1676 = vsel %vm1675, %v1668, %v1672
    %v1677 = vand.u32 2147483647, %v1650
    %vm1678 = vcmp.eq.f32.partialorder %v1677, 8.507059e+37
    %v1679 = vand.u32 %v1650, 2147483648
    %v1680 = vor.u32 1.1754944e-38, %v1679
    %v1681 = vsel %vm1678, %v1680, %v1676
    %v1682 = vmul.f32 1.0, %v1681
    %v1683 = vrcp.pop %v1651
    %v1684 = vmul.f32 %v1651, %v1683
    %v1685 = vsub.f32 1.0, %v1684
    %v1686 = vmul.f32 %v1683, %v1685
    %v1687 = vadd.f32 %v1683, %v1686
    %vm1688 = vweird.f32 %v1651
    %vm1689 = vweird.f32 %v1683
    %vm1690 = vmor %vm1688, %vm1689
    %v1691 = vsel %vm1690, %v1683, %v1687
    %v1692 = vand.u32 2147483647, %v1651
    %vm1693 = vcmp.eq.f32.partialorder %v1692, 8.507059e+37
    %v1694 = vand.u32 %v1651, 2147483648
    %v1695 = vor.u32 1.1754944e-38, %v1694
    %v1696 = vsel %vm1693, %v1695, %v1691
    %v1697 = vmul.f32 1.0, %v1696
    %v1698 = vrcp.pop %v1652
    %v1699 = vmul.f32 %v1652, %v1698
    %v1700 = vsub.f32 1.0, %v1699
    %v1701 = vmul.f32 %v1698, %v1700
    %v1702 = vadd.f32 %v1698, %v1701
    %vm1703 = vweird.f32 %v1652
    %vm1704 = vweird.f32 %v1698
    %vm1705 = vmor %vm1703, %vm1704
    %v1706 = vsel %vm1705, %v1698, %v1702
    %v1707 = vand.u32 2147483647, %v1652
    %vm1708 = vcmp.eq.f32.partialorder %v1707, 8.507059e+37
    %v1709 = vand.u32 %v1652, 2147483648
    %v1710 = vor.u32 1.1754944e-38, %v1709
    %v1711 = vsel %vm1708, %v1710, %v1706
    %v1712 = vmul.f32 1.0, %v1711
    %v1713 = vmul.f32 %v1587, %v1080
    %v1714 = vmul.f32 %v1602, %v1081
    %v1715 = vmul.f32 %v1617, %v1082
    %v1716 = vmul.f32 %v1632, %v1083
    %v1717 = vmul.f32 %v1511, %v1633
    %v1718 = vmul.f32 %v1526, %v1634
    %v1719 = vmul.f32 %v1541, %v1635
    %v1720 = vmul.f32 %v1556, %v1636
    %v1721 = vadd.f32 %v1713, %v1717
    %v1722 = vadd.f32 %v1714, %v1718
    %v1723 = vadd.f32 %v1715, %v1719
    %v1724 = vadd.f32 %v1716, %v1720
    %v1725 = vtanh.pop %v1721
    %v1726 = vtanh.pop %v1722
    %v1727 = vtanh.pop %v1723
    %v1728 = vtanh.pop %v1724
    %v1729 = vmul.f32 %v1667, %v1725
    %v1730 = vmul.f32 %v1682, %v1726
    %v1731 = vmul.f32 %v1697, %v1727
    %v1732 = vmul.f32 %v1712, %v1728
    %v1733 = vxor.u32 %v1434, 2147483648
    %v1734 = vxor.u32 %v1437, 2147483648
    %v1735 = vxor.u32 %v1440, 2147483648
    %v1736 = vxor.u32 %v1443, 2147483648
    %v1737 = vmul.f32 %v1733, 1.442695
    %v1738 = vpow.pop %v1737
    %v1739 = vmul.f32 %v1734, 1.442695
    %v1740 = vpow.pop %v1739
    %v1741 = vmul.f32 %v1735, 1.442695
    %v1742 = vpow.pop %v1741
    %v1743 = vmul.f32 %v1736, 1.442695
    %v1744 = vpow.pop %v1743
    %v1745 = vadd.f32 %v1738, 1.0
    %v1746 = vadd.f32 %v1740, 1.0
    %v1747 = vadd.f32 %v1742, 1.0
    %v1748 = vadd.f32 %v1744, 1.0
    %v1749 = vrcp.pop %v1745
    %v1750 = vmul.f32 %v1745, %v1749
    %v1751 = vsub.f32 1.0, %v1750
    %v1752 = vmul.f32 %v1749, %v1751
    %v1753 = vadd.f32 %v1749, %v1752
    %vm1754 = vweird.f32 %v1745
    %vm1755 = vweird.f32 %v1749
    %vm1756 = vmor %vm1754, %vm1755
    %v1757 = vsel %vm1756, %v1749, %v1753
    %v1758 = vand.u32 2147483647, %v1745
    %vm1759 = vcmp.eq.f32.partialorder %v1758, 8.507059e+37
    %v1760 = vand.u32 %v1745, 2147483648
    %v1761 = vor.u32 1.1754944e-38, %v1760
    %v1762 = vsel %vm1759, %v1761, %v1757
    %v1763 = vmul.f32 1.0, %v1762
    %v1764 = vrcp.pop %v1746
    %v1765 = vmul.f32 %v1746, %v1764
    %v1766 = vsub.f32 1.0, %v1765
    %v1767 = vmul.f32 %v1764, %v1766
    %v1768 = vadd.f32 %v1764, %v1767
    %vm1769 = vweird.f32 %v1746
    %vm1770 = vweird.f32 %v1764
    %vm1771 = vmor %vm1769, %vm1770
    %v1772 = vsel %vm1771, %v1764, %v1768
    %v1773 = vand.u32 2147483647, %v1746
    %vm1774 = vcmp.eq.f32.partialorder %v1773, 8.507059e+37
    %v1775 = vand.u32 %v1746, 2147483648
    %v1776 = vor.u32 1.1754944e-38, %v1775
    %v1777 = vsel %vm1774, %v1776, %v1772
    %v1778 = vmul.f32 1.0, %v1777
    %v1779 = vrcp.pop %v1747
    %v1780 = vmul.f32 %v1747, %v1779
    %v1781 = vsub.f32 1.0, %v1780
    %v1782 = vmul.f32 %v1779, %v1781
    %v1783 = vadd.f32 %v1779, %v1782
    %vm1784 = vweird.f32 %v1747
    %vm1785 = vweird.f32 %v1779
    %vm1786 = vmor %vm1784, %vm1785
    %v1787 = vsel %vm1786, %v1779, %v1783
    %v1788 = vand.u32 2147483647, %v1747
    %vm1789 = vcmp.eq.f32.partialorder %v1788, 8.507059e+37
    %v1790 = vand.u32 %v1747, 2147483648
    %v1791 = vor.u32 1.1754944e-38, %v1790
    %v1792 = vsel %vm1789, %v1791, %v1787
    %v1793 = vmul.f32 1.0, %v1792
    %v1794 = vrcp.pop %v1748
    %v1795 = vmul.f32 %v1748, %v1794
    %v1796 = vsub.f32 1.0, %v1795
    %v1797 = vmul.f32 %v1794, %v1796
    %v1798 = vadd.f32 %v1794, %v1797
    %vm1799 = vweird.f32 %v1748
    %vm1800 = vweird.f32 %v1794
    %vm1801 = vmor %vm1799, %vm1800
    %v1802 = vsel %vm1801, %v1794, %v1798
    %v1803 = vand.u32 2147483647, %v1748
    %vm1804 = vcmp.eq.f32.partialorder %v1803, 8.507059e+37
    %v1805 = vand.u32 %v1748, 2147483648
    %v1806 = vor.u32 1.1754944e-38, %v1805
    %v1807 = vsel %vm1804, %v1806, %v1802
    %v1808 = vmul.f32 1.0, %v1807
    %v1809 = vxor.u32 %v1446, 2147483648
    %v1810 = vxor.u32 %v1449, 2147483648
    %v1811 = vxor.u32 %v1452, 2147483648
    %v1812 = vxor.u32 %v1455, 2147483648
    %v1813 = vmul.f32 %v1809, 1.442695
    %v1814 = vpow.pop %v1813
    %v1815 = vmul.f32 %v1810, 1.442695
    %v1816 = vpow.pop %v1815
    %v1817 = vmul.f32 %v1811, 1.442695
    %v1818 = vpow.pop %v1817
    %v1819 = vmul.f32 %v1812, 1.442695
    %v1820 = vpow.pop %v1819
    %v1821 = vadd.f32 %v1814, 1.0
    %v1822 = vadd.f32 %v1816, 1.0
    %v1823 = vadd.f32 %v1818, 1.0
    %v1824 = vadd.f32 %v1820, 1.0
    %v1825 = vrcp.pop %v1821
    %v1826 = vmul.f32 %v1821, %v1825
    %v1827 = vsub.f32 1.0, %v1826
    %v1828 = vmul.f32 %v1825, %v1827
    %v1829 = vadd.f32 %v1825, %v1828
    %vm1830 = vweird.f32 %v1821
    %vm1831 = vweird.f32 %v1825
    %vm1832 = vmor %vm1830, %vm1831
    %v1833 = vsel %vm1832, %v1825, %v1829
    %v1834 = vand.u32 2147483647, %v1821
    %vm1835 = vcmp.eq.f32.partialorder %v1834, 8.507059e+37
    %v1836 = vand.u32 %v1821, 2147483648
    %v1837 = vor.u32 1.1754944e-38, %v1836
    %v1838 = vsel %vm1835, %v1837, %v1833
    %v1839 = vmul.f32 1.0, %v1838
    %v1840 = vrcp.pop %v1822
    %v1841 = vmul.f32 %v1822, %v1840
    %v1842 = vsub.f32 1.0, %v1841
    %v1843 = vmul.f32 %v1840, %v1842
    %v1844 = vadd.f32 %v1840, %v1843
    %vm1845 = vweird.f32 %v1822
    %vm1846 = vweird.f32 %v1840
    %vm1847 = vmor %vm1845, %vm1846
    %v1848 = vsel %vm1847, %v1840, %v1844
    %v1849 = vand.u32 2147483647, %v1822
    %vm1850 = vcmp.eq.f32.partialorder %v1849, 8.507059e+37
    %v1851 = vand.u32 %v1822, 2147483648
    %v1852 = vor.u32 1.1754944e-38, %v1851
    %v1853 = vsel %vm1850, %v1852, %v1848
    %v1854 = vmul.f32 1.0, %v1853
    %v1855 = vrcp.pop %v1823
    %v1856 = vmul.f32 %v1823, %v1855
    %v1857 = vsub.f32 1.0, %v1856
    %v1858 = vmul.f32 %v1855, %v1857
    %v1859 = vadd.f32 %v1855, %v1858
    %vm1860 = vweird.f32 %v1823
    %vm1861 = vweird.f32 %v1855
    %vm1862 = vmor %vm1860, %vm1861
    %v1863 = vsel %vm1862, %v1855, %v1859
    %v1864 = vand.u32 2147483647, %v1823
    %vm1865 = vcmp.eq.f32.partialorder %v1864, 8.507059e+37
    %v1866 = vand.u32 %v1823, 2147483648
    %v1867 = vor.u32 1.1754944e-38, %v1866
    %v1868 = vsel %vm1865, %v1867, %v1863
    %v1869 = vmul.f32 1.0, %v1868
    %v1870 = vrcp.pop %v1824
    %v1871 = vmul.f32 %v1824, %v1870
    %v1872 = vsub.f32 1.0, %v1871
    %v1873 = vmul.f32 %v1870, %v1872
    %v1874 = vadd.f32 %v1870, %v1873
    %vm1875 = vweird.f32 %v1824
    %vm1876 = vweird.f32 %v1870
    %vm1877 = vmor %vm1875, %vm1876
    %v1878 = vsel %vm1877, %v1870, %v1874
    %v1879 = vand.u32 2147483647, %v1824
    %vm1880 = vcmp.eq.f32.partialorder %v1879, 8.507059e+37
    %v1881 = vand.u32 %v1824, 2147483648
    %v1882 = vor.u32 1.1754944e-38, %v1881
    %v1883 = vsel %vm1880, %v1882, %v1878
    %v1884 = vmul.f32 1.0, %v1883
    %v1885 = vtanh.pop %v1458
    %v1886 = vtanh.pop %v1461
    %v1887 = vtanh.pop %v1464
    %v1888 = vtanh.pop %v1467
    %v1889 = vxor.u32 %v1470, 2147483648
    %v1890 = vxor.u32 %v1473, 2147483648
    %v1891 = vxor.u32 %v1476, 2147483648
    %v1892 = vxor.u32 %v1479, 2147483648
    %v1893 = vmul.f32 %v1889, 1.442695
    %v1894 = vpow.pop %v1893
    %v1895 = vmul.f32 %v1890, 1.442695
    %v1896 = vpow.pop %v1895
    %v1897 = vmul.f32 %v1891, 1.442695
    %v1898 = vpow.pop %v1897
    %v1899 = vmul.f32 %v1892, 1.442695
    %v1900 = vpow.pop %v1899
    %v1901 = vadd.f32 %v1894, 1.0
    %v1902 = vadd.f32 %v1896, 1.0
    %v1903 = vadd.f32 %v1898, 1.0
    %v1904 = vadd.f32 %v1900, 1.0
    %v1905 = vrcp.pop %v1901
    %v1906 = vmul.f32 %v1901, %v1905
    %v1907 = vsub.f32 1.0, %v1906
    %v1908 = vmul.f32 %v1905, %v1907
    %v1909 = vadd.f32 %v1905, %v1908
    %vm1910 = vweird.f32 %v1901
    %vm1911 = vweird.f32 %v1905
    %vm1912 = vmor %vm1910, %vm1911
    %v1913 = vsel %vm1912, %v1905, %v1909
    %v1914 = vand.u32 2147483647, %v1901
    %vm1915 = vcmp.eq.f32.partialorder %v1914, 8.507059e+37
    %v1916 = vand.u32 %v1901, 2147483648
    %v1917 = vor.u32 1.1754944e-38, %v1916
    %v1918 = vsel %vm1915, %v1917, %v1913
    %v1919 = vmul.f32 1.0, %v1918
    %v1920 = vrcp.pop %v1902
    %v1921 = vmul.f32 %v1902, %v1920
    %v1922 = vsub.f32 1.0, %v1921
    %v1923 = vmul.f32 %v1920, %v1922
    %v1924 = vadd.f32 %v1920, %v1923
    %vm1925 = vweird.f32 %v1902
    %vm1926 = vweird.f32 %v1920
    %vm1927 = vmor %vm1925, %vm1926
    %v1928 = vsel %vm1927, %v1920, %v1924
    %v1929 = vand.u32 2147483647, %v1902
    %vm1930 = vcmp.eq.f32.partialorder %v1929, 8.507059e+37
    %v1931 = vand.u32 %v1902, 2147483648
    %v1932 = vor.u32 1.1754944e-38, %v1931
    %v1933 = vsel %vm1930, %v1932, %v1928
    %v1934 = vmul.f32 1.0, %v1933
    %v1935 = vrcp.pop %v1903
    %v1936 = vmul.f32 %v1903, %v1935
    %v1937 = vsub.f32 1.0, %v1936
    %v1938 = vmul.f32 %v1935, %v1937
    %v1939 = vadd.f32 %v1935, %v1938
    %vm1940 = vweird.f32 %v1903
    %vm1941 = vweird.f32 %v1935
    %vm1942 = vmor %vm1940, %vm1941
    %v1943 = vsel %vm1942, %v1935, %v1939
    %v1944 = vand.u32 2147483647, %v1903
    %vm1945 = vcmp.eq.f32.partialorder %v1944, 8.507059e+37
    %v1946 = vand.u32 %v1903, 2147483648
    %v1947 = vor.u32 1.1754944e-38, %v1946
    %v1948 = vsel %vm1945, %v1947, %v1943
    %v1949 = vmul.f32 1.0, %v1948
    %v1950 = vrcp.pop %v1904
    %v1951 = vmul.f32 %v1904, %v1950
    %v1952 = vsub.f32 1.0, %v1951
    %v1953 = vmul.f32 %v1950, %v1952
    %v1954 = vadd.f32 %v1950, %v1953
    %vm1955 = vweird.f32 %v1904
    %vm1956 = vweird.f32 %v1950
    %vm1957 = vmor %vm1955, %vm1956
    %v1958 = vsel %vm1957, %v1950, %v1954
    %v1959 = vand.u32 2147483647, %v1904
    %vm1960 = vcmp.eq.f32.partialorder %v1959, 8.507059e+37
    %v1961 = vand.u32 %v1904, 2147483648
    %v1962 = vor.u32 1.1754944e-38, %v1961
    %v1963 = vsel %vm1960, %v1962, %v1958
    %v1964 = vmul.f32 1.0, %v1963
    %v1965 = vmul.f32 %v1839, %v1332
    %v1966 = vmul.f32 %v1854, %v1333
    %v1967 = vmul.f32 %v1869, %v1334
    %v1968 = vmul.f32 %v1884, %v1335
    %v1969 = vmul.f32 %v1763, %v1885
    %v1970 = vmul.f32 %v1778, %v1886
    %v1971 = vmul.f32 %v1793, %v1887
    %v1972 = vmul.f32 %v1808, %v1888
    %v1973 = vadd.f32 %v1965, %v1969
    %v1974 = vadd.f32 %v1966, %v1970
    %v1975 = vadd.f32 %v1967, %v1971
    %v1976 = vadd.f32 %v1968, %v1972
    %v1977 = vtanh.pop %v1973
    %v1978 = vtanh.pop %v1974
    %v1979 = vtanh.pop %v1975
    %v1980 = vtanh.pop %v1976
    %v1981 = vmul.f32 %v1919, %v1977
    %v1982 = vmul.f32 %v1934, %v1978
    %v1983 = vmul.f32 %v1949, %v1979
    %v1984 = vmul.f32 %v1964, %v1980
    %v1985 = vmul.f32 %v1981, %v254
    %v1986 = vmul.f32 %v1982, %v259
    %v1987 = vmul.f32 %v1983, %v264
    %v1988 = vmul.f32 %v1984, %v269
    %v1989 = vsel %vm1348, %v1985, 0.0
    %v1990 = vsel %vm1348, %v1986, 0.0
    %v1991 = vadd.f32 %v1989, %v1990
    %v1992 = vsel %vm1348, %v1987, 0.0
    %v1993 = vadd.f32 %v1991, %v1992
    %v1994 = vsel %vm1348, %v1988, 0.0
    %v1995 = vadd.f32 %v1993, %v1994
    %v1996 = vrot.slane %v1995, 4
    %v1997 = vadd.f32 %v1995, %v1996
    %v1998 = vrot.slane %v1997, 2
    %v1999 = vadd.f32 %v1997, %v1998
    %v2000 = vrot.slane %v1999, 1
    %v2001 = vadd.f32 %v1999, %v2000
    %v2002 = vadd.f32 %v2001, %v277
    %v2003 = vmax.f32 %v2002, 0.0
    %2004 = vst.msk [vmem:[#allocation3 + $0x1] sm:$0x1] %vm1364, %v2003
    %s2005 = scalar_lea.vmem %s0, 24
    %v2006 = vld [vmem:[%s2005] sm:$0xff]
    %2007 = vmatpush.msra.mxu0 0.0
    %2008 = vmatpush.msra.mxu0 0.0
    %2009 = vmatpush.msra.mxu0 0.0
    %2010 = vmatpush.msra.mxu0 0.0
    %2011 = vmatpush.msra.mxu0 0.0
    %2012 = vmatpush.msra.mxu0 0.0
    %2013 = vmatpush.msra.mxu0 0.0
    %2014 = vmatpush.msra.mxu0 %v1984
    %2015 = vmatpush.msra.mxu0 %v1983
    %2016 = vmatpush.msra.mxu0 %v1982
    %2017 = vmatpush.msra.mxu0 %v1981
    %2018 = vmatpush.msra.mxu0 %v1732
    %2019 = vmatpush.msra.mxu0 %v1731
    %2020 = vmatpush.msra.mxu0 %v1730
    %2021 = vmatpush.msra.mxu0 %v1729
    %2022 = vmatpush.msra.mxu0 %v2006
    %2023 = vmatmul.f32.gmra.mxu0 %v281
    %v2024 = vpop.f32.mrf.mxu0
    %v2025 = vadd.f32 %v90, %v2024
    %2026 = vmatmul.f32.gmra.mxu0 %v284
    %v2027 = vpop.f32.mrf.mxu0
    %v2028 = vadd.f32 %v95, %v2027
    %2029 = vmatmul.f32.gmra.mxu0 %v287
    %v2030 = vpop.f32.mrf.mxu0
    %v2031 = vadd.f32 %v100, %v2030
    %2032 = vmatmul.f32.gmra.mxu0 %v290
    %v2033 = vpop.f32.mrf.mxu0
    %v2034 = vadd.f32 %v105, %v2033
    %2035 = vmatmul.f32.gmra.mxu0 %v293
    %v2036 = vpop.f32.mrf.mxu0
    %v2037 = vadd.f32 %v110, %v2036
    %2038 = vmatmul.f32.gmra.mxu0 %v296
    %v2039 = vpop.f32.mrf.mxu0
    %v2040 = vadd.f32 %v115, %v2039
    %2041 = vmatmul.f32.gmra.mxu0 %v299
    %v2042 = vpop.f32.mrf.mxu0
    %v2043 = vadd.f32 %v120, %v2042
    %2044 = vmatmul.f32.gmra.mxu0 %v302
    %v2045 = vpop.f32.mrf.mxu0
    %v2046 = vadd.f32 %v125, %v2045
    %2047 = vmatmul.f32.gmra.mxu0 %v305
    %v2048 = vpop.f32.mrf.mxu0
    %v2049 = vadd.f32 %v130, %v2048
    %2050 = vmatmul.f32.gmra.mxu0 %v308
    %v2051 = vpop.f32.mrf.mxu0
    %v2052 = vadd.f32 %v135, %v2051
    %2053 = vmatmul.f32.gmra.mxu0 %v311
    %v2054 = vpop.f32.mrf.mxu0
    %v2055 = vadd.f32 %v140, %v2054
    %2056 = vmatmul.f32.gmra.mxu0 %v314
    %v2057 = vpop.f32.mrf.mxu0
    %v2058 = vadd.f32 %v145, %v2057
    %2059 = vmatmul.f32.gmra.mxu0 %v317
    %v2060 = vpop.f32.mrf.mxu0
    %v2061 = vadd.f32 %v150, %v2060
    %2062 = vmatmul.f32.gmra.mxu0 %v320
    %v2063 = vpop.f32.mrf.mxu0
    %v2064 = vadd.f32 %v155, %v2063
    %2065 = vmatmul.f32.gmra.mxu0 %v323
    %v2066 = vpop.f32.mrf.mxu0
    %v2067 = vadd.f32 %v160, %v2066
    %2068 = vmatmul.f32.gmra.mxu0 %v326
    %v2069 = vpop.f32.mrf.mxu0
    %v2070 = vadd.f32 %v165, %v2069
    %2071 = vmatmul.f32.gmra.mxu0 %v329
    %v2072 = vpop.f32.mrf.mxu0
    %v2073 = vadd.f32 %v170, %v2072
    %2074 = vmatmul.f32.gmra.mxu0 %v332
    %v2075 = vpop.f32.mrf.mxu0
    %v2076 = vadd.f32 %v175, %v2075
    %2077 = vmatmul.f32.gmra.mxu0 %v335
    %v2078 = vpop.f32.mrf.mxu0
    %v2079 = vadd.f32 %v180, %v2078
    %2080 = vmatmul.f32.gmra.mxu0 %v338
    %v2081 = vpop.f32.mrf.mxu0
    %v2082 = vadd.f32 %v185, %v2081
    %2083 = vmatmul.f32.gmra.mxu0 %v341
    %v2084 = vpop.f32.mrf.mxu0
    %v2085 = vadd.f32 %v190, %v2084
    %2086 = vmatmul.f32.gmra.mxu0 %v344
    %v2087 = vpop.f32.mrf.mxu0
    %v2088 = vadd.f32 %v195, %v2087
    %2089 = vmatmul.f32.gmra.mxu0 %v347
    %v2090 = vpop.f32.mrf.mxu0
    %v2091 = vadd.f32 %v200, %v2090
    %2092 = vmatmul.f32.gmra.mxu0 %v350
    %v2093 = vpop.f32.mrf.mxu0
    %v2094 = vadd.f32 %v205, %v2093
    %2095 = vmatmul.f32.gmra.mxu0 %v353
    %v2096 = vpop.f32.mrf.mxu0
    %v2097 = vadd.f32 %v210, %v2096
    %2098 = vmatmul.f32.gmra.mxu0 %v356
    %v2099 = vpop.f32.mrf.mxu0
    %v2100 = vadd.f32 %v215, %v2099
    %2101 = vmatmul.f32.gmra.mxu0 %v359
    %v2102 = vpop.f32.mrf.mxu0
    %v2103 = vadd.f32 %v220, %v2102
    %2104 = vmatmul.f32.gmra.mxu0 %v362
    %v2105 = vpop.f32.mrf.mxu0
    %v2106 = vadd.f32 %v225, %v2105
    %2107 = vmatmul.f32.gmra.mxu0 %v365
    %v2108 = vpop.f32.mrf.mxu0
    %v2109 = vadd.f32 %v230, %v2108
    %2110 = vmatmul.f32.gmra.mxu0 %v368
    %v2111 = vpop.f32.mrf.mxu0
    %v2112 = vadd.f32 %v235, %v2111
    %2113 = vmatmul.f32.gmra.mxu0 %v371
    %v2114 = vpop.f32.mrf.mxu0
    %v2115 = vadd.f32 %v240, %v2114
    %2116 = vmatmul.f32.gmra.mxu0 %v374
    %v2117 = vpop.f32.mrf.mxu0
    %v2118 = vadd.f32 %v245, %v2117
    %2119 = vdwg.mxu0
    %v2120 = vxor.u32 %v2025, 2147483648
    %v2121 = vxor.u32 %v2028, 2147483648
    %v2122 = vxor.u32 %v2031, 2147483648
    %v2123 = vxor.u32 %v2034, 2147483648
    %v2124 = vmul.f32 %v2120, 1.442695
    %v2125 = vpow.pop %v2124
    %v2126 = vmul.f32 %v2121, 1.442695
    %v2127 = vpow.pop %v2126
    %v2128 = vmul.f32 %v2122, 1.442695
    %v2129 = vpow.pop %v2128
    %v2130 = vmul.f32 %v2123, 1.442695
    %v2131 = vpow.pop %v2130
    %v2132 = vadd.f32 %v2125, 1.0
    %v2133 = vadd.f32 %v2127, 1.0
    %v2134 = vadd.f32 %v2129, 1.0
    %v2135 = vadd.f32 %v2131, 1.0
    %v2136 = vrcp.pop %v2132
    %v2137 = vmul.f32 %v2132, %v2136
    %v2138 = vsub.f32 1.0, %v2137
    %v2139 = vmul.f32 %v2136, %v2138
    %v2140 = vadd.f32 %v2136, %v2139
    %vm2141 = vweird.f32 %v2132
    %vm2142 = vweird.f32 %v2136
    %vm2143 = vmor %vm2141, %vm2142
    %v2144 = vsel %vm2143, %v2136, %v2140
    %v2145 = vand.u32 2147483647, %v2132
    %vm2146 = vcmp.eq.f32.partialorder %v2145, 8.507059e+37
    %v2147 = vand.u32 %v2132, 2147483648
    %v2148 = vor.u32 1.1754944e-38, %v2147
    %v2149 = vsel %vm2146, %v2148, %v2144
    %v2150 = vmul.f32 1.0, %v2149
    %v2151 = vrcp.pop %v2133
    %v2152 = vmul.f32 %v2133, %v2151
    %v2153 = vsub.f32 1.0, %v2152
    %v2154 = vmul.f32 %v2151, %v2153
    %v2155 = vadd.f32 %v2151, %v2154
    %vm2156 = vweird.f32 %v2133
    %vm2157 = vweird.f32 %v2151
    %vm2158 = vmor %vm2156, %vm2157
    %v2159 = vsel %vm2158, %v2151, %v2155
    %v2160 = vand.u32 2147483647, %v2133
    %vm2161 = vcmp.eq.f32.partialorder %v2160, 8.507059e+37
    %v2162 = vand.u32 %v2133, 2147483648
    %v2163 = vor.u32 1.1754944e-38, %v2162
    %v2164 = vsel %vm2161, %v2163, %v2159
    %v2165 = vmul.f32 1.0, %v2164
    %v2166 = vrcp.pop %v2134
    %v2167 = vmul.f32 %v2134, %v2166
    %v2168 = vsub.f32 1.0, %v2167
    %v2169 = vmul.f32 %v2166, %v2168
    %v2170 = vadd.f32 %v2166, %v2169
    %vm2171 = vweird.f32 %v2134
    %vm2172 = vweird.f32 %v2166
    %vm2173 = vmor %vm2171, %vm2172
    %v2174 = vsel %vm2173, %v2166, %v2170
    %v2175 = vand.u32 2147483647, %v2134
    %vm2176 = vcmp.eq.f32.partialorder %v2175, 8.507059e+37
    %v2177 = vand.u32 %v2134, 2147483648
    %v2178 = vor.u32 1.1754944e-38, %v2177
    %v2179 = vsel %vm2176, %v2178, %v2174
    %v2180 = vmul.f32 1.0, %v2179
    %v2181 = vrcp.pop %v2135
    %v2182 = vmul.f32 %v2135, %v2181
    %v2183 = vsub.f32 1.0, %v2182
    %v2184 = vmul.f32 %v2181, %v2183
    %v2185 = vadd.f32 %v2181, %v2184
    %vm2186 = vweird.f32 %v2135
    %vm2187 = vweird.f32 %v2181
    %vm2188 = vmor %vm2186, %vm2187
    %v2189 = vsel %vm2188, %v2181, %v2185
    %v2190 = vand.u32 2147483647, %v2135
    %vm2191 = vcmp.eq.f32.partialorder %v2190, 8.507059e+37
    %v2192 = vand.u32 %v2135, 2147483648
    %v2193 = vor.u32 1.1754944e-38, %v2192
    %v2194 = vsel %vm2191, %v2193, %v2189
    %v2195 = vmul.f32 1.0, %v2194
    %v2196 = vxor.u32 %v2037, 2147483648
    %v2197 = vxor.u32 %v2040, 2147483648
    %v2198 = vxor.u32 %v2043, 2147483648
    %v2199 = vxor.u32 %v2046, 2147483648
    %v2200 = vmul.f32 %v2196, 1.442695
    %v2201 = vpow.pop %v2200
    %v2202 = vmul.f32 %v2197, 1.442695
    %v2203 = vpow.pop %v2202
    %v2204 = vmul.f32 %v2198, 1.442695
    %v2205 = vpow.pop %v2204
    %v2206 = vmul.f32 %v2199, 1.442695
    %v2207 = vpow.pop %v2206
    %v2208 = vadd.f32 %v2201, 1.0
    %v2209 = vadd.f32 %v2203, 1.0
    %v2210 = vadd.f32 %v2205, 1.0
    %v2211 = vadd.f32 %v2207, 1.0
    %v2212 = vrcp.pop %v2208
    %v2213 = vmul.f32 %v2208, %v2212
    %v2214 = vsub.f32 1.0, %v2213
    %v2215 = vmul.f32 %v2212, %v2214
    %v2216 = vadd.f32 %v2212, %v2215
    %vm2217 = vweird.f32 %v2208
    %vm2218 = vweird.f32 %v2212
    %vm2219 = vmor %vm2217, %vm2218
    %v2220 = vsel %vm2219, %v2212, %v2216
    %v2221 = vand.u32 2147483647, %v2208
    %vm2222 = vcmp.eq.f32.partialorder %v2221, 8.507059e+37
    %v2223 = vand.u32 %v2208, 2147483648
    %v2224 = vor.u32 1.1754944e-38, %v2223
    %v2225 = vsel %vm2222, %v2224, %v2220
    %v2226 = vmul.f32 1.0, %v2225
    %v2227 = vrcp.pop %v2209
    %v2228 = vmul.f32 %v2209, %v2227
    %v2229 = vsub.f32 1.0, %v2228
    %v2230 = vmul.f32 %v2227, %v2229
    %v2231 = vadd.f32 %v2227, %v2230
    %vm2232 = vweird.f32 %v2209
    %vm2233 = vweird.f32 %v2227
    %vm2234 = vmor %vm2232, %vm2233
    %v2235 = vsel %vm2234, %v2227, %v2231
    %v2236 = vand.u32 2147483647, %v2209
    %vm2237 = vcmp.eq.f32.partialorder %v2236, 8.507059e+37
    %v2238 = vand.u32 %v2209, 2147483648
    %v2239 = vor.u32 1.1754944e-38, %v2238
    %v2240 = vsel %vm2237, %v2239, %v2235
    %v2241 = vmul.f32 1.0, %v2240
    %v2242 = vrcp.pop %v2210
    %v2243 = vmul.f32 %v2210, %v2242
    %v2244 = vsub.f32 1.0, %v2243
    %v2245 = vmul.f32 %v2242, %v2244
    %v2246 = vadd.f32 %v2242, %v2245
    %vm2247 = vweird.f32 %v2210
    %vm2248 = vweird.f32 %v2242
    %vm2249 = vmor %vm2247, %vm2248
    %v2250 = vsel %vm2249, %v2242, %v2246
    %v2251 = vand.u32 2147483647, %v2210
    %vm2252 = vcmp.eq.f32.partialorder %v2251, 8.507059e+37
    %v2253 = vand.u32 %v2210, 2147483648
    %v2254 = vor.u32 1.1754944e-38, %v2253
    %v2255 = vsel %vm2252, %v2254, %v2250
    %v2256 = vmul.f32 1.0, %v2255
    %v2257 = vrcp.pop %v2211
    %v2258 = vmul.f32 %v2211, %v2257
    %v2259 = vsub.f32 1.0, %v2258
    %v2260 = vmul.f32 %v2257, %v2259
    %v2261 = vadd.f32 %v2257, %v2260
    %vm2262 = vweird.f32 %v2211
    %vm2263 = vweird.f32 %v2257
    %vm2264 = vmor %vm2262, %vm2263
    %v2265 = vsel %vm2264, %v2257, %v2261
    %v2266 = vand.u32 2147483647, %v2211
    %vm2267 = vcmp.eq.f32.partialorder %v2266, 8.507059e+37
    %v2268 = vand.u32 %v2211, 2147483648
    %v2269 = vor.u32 1.1754944e-38, %v2268
    %v2270 = vsel %vm2267, %v2269, %v2265
    %v2271 = vmul.f32 1.0, %v2270
    %v2272 = vtanh.pop %v2049
    %v2273 = vtanh.pop %v2052
    %v2274 = vtanh.pop %v2055
    %v2275 = vtanh.pop %v2058
    %v2276 = vxor.u32 %v2061, 2147483648
    %v2277 = vxor.u32 %v2064, 2147483648
    %v2278 = vxor.u32 %v2067, 2147483648
    %v2279 = vxor.u32 %v2070, 2147483648
    %v2280 = vmul.f32 %v2276, 1.442695
    %v2281 = vpow.pop %v2280
    %v2282 = vmul.f32 %v2277, 1.442695
    %v2283 = vpow.pop %v2282
    %v2284 = vmul.f32 %v2278, 1.442695
    %v2285 = vpow.pop %v2284
    %v2286 = vmul.f32 %v2279, 1.442695
    %v2287 = vpow.pop %v2286
    %v2288 = vadd.f32 %v2281, 1.0
    %v2289 = vadd.f32 %v2283, 1.0
    %v2290 = vadd.f32 %v2285, 1.0
    %v2291 = vadd.f32 %v2287, 1.0
    %v2292 = vrcp.pop %v2288
    %v2293 = vmul.f32 %v2288, %v2292
    %v2294 = vsub.f32 1.0, %v2293
    %v2295 = vmul.f32 %v2292, %v2294
    %v2296 = vadd.f32 %v2292, %v2295
    %vm2297 = vweird.f32 %v2288
    %vm2298 = vweird.f32 %v2292
    %vm2299 = vmor %vm2297, %vm2298
    %v2300 = vsel %vm2299, %v2292, %v2296
    %v2301 = vand.u32 2147483647, %v2288
    %vm2302 = vcmp.eq.f32.partialorder %v2301, 8.507059e+37
    %v2303 = vand.u32 %v2288, 2147483648
    %v2304 = vor.u32 1.1754944e-38, %v2303
    %v2305 = vsel %vm2302, %v2304, %v2300
    %v2306 = vmul.f32 1.0, %v2305
    %v2307 = vrcp.pop %v2289
    %v2308 = vmul.f32 %v2289, %v2307
    %v2309 = vsub.f32 1.0, %v2308
    %v2310 = vmul.f32 %v2307, %v2309
    %v2311 = vadd.f32 %v2307, %v2310
    %vm2312 = vweird.f32 %v2289
    %vm2313 = vweird.f32 %v2307
    %vm2314 = vmor %vm2312, %vm2313
    %v2315 = vsel %vm2314, %v2307, %v2311
    %v2316 = vand.u32 2147483647, %v2289
    %vm2317 = vcmp.eq.f32.partialorder %v2316, 8.507059e+37
    %v2318 = vand.u32 %v2289, 2147483648
    %v2319 = vor.u32 1.1754944e-38, %v2318
    %v2320 = vsel %vm2317, %v2319, %v2315
    %v2321 = vmul.f32 1.0, %v2320
    %v2322 = vrcp.pop %v2290
    %v2323 = vmul.f32 %v2290, %v2322
    %v2324 = vsub.f32 1.0, %v2323
    %v2325 = vmul.f32 %v2322, %v2324
    %v2326 = vadd.f32 %v2322, %v2325
    %vm2327 = vweird.f32 %v2290
    %vm2328 = vweird.f32 %v2322
    %vm2329 = vmor %vm2327, %vm2328
    %v2330 = vsel %vm2329, %v2322, %v2326
    %v2331 = vand.u32 2147483647, %v2290
    %vm2332 = vcmp.eq.f32.partialorder %v2331, 8.507059e+37
    %v2333 = vand.u32 %v2290, 2147483648
    %v2334 = vor.u32 1.1754944e-38, %v2333
    %v2335 = vsel %vm2332, %v2334, %v2330
    %v2336 = vmul.f32 1.0, %v2335
    %v2337 = vrcp.pop %v2291
    %v2338 = vmul.f32 %v2291, %v2337
    %v2339 = vsub.f32 1.0, %v2338
    %v2340 = vmul.f32 %v2337, %v2339
    %v2341 = vadd.f32 %v2337, %v2340
    %vm2342 = vweird.f32 %v2291
    %vm2343 = vweird.f32 %v2337
    %vm2344 = vmor %vm2342, %vm2343
    %v2345 = vsel %vm2344, %v2337, %v2341
    %v2346 = vand.u32 2147483647, %v2291
    %vm2347 = vcmp.eq.f32.partialorder %v2346, 8.507059e+37
    %v2348 = vand.u32 %v2291, 2147483648
    %v2349 = vor.u32 1.1754944e-38, %v2348
    %v2350 = vsel %vm2347, %v2349, %v2345
    %v2351 = vmul.f32 1.0, %v2350
    %v2352 = vmul.f32 %v2226, %v1721
    %v2353 = vmul.f32 %v2241, %v1722
    %v2354 = vmul.f32 %v2256, %v1723
    %v2355 = vmul.f32 %v2271, %v1724
    %v2356 = vmul.f32 %v2150, %v2272
    %v2357 = vmul.f32 %v2165, %v2273
    %v2358 = vmul.f32 %v2180, %v2274
    %v2359 = vmul.f32 %v2195, %v2275
    %v2360 = vadd.f32 %v2352, %v2356
    %v2361 = vadd.f32 %v2353, %v2357
    %v2362 = vadd.f32 %v2354, %v2358
    %v2363 = vadd.f32 %v2355, %v2359
    %v2364 = vtanh.pop %v2360
    %v2365 = vtanh.pop %v2361
    %v2366 = vtanh.pop %v2362
    %v2367 = vtanh.pop %v2363
    %v2368 = vmul.f32 %v2306, %v2364
    %v2369 = vmul.f32 %v2321, %v2365
    %v2370 = vmul.f32 %v2336, %v2366
    %v2371 = vmul.f32 %v2351, %v2367
    %v2372 = vxor.u32 %v2073, 2147483648
    %v2373 = vxor.u32 %v2076, 2147483648
    %v2374 = vxor.u32 %v2079, 2147483648
    %v2375 = vxor.u32 %v2082, 2147483648
    %v2376 = vmul.f32 %v2372, 1.442695
    %v2377 = vpow.pop %v2376
    %v2378 = vmul.f32 %v2373, 1.442695
    %v2379 = vpow.pop %v2378
    %v2380 = vmul.f32 %v2374, 1.442695
    %v2381 = vpow.pop %v2380
    %v2382 = vmul.f32 %v2375, 1.442695
    %v2383 = vpow.pop %v2382
    %v2384 = vadd.f32 %v2377, 1.0
    %v2385 = vadd.f32 %v2379, 1.0
    %v2386 = vadd.f32 %v2381, 1.0
    %v2387 = vadd.f32 %v2383, 1.0
    %v2388 = vrcp.pop %v2384
    %v2389 = vmul.f32 %v2384, %v2388
    %v2390 = vsub.f32 1.0, %v2389
    %v2391 = vmul.f32 %v2388, %v2390
    %v2392 = vadd.f32 %v2388, %v2391
    %vm2393 = vweird.f32 %v2384
    %vm2394 = vweird.f32 %v2388
    %vm2395 = vmor %vm2393, %vm2394
    %v2396 = vsel %vm2395, %v2388, %v2392
    %v2397 = vand.u32 2147483647, %v2384
    %vm2398 = vcmp.eq.f32.partialorder %v2397, 8.507059e+37
    %v2399 = vand.u32 %v2384, 2147483648
    %v2400 = vor.u32 1.1754944e-38, %v2399
    %v2401 = vsel %vm2398, %v2400, %v2396
    %v2402 = vmul.f32 1.0, %v2401
    %v2403 = vrcp.pop %v2385
    %v2404 = vmul.f32 %v2385, %v2403
    %v2405 = vsub.f32 1.0, %v2404
    %v2406 = vmul.f32 %v2403, %v2405
    %v2407 = vadd.f32 %v2403, %v2406
    %vm2408 = vweird.f32 %v2385
    %vm2409 = vweird.f32 %v2403
    %vm2410 = vmor %vm2408, %vm2409
    %v2411 = vsel %vm2410, %v2403, %v2407
    %v2412 = vand.u32 2147483647, %v2385
    %vm2413 = vcmp.eq.f32.partialorder %v2412, 8.507059e+37
    %v2414 = vand.u32 %v2385, 2147483648
    %v2415 = vor.u32 1.1754944e-38, %v2414
    %v2416 = vsel %vm2413, %v2415, %v2411
    %v2417 = vmul.f32 1.0, %v2416
    %v2418 = vrcp.pop %v2386
    %v2419 = vmul.f32 %v2386, %v2418
    %v2420 = vsub.f32 1.0, %v2419
    %v2421 = vmul.f32 %v2418, %v2420
    %v2422 = vadd.f32 %v2418, %v2421
    %vm2423 = vweird.f32 %v2386
    %vm2424 = vweird.f32 %v2418
    %vm2425 = vmor %vm2423, %vm2424
    %v2426 = vsel %vm2425, %v2418, %v2422
    %v2427 = vand.u32 2147483647, %v2386
    %vm2428 = vcmp.eq.f32.partialorder %v2427, 8.507059e+37
    %v2429 = vand.u32 %v2386, 2147483648
    %v2430 = vor.u32 1.1754944e-38, %v2429
    %v2431 = vsel %vm2428, %v2430, %v2426
    %v2432 = vmul.f32 1.0, %v2431
    %v2433 = vrcp.pop %v2387
    %v2434 = vmul.f32 %v2387, %v2433
    %v2435 = vsub.f32 1.0, %v2434
    %v2436 = vmul.f32 %v2433, %v2435
    %v2437 = vadd.f32 %v2433, %v2436
    %vm2438 = vweird.f32 %v2387
    %vm2439 = vweird.f32 %v2433
    %vm2440 = vmor %vm2438, %vm2439
    %v2441 = vsel %vm2440, %v2433, %v2437
    %v2442 = vand.u32 2147483647, %v2387
    %vm2443 = vcmp.eq.f32.partialorder %v2442, 8.507059e+37
    %v2444 = vand.u32 %v2387, 2147483648
    %v2445 = vor.u32 1.1754944e-38, %v2444
    %v2446 = vsel %vm2443, %v2445, %v2441
    %v2447 = vmul.f32 1.0, %v2446
    %v2448 = vxor.u32 %v2085, 2147483648
    %v2449 = vxor.u32 %v2088, 2147483648
    %v2450 = vxor.u32 %v2091, 2147483648
    %v2451 = vxor.u32 %v2094, 2147483648
    %v2452 = vmul.f32 %v2448, 1.442695
    %v2453 = vpow.pop %v2452
    %v2454 = vmul.f32 %v2449, 1.442695
    %v2455 = vpow.pop %v2454
    %v2456 = vmul.f32 %v2450, 1.442695
    %v2457 = vpow.pop %v2456
    %v2458 = vmul.f32 %v2451, 1.442695
    %v2459 = vpow.pop %v2458
    %v2460 = vadd.f32 %v2453, 1.0
    %v2461 = vadd.f32 %v2455, 1.0
    %v2462 = vadd.f32 %v2457, 1.0
    %v2463 = vadd.f32 %v2459, 1.0
    %v2464 = vrcp.pop %v2460
    %v2465 = vmul.f32 %v2460, %v2464
    %v2466 = vsub.f32 1.0, %v2465
    %v2467 = vmul.f32 %v2464, %v2466
    %v2468 = vadd.f32 %v2464, %v2467
    %vm2469 = vweird.f32 %v2460
    %vm2470 = vweird.f32 %v2464
    %vm2471 = vmor %vm2469, %vm2470
    %v2472 = vsel %vm2471, %v2464, %v2468
    %v2473 = vand.u32 2147483647, %v2460
    %vm2474 = vcmp.eq.f32.partialorder %v2473, 8.507059e+37
    %v2475 = vand.u32 %v2460, 2147483648
    %v2476 = vor.u32 1.1754944e-38, %v2475
    %v2477 = vsel %vm2474, %v2476, %v2472
    %v2478 = vmul.f32 1.0, %v2477
    %v2479 = vrcp.pop %v2461
    %v2480 = vmul.f32 %v2461, %v2479
    %v2481 = vsub.f32 1.0, %v2480
    %v2482 = vmul.f32 %v2479, %v2481
    %v2483 = vadd.f32 %v2479, %v2482
    %vm2484 = vweird.f32 %v2461
    %vm2485 = vweird.f32 %v2479
    %vm2486 = vmor %vm2484, %vm2485
    %v2487 = vsel %vm2486, %v2479, %v2483
    %v2488 = vand.u32 2147483647, %v2461
    %vm2489 = vcmp.eq.f32.partialorder %v2488, 8.507059e+37
    %v2490 = vand.u32 %v2461, 2147483648
    %v2491 = vor.u32 1.1754944e-38, %v2490
    %v2492 = vsel %vm2489, %v2491, %v2487
    %v2493 = vmul.f32 1.0, %v2492
    %v2494 = vrcp.pop %v2462
    %v2495 = vmul.f32 %v2462, %v2494
    %v2496 = vsub.f32 1.0, %v2495
    %v2497 = vmul.f32 %v2494, %v2496
    %v2498 = vadd.f32 %v2494, %v2497
    %vm2499 = vweird.f32 %v2462
    %vm2500 = vweird.f32 %v2494
    %vm2501 = vmor %vm2499, %vm2500
    %v2502 = vsel %vm2501, %v2494, %v2498
    %v2503 = vand.u32 2147483647, %v2462
    %vm2504 = vcmp.eq.f32.partialorder %v2503, 8.507059e+37
    %v2505 = vand.u32 %v2462, 2147483648
    %v2506 = vor.u32 1.1754944e-38, %v2505
    %v2507 = vsel %vm2504, %v2506, %v2502
    %v2508 = vmul.f32 1.0, %v2507
    %v2509 = vrcp.pop %v2463
    %v2510 = vmul.f32 %v2463, %v2509
    %v2511 = vsub.f32 1.0, %v2510
    %v2512 = vmul.f32 %v2509, %v2511
    %v2513 = vadd.f32 %v2509, %v2512
    %vm2514 = vweird.f32 %v2463
    %vm2515 = vweird.f32 %v2509
    %vm2516 = vmor %vm2514, %vm2515
    %v2517 = vsel %vm2516, %v2509, %v2513
    %v2518 = vand.u32 2147483647, %v2463
    %vm2519 = vcmp.eq.f32.partialorder %v2518, 8.507059e+37
    %v2520 = vand.u32 %v2463, 2147483648
    %v2521 = vor.u32 1.1754944e-38, %v2520
    %v2522 = vsel %vm2519, %v2521, %v2517
    %v2523 = vmul.f32 1.0, %v2522
    %v2524 = vtanh.pop %v2097
    %v2525 = vtanh.pop %v2100
    %v2526 = vtanh.pop %v2103
    %v2527 = vtanh.pop %v2106
    %v2528 = vxor.u32 %v2109, 2147483648
    %v2529 = vxor.u32 %v2112, 2147483648
    %v2530 = vxor.u32 %v2115, 2147483648
    %v2531 = vxor.u32 %v2118, 2147483648
    %v2532 = vmul.f32 %v2528, 1.442695
    %v2533 = vpow.pop %v2532
    %v2534 = vmul.f32 %v2529, 1.442695
    %v2535 = vpow.pop %v2534
    %v2536 = vmul.f32 %v2530, 1.442695
    %v2537 = vpow.pop %v2536
    %v2538 = vmul.f32 %v2531, 1.442695
    %v2539 = vpow.pop %v2538
    %v2540 = vadd.f32 %v2533, 1.0
    %v2541 = vadd.f32 %v2535, 1.0
    %v2542 = vadd.f32 %v2537, 1.0
    %v2543 = vadd.f32 %v2539, 1.0
    %v2544 = vrcp.pop %v2540
    %v2545 = vmul.f32 %v2540, %v2544
    %v2546 = vsub.f32 1.0, %v2545
    %v2547 = vmul.f32 %v2544, %v2546
    %v2548 = vadd.f32 %v2544, %v2547
    %vm2549 = vweird.f32 %v2540
    %vm2550 = vweird.f32 %v2544
    %vm2551 = vmor %vm2549, %vm2550
    %v2552 = vsel %vm2551, %v2544, %v2548
    %v2553 = vand.u32 2147483647, %v2540
    %vm2554 = vcmp.eq.f32.partialorder %v2553, 8.507059e+37
    %v2555 = vand.u32 %v2540, 2147483648
    %v2556 = vor.u32 1.1754944e-38, %v2555
    %v2557 = vsel %vm2554, %v2556, %v2552
    %v2558 = vmul.f32 1.0, %v2557
    %v2559 = vrcp.pop %v2541
    %v2560 = vmul.f32 %v2541, %v2559
    %v2561 = vsub.f32 1.0, %v2560
    %v2562 = vmul.f32 %v2559, %v2561
    %v2563 = vadd.f32 %v2559, %v2562
    %vm2564 = vweird.f32 %v2541
    %vm2565 = vweird.f32 %v2559
    %vm2566 = vmor %vm2564, %vm2565
    %v2567 = vsel %vm2566, %v2559, %v2563
    %v2568 = vand.u32 2147483647, %v2541
    %vm2569 = vcmp.eq.f32.partialorder %v2568, 8.507059e+37
    %v2570 = vand.u32 %v2541, 2147483648
    %v2571 = vor.u32 1.1754944e-38, %v2570
    %v2572 = vsel %vm2569, %v2571, %v2567
    %v2573 = vmul.f32 1.0, %v2572
    %v2574 = vrcp.pop %v2542
    %v2575 = vmul.f32 %v2542, %v2574
    %v2576 = vsub.f32 1.0, %v2575
    %v2577 = vmul.f32 %v2574, %v2576
    %v2578 = vadd.f32 %v2574, %v2577
    %vm2579 = vweird.f32 %v2542
    %vm2580 = vweird.f32 %v2574
    %vm2581 = vmor %vm2579, %vm2580
    %v2582 = vsel %vm2581, %v2574, %v2578
    %v2583 = vand.u32 2147483647, %v2542
    %vm2584 = vcmp.eq.f32.partialorder %v2583, 8.507059e+37
    %v2585 = vand.u32 %v2542, 2147483648
    %v2586 = vor.u32 1.1754944e-38, %v2585
    %v2587 = vsel %vm2584, %v2586, %v2582
    %v2588 = vmul.f32 1.0, %v2587
    %v2589 = vrcp.pop %v2543
    %v2590 = vmul.f32 %v2543, %v2589
    %v2591 = vsub.f32 1.0, %v2590
    %v2592 = vmul.f32 %v2589, %v2591
    %v2593 = vadd.f32 %v2589, %v2592
    %vm2594 = vweird.f32 %v2543
    %vm2595 = vweird.f32 %v2589
    %vm2596 = vmor %vm2594, %vm2595
    %v2597 = vsel %vm2596, %v2589, %v2593
    %v2598 = vand.u32 2147483647, %v2543
    %vm2599 = vcmp.eq.f32.partialorder %v2598, 8.507059e+37
    %v2600 = vand.u32 %v2543, 2147483648
    %v2601 = vor.u32 1.1754944e-38, %v2600
    %v2602 = vsel %vm2599, %v2601, %v2597
    %v2603 = vmul.f32 1.0, %v2602
    %v2604 = vmul.f32 %v2478, %v1973
    %v2605 = vmul.f32 %v2493, %v1974
    %v2606 = vmul.f32 %v2508, %v1975
    %v2607 = vmul.f32 %v2523, %v1976
    %v2608 = vmul.f32 %v2402, %v2524
    %v2609 = vmul.f32 %v2417, %v2525
    %v2610 = vmul.f32 %v2432, %v2526
    %v2611 = vmul.f32 %v2447, %v2527
    %v2612 = vadd.f32 %v2604, %v2608
    %v2613 = vadd.f32 %v2605, %v2609
    %v2614 = vadd.f32 %v2606, %v2610
    %v2615 = vadd.f32 %v2607, %v2611
    %v2616 = vtanh.pop %v2612
    %v2617 = vtanh.pop %v2613
    %v2618 = vtanh.pop %v2614
    %v2619 = vtanh.pop %v2615
    %v2620 = vmul.f32 %v2558, %v2616
    %v2621 = vmul.f32 %v2573, %v2617
    %v2622 = vmul.f32 %v2588, %v2618
    %v2623 = vmul.f32 %v2603, %v2619
    %v2624 = vmul.f32 %v2620, %v254
    %v2625 = vmul.f32 %v2621, %v259
    %v2626 = vmul.f32 %v2622, %v264
    %v2627 = vmul.f32 %v2623, %v269
    %v2628 = vsel %vm1348, %v2624, 0.0
    %v2629 = vsel %vm1348, %v2625, 0.0
    %v2630 = vadd.f32 %v2628, %v2629
    %v2631 = vsel %vm1348, %v2626, 0.0
    %v2632 = vadd.f32 %v2630, %v2631
    %v2633 = vsel %vm1348, %v2627, 0.0
    %v2634 = vadd.f32 %v2632, %v2633
    %v2635 = vrot.slane %v2634, 4
    %v2636 = vadd.f32 %v2634, %v2635
    %v2637 = vrot.slane %v2636, 2
    %v2638 = vadd.f32 %v2636, %v2637
    %v2639 = vrot.slane %v2638, 1
    %v2640 = vadd.f32 %v2638, %v2639
    %v2641 = vadd.f32 %v2640, %v277
    %v2642 = vmax.f32 %v2641, 0.0
    %2643 = vst.msk [vmem:[#allocation3 + $0x2] sm:$0x1] %vm1364, %v2642
    %s2644 = scalar_lea.vmem %s0, 32
    %v2645 = vld [vmem:[%s2644] sm:$0xff]
    %2646 = vmatpush.msra.mxu0 0.0
    %2647 = vmatpush.msra.mxu0 0.0
    %2648 = vmatpush.msra.mxu0 0.0
    %2649 = vmatpush.msra.mxu0 0.0
    %2650 = vmatpush.msra.mxu0 0.0
    %2651 = vmatpush.msra.mxu0 0.0
    %2652 = vmatpush.msra.mxu0 0.0
    %2653 = vmatpush.msra.mxu0 %v2623
    %2654 = vmatpush.msra.mxu0 %v2622
    %2655 = vmatpush.msra.mxu0 %v2621
    %2656 = vmatpush.msra.mxu0 %v2620
    %2657 = vmatpush.msra.mxu0 %v2371
    %2658 = vmatpush.msra.mxu0 %v2370
    %2659 = vmatpush.msra.mxu0 %v2369
    %2660 = vmatpush.msra.mxu0 %v2368
    %2661 = vmatpush.msra.mxu0 %v2645
    %2662 = vmatmul.f32.gmra.mxu0 %v281
    %v2663 = vpop.f32.mrf.mxu0
    %v2664 = vadd.f32 %v90, %v2663
    %2665 = vmatmul.f32.gmra.mxu0 %v284
    %v2666 = vpop.f32.mrf.mxu0
    %v2667 = vadd.f32 %v95, %v2666
    %2668 = vmatmul.f32.gmra.mxu0 %v287
    %v2669 = vpop.f32.mrf.mxu0
    %v2670 = vadd.f32 %v100, %v2669
    %2671 = vmatmul.f32.gmra.mxu0 %v290
    %v2672 = vpop.f32.mrf.mxu0
    %v2673 = vadd.f32 %v105, %v2672
    %2674 = vmatmul.f32.gmra.mxu0 %v293
    %v2675 = vpop.f32.mrf.mxu0
    %v2676 = vadd.f32 %v110, %v2675
    %2677 = vmatmul.f32.gmra.mxu0 %v296
    %v2678 = vpop.f32.mrf.mxu0
    %v2679 = vadd.f32 %v115, %v2678
    %2680 = vmatmul.f32.gmra.mxu0 %v299
    %v2681 = vpop.f32.mrf.mxu0
    %v2682 = vadd.f32 %v120, %v2681
    %2683 = vmatmul.f32.gmra.mxu0 %v302
    %v2684 = vpop.f32.mrf.mxu0
    %v2685 = vadd.f32 %v125, %v2684
    %2686 = vmatmul.f32.gmra.mxu0 %v305
    %v2687 = vpop.f32.mrf.mxu0
    %v2688 = vadd.f32 %v130, %v2687
    %2689 = vmatmul.f32.gmra.mxu0 %v308
    %v2690 = vpop.f32.mrf.mxu0
    %v2691 = vadd.f32 %v135, %v2690
    %2692 = vmatmul.f32.gmra.mxu0 %v311
    %v2693 = vpop.f32.mrf.mxu0
    %v2694 = vadd.f32 %v140, %v2693
    %2695 = vmatmul.f32.gmra.mxu0 %v314
    %v2696 = vpop.f32.mrf.mxu0
    %v2697 = vadd.f32 %v145, %v2696
    %2698 = vmatmul.f32.gmra.mxu0 %v317
    %v2699 = vpop.f32.mrf.mxu0
    %v2700 = vadd.f32 %v150, %v2699
    %2701 = vmatmul.f32.gmra.mxu0 %v320
    %v2702 = vpop.f32.mrf.mxu0
    %v2703 = vadd.f32 %v155, %v2702
    %2704 = vmatmul.f32.gmra.mxu0 %v323
    %v2705 = vpop.f32.mrf.mxu0
    %v2706 = vadd.f32 %v160, %v2705
    %2707 = vmatmul.f32.gmra.mxu0 %v326
    %v2708 = vpop.f32.mrf.mxu0
    %v2709 = vadd.f32 %v165, %v2708
    %2710 = vmatmul.f32.gmra.mxu0 %v329
    %v2711 = vpop.f32.mrf.mxu0
    %v2712 = vadd.f32 %v170, %v2711
    %2713 = vmatmul.f32.gmra.mxu0 %v332
    %v2714 = vpop.f32.mrf.mxu0
    %v2715 = vadd.f32 %v175, %v2714
    %2716 = vmatmul.f32.gmra.mxu0 %v335
    %v2717 = vpop.f32.mrf.mxu0
    %v2718 = vadd.f32 %v180, %v2717
    %2719 = vmatmul.f32.gmra.mxu0 %v338
    %v2720 = vpop.f32.mrf.mxu0
    %v2721 = vadd.f32 %v185, %v2720
    %2722 = vmatmul.f32.gmra.mxu0 %v341
    %v2723 = vpop.f32.mrf.mxu0
    %v2724 = vadd.f32 %v190, %v2723
    %2725 = vmatmul.f32.gmra.mxu0 %v344
    %v2726 = vpop.f32.mrf.mxu0
    %v2727 = vadd.f32 %v195, %v2726
    %2728 = vmatmul.f32.gmra.mxu0 %v347
    %v2729 = vpop.f32.mrf.mxu0
    %v2730 = vadd.f32 %v200, %v2729
    %2731 = vmatmul.f32.gmra.mxu0 %v350
    %v2732 = vpop.f32.mrf.mxu0
    %v2733 = vadd.f32 %v205, %v2732
    %2734 = vmatmul.f32.gmra.mxu0 %v353
    %v2735 = vpop.f32.mrf.mxu0
    %v2736 = vadd.f32 %v210, %v2735
    %2737 = vmatmul.f32.gmra.mxu0 %v356
    %v2738 = vpop.f32.mrf.mxu0
    %v2739 = vadd.f32 %v215, %v2738
    %2740 = vmatmul.f32.gmra.mxu0 %v359
    %v2741 = vpop.f32.mrf.mxu0
    %v2742 = vadd.f32 %v220, %v2741
    %2743 = vmatmul.f32.gmra.mxu0 %v362
    %v2744 = vpop.f32.mrf.mxu0
    %v2745 = vadd.f32 %v225, %v2744
    %2746 = vmatmul.f32.gmra.mxu0 %v365
    %v2747 = vpop.f32.mrf.mxu0
    %v2748 = vadd.f32 %v230, %v2747
    %2749 = vmatmul.f32.gmra.mxu0 %v368
    %v2750 = vpop.f32.mrf.mxu0
    %v2751 = vadd.f32 %v235, %v2750
    %2752 = vmatmul.f32.gmra.mxu0 %v371
    %v2753 = vpop.f32.mrf.mxu0
    %v2754 = vadd.f32 %v240, %v2753
    %2755 = vmatmul.f32.gmra.mxu0 %v374
    %v2756 = vpop.f32.mrf.mxu0
    %v2757 = vadd.f32 %v245, %v2756
    %2758 = vdwg.mxu0
    %v2759 = vxor.u32 %v2664, 2147483648
    %v2760 = vxor.u32 %v2667, 2147483648
    %v2761 = vxor.u32 %v2670, 2147483648
    %v2762 = vxor.u32 %v2673, 2147483648
    %v2763 = vmul.f32 %v2759, 1.442695
    %v2764 = vpow.pop %v2763
    %v2765 = vmul.f32 %v2760, 1.442695
    %v2766 = vpow.pop %v2765
    %v2767 = vmul.f32 %v2761, 1.442695
    %v2768 = vpow.pop %v2767
    %v2769 = vmul.f32 %v2762, 1.442695
    %v2770 = vpow.pop %v2769
    %v2771 = vadd.f32 %v2764, 1.0
    %v2772 = vadd.f32 %v2766, 1.0
    %v2773 = vadd.f32 %v2768, 1.0
    %v2774 = vadd.f32 %v2770, 1.0
    %v2775 = vrcp.pop %v2771
    %v2776 = vmul.f32 %v2771, %v2775
    %v2777 = vsub.f32 1.0, %v2776
    %v2778 = vmul.f32 %v2775, %v2777
    %v2779 = vadd.f32 %v2775, %v2778
    %vm2780 = vweird.f32 %v2771
    %vm2781 = vweird.f32 %v2775
    %vm2782 = vmor %vm2780, %vm2781
    %v2783 = vsel %vm2782, %v2775, %v2779
    %v2784 = vand.u32 2147483647, %v2771
    %vm2785 = vcmp.eq.f32.partialorder %v2784, 8.507059e+37
    %v2786 = vand.u32 %v2771, 2147483648
    %v2787 = vor.u32 1.1754944e-38, %v2786
    %v2788 = vsel %vm2785, %v2787, %v2783
    %v2789 = vmul.f32 1.0, %v2788
    %v2790 = vrcp.pop %v2772
    %v2791 = vmul.f32 %v2772, %v2790
    %v2792 = vsub.f32 1.0, %v2791
    %v2793 = vmul.f32 %v2790, %v2792
    %v2794 = vadd.f32 %v2790, %v2793
    %vm2795 = vweird.f32 %v2772
    %vm2796 = vweird.f32 %v2790
    %vm2797 = vmor %vm2795, %vm2796
    %v2798 = vsel %vm2797, %v2790, %v2794
    %v2799 = vand.u32 2147483647, %v2772
    %vm2800 = vcmp.eq.f32.partialorder %v2799, 8.507059e+37
    %v2801 = vand.u32 %v2772, 2147483648
    %v2802 = vor.u32 1.1754944e-38, %v2801
    %v2803 = vsel %vm2800, %v2802, %v2798
    %v2804 = vmul.f32 1.0, %v2803
    %v2805 = vrcp.pop %v2773
    %v2806 = vmul.f32 %v2773, %v2805
    %v2807 = vsub.f32 1.0, %v2806
    %v2808 = vmul.f32 %v2805, %v2807
    %v2809 = vadd.f32 %v2805, %v2808
    %vm2810 = vweird.f32 %v2773
    %vm2811 = vweird.f32 %v2805
    %vm2812 = vmor %vm2810, %vm2811
    %v2813 = vsel %vm2812, %v2805, %v2809
    %v2814 = vand.u32 2147483647, %v2773
    %vm2815 = vcmp.eq.f32.partialorder %v2814, 8.507059e+37
    %v2816 = vand.u32 %v2773, 2147483648
    %v2817 = vor.u32 1.1754944e-38, %v2816
    %v2818 = vsel %vm2815, %v2817, %v2813
    %v2819 = vmul.f32 1.0, %v2818
    %v2820 = vrcp.pop %v2774
    %v2821 = vmul.f32 %v2774, %v2820
    %v2822 = vsub.f32 1.0, %v2821
    %v2823 = vmul.f32 %v2820, %v2822
    %v2824 = vadd.f32 %v2820, %v2823
    %vm2825 = vweird.f32 %v2774
    %vm2826 = vweird.f32 %v2820
    %vm2827 = vmor %vm2825, %vm2826
    %v2828 = vsel %vm2827, %v2820, %v2824
    %v2829 = vand.u32 2147483647, %v2774
    %vm2830 = vcmp.eq.f32.partialorder %v2829, 8.507059e+37
    %v2831 = vand.u32 %v2774, 2147483648
    %v2832 = vor.u32 1.1754944e-38, %v2831
    %v2833 = vsel %vm2830, %v2832, %v2828
    %v2834 = vmul.f32 1.0, %v2833
    %v2835 = vxor.u32 %v2676, 2147483648
    %v2836 = vxor.u32 %v2679, 2147483648
    %v2837 = vxor.u32 %v2682, 2147483648
    %v2838 = vxor.u32 %v2685, 2147483648
    %v2839 = vmul.f32 %v2835, 1.442695
    %v2840 = vpow.pop %v2839
    %v2841 = vmul.f32 %v2836, 1.442695
    %v2842 = vpow.pop %v2841
    %v2843 = vmul.f32 %v2837, 1.442695
    %v2844 = vpow.pop %v2843
    %v2845 = vmul.f32 %v2838, 1.442695
    %v2846 = vpow.pop %v2845
    %v2847 = vadd.f32 %v2840, 1.0
    %v2848 = vadd.f32 %v2842, 1.0
    %v2849 = vadd.f32 %v2844, 1.0
    %v2850 = vadd.f32 %v2846, 1.0
    %v2851 = vrcp.pop %v2847
    %v2852 = vmul.f32 %v2847, %v2851
    %v2853 = vsub.f32 1.0, %v2852
    %v2854 = vmul.f32 %v2851, %v2853
    %v2855 = vadd.f32 %v2851, %v2854
    %vm2856 = vweird.f32 %v2847
    %vm2857 = vweird.f32 %v2851
    %vm2858 = vmor %vm2856, %vm2857
    %v2859 = vsel %vm2858, %v2851, %v2855
    %v2860 = vand.u32 2147483647, %v2847
    %vm2861 = vcmp.eq.f32.partialorder %v2860, 8.507059e+37
    %v2862 = vand.u32 %v2847, 2147483648
    %v2863 = vor.u32 1.1754944e-38, %v2862
    %v2864 = vsel %vm2861, %v2863, %v2859
    %v2865 = vmul.f32 1.0, %v2864
    %v2866 = vrcp.pop %v2848
    %v2867 = vmul.f32 %v2848, %v2866
    %v2868 = vsub.f32 1.0, %v2867
    %v2869 = vmul.f32 %v2866, %v2868
    %v2870 = vadd.f32 %v2866, %v2869
    %vm2871 = vweird.f32 %v2848
    %vm2872 = vweird.f32 %v2866
    %vm2873 = vmor %vm2871, %vm2872
    %v2874 = vsel %vm2873, %v2866, %v2870
    %v2875 = vand.u32 2147483647, %v2848
    %vm2876 = vcmp.eq.f32.partialorder %v2875, 8.507059e+37
    %v2877 = vand.u32 %v2848, 2147483648
    %v2878 = vor.u32 1.1754944e-38, %v2877
    %v2879 = vsel %vm2876, %v2878, %v2874
    %v2880 = vmul.f32 1.0, %v2879
    %v2881 = vrcp.pop %v2849
    %v2882 = vmul.f32 %v2849, %v2881
    %v2883 = vsub.f32 1.0, %v2882
    %v2884 = vmul.f32 %v2881, %v2883
    %v2885 = vadd.f32 %v2881, %v2884
    %vm2886 = vweird.f32 %v2849
    %vm2887 = vweird.f32 %v2881
    %vm2888 = vmor %vm2886, %vm2887
    %v2889 = vsel %vm2888, %v2881, %v2885
    %v2890 = vand.u32 2147483647, %v2849
    %vm2891 = vcmp.eq.f32.partialorder %v2890, 8.507059e+37
    %v2892 = vand.u32 %v2849, 2147483648
    %v2893 = vor.u32 1.1754944e-38, %v2892
    %v2894 = vsel %vm2891, %v2893, %v2889
    %v2895 = vmul.f32 1.0, %v2894
    %v2896 = vrcp.pop %v2850
    %v2897 = vmul.f32 %v2850, %v2896
    %v2898 = vsub.f32 1.0, %v2897
    %v2899 = vmul.f32 %v2896, %v2898
    %v2900 = vadd.f32 %v2896, %v2899
    %vm2901 = vweird.f32 %v2850
    %vm2902 = vweird.f32 %v2896
    %vm2903 = vmor %vm2901, %vm2902
    %v2904 = vsel %vm2903, %v2896, %v2900
    %v2905 = vand.u32 2147483647, %v2850
    %vm2906 = vcmp.eq.f32.partialorder %v2905, 8.507059e+37
    %v2907 = vand.u32 %v2850, 2147483648
    %v2908 = vor.u32 1.1754944e-38, %v2907
    %v2909 = vsel %vm2906, %v2908, %v2904
    %v2910 = vmul.f32 1.0, %v2909
    %v2911 = vtanh.pop %v2688
    %v2912 = vtanh.pop %v2691
    %v2913 = vtanh.pop %v2694
    %v2914 = vtanh.pop %v2697
    %v2915 = vxor.u32 %v2700, 2147483648
    %v2916 = vxor.u32 %v2703, 2147483648
    %v2917 = vxor.u32 %v2706, 2147483648
    %v2918 = vxor.u32 %v2709, 2147483648
    %v2919 = vmul.f32 %v2915, 1.442695
    %v2920 = vpow.pop %v2919
    %v2921 = vmul.f32 %v2916, 1.442695
    %v2922 = vpow.pop %v2921
    %v2923 = vmul.f32 %v2917, 1.442695
    %v2924 = vpow.pop %v2923
    %v2925 = vmul.f32 %v2918, 1.442695
    %v2926 = vpow.pop %v2925
    %v2927 = vadd.f32 %v2920, 1.0
    %v2928 = vadd.f32 %v2922, 1.0
    %v2929 = vadd.f32 %v2924, 1.0
    %v2930 = vadd.f32 %v2926, 1.0
    %v2931 = vrcp.pop %v2927
    %v2932 = vmul.f32 %v2927, %v2931
    %v2933 = vsub.f32 1.0, %v2932
    %v2934 = vmul.f32 %v2931, %v2933
    %v2935 = vadd.f32 %v2931, %v2934
    %vm2936 = vweird.f32 %v2927
    %vm2937 = vweird.f32 %v2931
    %vm2938 = vmor %vm2936, %vm2937
    %v2939 = vsel %vm2938, %v2931, %v2935
    %v2940 = vand.u32 2147483647, %v2927
    %vm2941 = vcmp.eq.f32.partialorder %v2940, 8.507059e+37
    %v2942 = vand.u32 %v2927, 2147483648
    %v2943 = vor.u32 1.1754944e-38, %v2942
    %v2944 = vsel %vm2941, %v2943, %v2939
    %v2945 = vmul.f32 1.0, %v2944
    %v2946 = vrcp.pop %v2928
    %v2947 = vmul.f32 %v2928, %v2946
    %v2948 = vsub.f32 1.0, %v2947
    %v2949 = vmul.f32 %v2946, %v2948
    %v2950 = vadd.f32 %v2946, %v2949
    %vm2951 = vweird.f32 %v2928
    %vm2952 = vweird.f32 %v2946
    %vm2953 = vmor %vm2951, %vm2952
    %v2954 = vsel %vm2953, %v2946, %v2950
    %v2955 = vand.u32 2147483647, %v2928
    %vm2956 = vcmp.eq.f32.partialorder %v2955, 8.507059e+37
    %v2957 = vand.u32 %v2928, 2147483648
    %v2958 = vor.u32 1.1754944e-38, %v2957
    %v2959 = vsel %vm2956, %v2958, %v2954
    %v2960 = vmul.f32 1.0, %v2959
    %v2961 = vrcp.pop %v2929
    %v2962 = vmul.f32 %v2929, %v2961
    %v2963 = vsub.f32 1.0, %v2962
    %v2964 = vmul.f32 %v2961, %v2963
    %v2965 = vadd.f32 %v2961, %v2964
    %vm2966 = vweird.f32 %v2929
    %vm2967 = vweird.f32 %v2961
    %vm2968 = vmor %vm2966, %vm2967
    %v2969 = vsel %vm2968, %v2961, %v2965
    %v2970 = vand.u32 2147483647, %v2929
    %vm2971 = vcmp.eq.f32.partialorder %v2970, 8.507059e+37
    %v2972 = vand.u32 %v2929, 2147483648
    %v2973 = vor.u32 1.1754944e-38, %v2972
    %v2974 = vsel %vm2971, %v2973, %v2969
    %v2975 = vmul.f32 1.0, %v2974
    %v2976 = vrcp.pop %v2930
    %v2977 = vmul.f32 %v2930, %v2976
    %v2978 = vsub.f32 1.0, %v2977
    %v2979 = vmul.f32 %v2976, %v2978
    %v2980 = vadd.f32 %v2976, %v2979
    %vm2981 = vweird.f32 %v2930
    %vm2982 = vweird.f32 %v2976
    %vm2983 = vmor %vm2981, %vm2982
    %v2984 = vsel %vm2983, %v2976, %v2980
    %v2985 = vand.u32 2147483647, %v2930
    %vm2986 = vcmp.eq.f32.partialorder %v2985, 8.507059e+37
    %v2987 = vand.u32 %v2930, 2147483648
    %v2988 = vor.u32 1.1754944e-38, %v2987
    %v2989 = vsel %vm2986, %v2988, %v2984
    %v2990 = vmul.f32 1.0, %v2989
    %v2991 = vmul.f32 %v2865, %v2360
    %v2992 = vmul.f32 %v2880, %v2361
    %v2993 = vmul.f32 %v2895, %v2362
    %v2994 = vmul.f32 %v2910, %v2363
    %v2995 = vmul.f32 %v2789, %v2911
    %v2996 = vmul.f32 %v2804, %v2912
    %v2997 = vmul.f32 %v2819, %v2913
    %v2998 = vmul.f32 %v2834, %v2914
    %v2999 = vadd.f32 %v2991, %v2995
    %v3000 = vadd.f32 %v2992, %v2996
    %v3001 = vadd.f32 %v2993, %v2997
    %v3002 = vadd.f32 %v2994, %v2998
    %v3003 = vtanh.pop %v2999
    %v3004 = vtanh.pop %v3000
    %v3005 = vtanh.pop %v3001
    %v3006 = vtanh.pop %v3002
    %v3007 = vmul.f32 %v2945, %v3003
    %v3008 = vmul.f32 %v2960, %v3004
    %v3009 = vmul.f32 %v2975, %v3005
    %v3010 = vmul.f32 %v2990, %v3006
    %v3011 = vxor.u32 %v2712, 2147483648
    %v3012 = vxor.u32 %v2715, 2147483648
    %v3013 = vxor.u32 %v2718, 2147483648
    %v3014 = vxor.u32 %v2721, 2147483648
    %v3015 = vmul.f32 %v3011, 1.442695
    %v3016 = vpow.pop %v3015
    %v3017 = vmul.f32 %v3012, 1.442695
    %v3018 = vpow.pop %v3017
    %v3019 = vmul.f32 %v3013, 1.442695
    %v3020 = vpow.pop %v3019
    %v3021 = vmul.f32 %v3014, 1.442695
    %v3022 = vpow.pop %v3021
    %v3023 = vadd.f32 %v3016, 1.0
    %v3024 = vadd.f32 %v3018, 1.0
    %v3025 = vadd.f32 %v3020, 1.0
    %v3026 = vadd.f32 %v3022, 1.0
    %v3027 = vrcp.pop %v3023
    %v3028 = vmul.f32 %v3023, %v3027
    %v3029 = vsub.f32 1.0, %v3028
    %v3030 = vmul.f32 %v3027, %v3029
    %v3031 = vadd.f32 %v3027, %v3030
    %vm3032 = vweird.f32 %v3023
    %vm3033 = vweird.f32 %v3027
    %vm3034 = vmor %vm3032, %vm3033
    %v3035 = vsel %vm3034, %v3027, %v3031
    %v3036 = vand.u32 2147483647, %v3023
    %vm3037 = vcmp.eq.f32.partialorder %v3036, 8.507059e+37
    %v3038 = vand.u32 %v3023, 2147483648
    %v3039 = vor.u32 1.1754944e-38, %v3038
    %v3040 = vsel %vm3037, %v3039, %v3035
    %v3041 = vmul.f32 1.0, %v3040
    %v3042 = vrcp.pop %v3024
    %v3043 = vmul.f32 %v3024, %v3042
    %v3044 = vsub.f32 1.0, %v3043
    %v3045 = vmul.f32 %v3042, %v3044
    %v3046 = vadd.f32 %v3042, %v3045
    %vm3047 = vweird.f32 %v3024
    %vm3048 = vweird.f32 %v3042
    %vm3049 = vmor %vm3047, %vm3048
    %v3050 = vsel %vm3049, %v3042, %v3046
    %v3051 = vand.u32 2147483647, %v3024
    %vm3052 = vcmp.eq.f32.partialorder %v3051, 8.507059e+37
    %v3053 = vand.u32 %v3024, 2147483648
    %v3054 = vor.u32 1.1754944e-38, %v3053
    %v3055 = vsel %vm3052, %v3054, %v3050
    %v3056 = vmul.f32 1.0, %v3055
    %v3057 = vrcp.pop %v3025
    %v3058 = vmul.f32 %v3025, %v3057
    %v3059 = vsub.f32 1.0, %v3058
    %v3060 = vmul.f32 %v3057, %v3059
    %v3061 = vadd.f32 %v3057, %v3060
    %vm3062 = vweird.f32 %v3025
    %vm3063 = vweird.f32 %v3057
    %vm3064 = vmor %vm3062, %vm3063
    %v3065 = vsel %vm3064, %v3057, %v3061
    %v3066 = vand.u32 2147483647, %v3025
    %vm3067 = vcmp.eq.f32.partialorder %v3066, 8.507059e+37
    %v3068 = vand.u32 %v3025, 2147483648
    %v3069 = vor.u32 1.1754944e-38, %v3068
    %v3070 = vsel %vm3067, %v3069, %v3065
    %v3071 = vmul.f32 1.0, %v3070
    %v3072 = vrcp.pop %v3026
    %v3073 = vmul.f32 %v3026, %v3072
    %v3074 = vsub.f32 1.0, %v3073
    %v3075 = vmul.f32 %v3072, %v3074
    %v3076 = vadd.f32 %v3072, %v3075
    %vm3077 = vweird.f32 %v3026
    %vm3078 = vweird.f32 %v3072
    %vm3079 = vmor %vm3077, %vm3078
    %v3080 = vsel %vm3079, %v3072, %v3076
    %v3081 = vand.u32 2147483647, %v3026
    %vm3082 = vcmp.eq.f32.partialorder %v3081, 8.507059e+37
    %v3083 = vand.u32 %v3026, 2147483648
    %v3084 = vor.u32 1.1754944e-38, %v3083
    %v3085 = vsel %vm3082, %v3084, %v3080
    %v3086 = vmul.f32 1.0, %v3085
    %v3087 = vxor.u32 %v2724, 2147483648
    %v3088 = vxor.u32 %v2727, 2147483648
    %v3089 = vxor.u32 %v2730, 2147483648
    %v3090 = vxor.u32 %v2733, 2147483648
    %v3091 = vmul.f32 %v3087, 1.442695
    %v3092 = vpow.pop %v3091
    %v3093 = vmul.f32 %v3088, 1.442695
    %v3094 = vpow.pop %v3093
    %v3095 = vmul.f32 %v3089, 1.442695
    %v3096 = vpow.pop %v3095
    %v3097 = vmul.f32 %v3090, 1.442695
    %v3098 = vpow.pop %v3097
    %v3099 = vadd.f32 %v3092, 1.0
    %v3100 = vadd.f32 %v3094, 1.0
    %v3101 = vadd.f32 %v3096, 1.0
    %v3102 = vadd.f32 %v3098, 1.0
    %v3103 = vrcp.pop %v3099
    %v3104 = vmul.f32 %v3099, %v3103
    %v3105 = vsub.f32 1.0, %v3104
    %v3106 = vmul.f32 %v3103, %v3105
    %v3107 = vadd.f32 %v3103, %v3106
    %vm3108 = vweird.f32 %v3099
    %vm3109 = vweird.f32 %v3103
    %vm3110 = vmor %vm3108, %vm3109
    %v3111 = vsel %vm3110, %v3103, %v3107
    %v3112 = vand.u32 2147483647, %v3099
    %vm3113 = vcmp.eq.f32.partialorder %v3112, 8.507059e+37
    %v3114 = vand.u32 %v3099, 2147483648
    %v3115 = vor.u32 1.1754944e-38, %v3114
    %v3116 = vsel %vm3113, %v3115, %v3111
    %v3117 = vmul.f32 1.0, %v3116
    %v3118 = vrcp.pop %v3100
    %v3119 = vmul.f32 %v3100, %v3118
    %v3120 = vsub.f32 1.0, %v3119
    %v3121 = vmul.f32 %v3118, %v3120
    %v3122 = vadd.f32 %v3118, %v3121
    %vm3123 = vweird.f32 %v3100
    %vm3124 = vweird.f32 %v3118
    %vm3125 = vmor %vm3123, %vm3124
    %v3126 = vsel %vm3125, %v3118, %v3122
    %v3127 = vand.u32 2147483647, %v3100
    %vm3128 = vcmp.eq.f32.partialorder %v3127, 8.507059e+37
    %v3129 = vand.u32 %v3100, 2147483648
    %v3130 = vor.u32 1.1754944e-38, %v3129
    %v3131 = vsel %vm3128, %v3130, %v3126
    %v3132 = vmul.f32 1.0, %v3131
    %v3133 = vrcp.pop %v3101
    %v3134 = vmul.f32 %v3101, %v3133
    %v3135 = vsub.f32 1.0, %v3134
    %v3136 = vmul.f32 %v3133, %v3135
    %v3137 = vadd.f32 %v3133, %v3136
    %vm3138 = vweird.f32 %v3101
    %vm3139 = vweird.f32 %v3133
    %vm3140 = vmor %vm3138, %vm3139
    %v3141 = vsel %vm3140, %v3133, %v3137
    %v3142 = vand.u32 2147483647, %v3101
    %vm3143 = vcmp.eq.f32.partialorder %v3142, 8.507059e+37
    %v3144 = vand.u32 %v3101, 2147483648
    %v3145 = vor.u32 1.1754944e-38, %v3144
    %v3146 = vsel %vm3143, %v3145, %v3141
    %v3147 = vmul.f32 1.0, %v3146
    %v3148 = vrcp.pop %v3102
    %v3149 = vmul.f32 %v3102, %v3148
    %v3150 = vsub.f32 1.0, %v3149
    %v3151 = vmul.f32 %v3148, %v3150
    %v3152 = vadd.f32 %v3148, %v3151
    %vm3153 = vweird.f32 %v3102
    %vm3154 = vweird.f32 %v3148
    %vm3155 = vmor %vm3153, %vm3154
    %v3156 = vsel %vm3155, %v3148, %v3152
    %v3157 = vand.u32 2147483647, %v3102
    %vm3158 = vcmp.eq.f32.partialorder %v3157, 8.507059e+37
    %v3159 = vand.u32 %v3102, 2147483648
    %v3160 = vor.u32 1.1754944e-38, %v3159
    %v3161 = vsel %vm3158, %v3160, %v3156
    %v3162 = vmul.f32 1.0, %v3161
    %v3163 = vtanh.pop %v2736
    %v3164 = vtanh.pop %v2739
    %v3165 = vtanh.pop %v2742
    %v3166 = vtanh.pop %v2745
    %v3167 = vxor.u32 %v2748, 2147483648
    %v3168 = vxor.u32 %v2751, 2147483648
    %v3169 = vxor.u32 %v2754, 2147483648
    %v3170 = vxor.u32 %v2757, 2147483648
    %v3171 = vmul.f32 %v3167, 1.442695
    %v3172 = vpow.pop %v3171
    %v3173 = vmul.f32 %v3168, 1.442695
    %v3174 = vpow.pop %v3173
    %v3175 = vmul.f32 %v3169, 1.442695
    %v3176 = vpow.pop %v3175
    %v3177 = vmul.f32 %v3170, 1.442695
    %v3178 = vpow.pop %v3177
    %v3179 = vadd.f32 %v3172, 1.0
    %v3180 = vadd.f32 %v3174, 1.0
    %v3181 = vadd.f32 %v3176, 1.0
    %v3182 = vadd.f32 %v3178, 1.0
    %v3183 = vrcp.pop %v3179
    %v3184 = vmul.f32 %v3179, %v3183
    %v3185 = vsub.f32 1.0, %v3184
    %v3186 = vmul.f32 %v3183, %v3185
    %v3187 = vadd.f32 %v3183, %v3186
    %vm3188 = vweird.f32 %v3179
    %vm3189 = vweird.f32 %v3183
    %vm3190 = vmor %vm3188, %vm3189
    %v3191 = vsel %vm3190, %v3183, %v3187
    %v3192 = vand.u32 2147483647, %v3179
    %vm3193 = vcmp.eq.f32.partialorder %v3192, 8.507059e+37
    %v3194 = vand.u32 %v3179, 2147483648
    %v3195 = vor.u32 1.1754944e-38, %v3194
    %v3196 = vsel %vm3193, %v3195, %v3191
    %v3197 = vmul.f32 1.0, %v3196
    %v3198 = vrcp.pop %v3180
    %v3199 = vmul.f32 %v3180, %v3198
    %v3200 = vsub.f32 1.0, %v3199
    %v3201 = vmul.f32 %v3198, %v3200
    %v3202 = vadd.f32 %v3198, %v3201
    %vm3203 = vweird.f32 %v3180
    %vm3204 = vweird.f32 %v3198
    %vm3205 = vmor %vm3203, %vm3204
    %v3206 = vsel %vm3205, %v3198, %v3202
    %v3207 = vand.u32 2147483647, %v3180
    %vm3208 = vcmp.eq.f32.partialorder %v3207, 8.507059e+37
    %v3209 = vand.u32 %v3180, 2147483648
    %v3210 = vor.u32 1.1754944e-38, %v3209
    %v3211 = vsel %vm3208, %v3210, %v3206
    %v3212 = vmul.f32 1.0, %v3211
    %v3213 = vrcp.pop %v3181
    %v3214 = vmul.f32 %v3181, %v3213
    %v3215 = vsub.f32 1.0, %v3214
    %v3216 = vmul.f32 %v3213, %v3215
    %v3217 = vadd.f32 %v3213, %v3216
    %vm3218 = vweird.f32 %v3181
    %vm3219 = vweird.f32 %v3213
    %vm3220 = vmor %vm3218, %vm3219
    %v3221 = vsel %vm3220, %v3213, %v3217
    %v3222 = vand.u32 2147483647, %v3181
    %vm3223 = vcmp.eq.f32.partialorder %v3222, 8.507059e+37
    %v3224 = vand.u32 %v3181, 2147483648
    %v3225 = vor.u32 1.1754944e-38, %v3224
    %v3226 = vsel %vm3223, %v3225, %v3221
    %v3227 = vmul.f32 1.0, %v3226
    %v3228 = vrcp.pop %v3182
    %v3229 = vmul.f32 %v3182, %v3228
    %v3230 = vsub.f32 1.0, %v3229
    %v3231 = vmul.f32 %v3228, %v3230
    %v3232 = vadd.f32 %v3228, %v3231
    %vm3233 = vweird.f32 %v3182
    %vm3234 = vweird.f32 %v3228
    %vm3235 = vmor %vm3233, %vm3234
    %v3236 = vsel %vm3235, %v3228, %v3232
    %v3237 = vand.u32 2147483647, %v3182
    %vm3238 = vcmp.eq.f32.partialorder %v3237, 8.507059e+37
    %v3239 = vand.u32 %v3182, 2147483648
    %v3240 = vor.u32 1.1754944e-38, %v3239
    %v3241 = vsel %vm3238, %v3240, %v3236
    %v3242 = vmul.f32 1.0, %v3241
    %v3243 = vmul.f32 %v3117, %v2612
    %v3244 = vmul.f32 %v3132, %v2613
    %v3245 = vmul.f32 %v3147, %v2614
    %v3246 = vmul.f32 %v3162, %v2615
    %v3247 = vmul.f32 %v3041, %v3163
    %v3248 = vmul.f32 %v3056, %v3164
    %v3249 = vmul.f32 %v3071, %v3165
    %v3250 = vmul.f32 %v3086, %v3166
    %v3251 = vadd.f32 %v3243, %v3247
    %v3252 = vadd.f32 %v3244, %v3248
    %v3253 = vadd.f32 %v3245, %v3249
    %v3254 = vadd.f32 %v3246, %v3250
    %v3255 = vtanh.pop %v3251
    %v3256 = vtanh.pop %v3252
    %v3257 = vtanh.pop %v3253
    %v3258 = vtanh.pop %v3254
    %v3259 = vmul.f32 %v3197, %v3255
    %v3260 = vmul.f32 %v3212, %v3256
    %v3261 = vmul.f32 %v3227, %v3257
    %v3262 = vmul.f32 %v3242, %v3258
    %v3263 = vmul.f32 %v3259, %v254
    %v3264 = vmul.f32 %v3260, %v259
    %v3265 = vmul.f32 %v3261, %v264
    %v3266 = vmul.f32 %v3262, %v269
    %v3267 = vsel %vm1348, %v3263, 0.0
    %v3268 = vsel %vm1348, %v3264, 0.0
    %v3269 = vadd.f32 %v3267, %v3268
    %v3270 = vsel %vm1348, %v3265, 0.0
    %v3271 = vadd.f32 %v3269, %v3270
    %v3272 = vsel %vm1348, %v3266, 0.0
    %v3273 = vadd.f32 %v3271, %v3272
    %v3274 = vrot.slane %v3273, 4
    %v3275 = vadd.f32 %v3273, %v3274
    %v3276 = vrot.slane %v3275, 2
    %v3277 = vadd.f32 %v3275, %v3276
    %v3278 = vrot.slane %v3277, 1
    %v3279 = vadd.f32 %v3277, %v3278
    %v3280 = vadd.f32 %v3279, %v277
    %v3281 = vmax.f32 %v3280, 0.0
    %3282 = vst.msk [vmem:[#allocation3 + $0x3] sm:$0x1] %vm1364, %v3281
    %s3283 = scalar_lea.vmem %s0, 40
    %v3284 = vld [vmem:[%s3283] sm:$0xff]
    %3285 = vmatpush.msra.mxu0 0.0
    %3286 = vmatpush.msra.mxu0 0.0
    %3287 = vmatpush.msra.mxu0 0.0
    %3288 = vmatpush.msra.mxu0 0.0
    %3289 = vmatpush.msra.mxu0 0.0
    %3290 = vmatpush.msra.mxu0 0.0
    %3291 = vmatpush.msra.mxu0 0.0
    %3292 = vmatpush.msra.mxu0 %v3262
    %3293 = vmatpush.msra.mxu0 %v3261
    %3294 = vmatpush.msra.mxu0 %v3260
    %3295 = vmatpush.msra.mxu0 %v3259
    %3296 = vmatpush.msra.mxu0 %v3010
    %3297 = vmatpush.msra.mxu0 %v3009
    %3298 = vmatpush.msra.mxu0 %v3008
    %3299 = vmatpush.msra.mxu0 %v3007
    %3300 = vmatpush.msra.mxu0 %v3284
    %3301 = vmatmul.f32.gmra.mxu0 %v281
    %v3302 = vpop.f32.mrf.mxu0
    %v3303 = vadd.f32 %v90, %v3302
    %3304 = vmatmul.f32.gmra.mxu0 %v284
    %v3305 = vpop.f32.mrf.mxu0
    %v3306 = vadd.f32 %v95, %v3305
    %3307 = vmatmul.f32.gmra.mxu0 %v287
    %v3308 = vpop.f32.mrf.mxu0
    %v3309 = vadd.f32 %v100, %v3308
    %3310 = vmatmul.f32.gmra.mxu0 %v290
    %v3311 = vpop.f32.mrf.mxu0
    %v3312 = vadd.f32 %v105, %v3311
    %3313 = vmatmul.f32.gmra.mxu0 %v293
    %v3314 = vpop.f32.mrf.mxu0
    %v3315 = vadd.f32 %v110, %v3314
    %3316 = vmatmul.f32.gmra.mxu0 %v296
    %v3317 = vpop.f32.mrf.mxu0
    %v3318 = vadd.f32 %v115, %v3317
    %3319 = vmatmul.f32.gmra.mxu0 %v299
    %v3320 = vpop.f32.mrf.mxu0
    %v3321 = vadd.f32 %v120, %v3320
    %3322 = vmatmul.f32.gmra.mxu0 %v302
    %v3323 = vpop.f32.mrf.mxu0
    %v3324 = vadd.f32 %v125, %v3323
    %3325 = vmatmul.f32.gmra.mxu0 %v305
    %v3326 = vpop.f32.mrf.mxu0
    %v3327 = vadd.f32 %v130, %v3326
    %3328 = vmatmul.f32.gmra.mxu0 %v308
    %v3329 = vpop.f32.mrf.mxu0
    %v3330 = vadd.f32 %v135, %v3329
    %3331 = vmatmul.f32.gmra.mxu0 %v311
    %v3332 = vpop.f32.mrf.mxu0
    %v3333 = vadd.f32 %v140, %v3332
    %3334 = vmatmul.f32.gmra.mxu0 %v314
    %v3335 = vpop.f32.mrf.mxu0
    %v3336 = vadd.f32 %v145, %v3335
    %3337 = vmatmul.f32.gmra.mxu0 %v317
    %v3338 = vpop.f32.mrf.mxu0
    %v3339 = vadd.f32 %v150, %v3338
    %3340 = vmatmul.f32.gmra.mxu0 %v320
    %v3341 = vpop.f32.mrf.mxu0
    %v3342 = vadd.f32 %v155, %v3341
    %3343 = vmatmul.f32.gmra.mxu0 %v323
    %v3344 = vpop.f32.mrf.mxu0
    %v3345 = vadd.f32 %v160, %v3344
    %3346 = vmatmul.f32.gmra.mxu0 %v326
    %v3347 = vpop.f32.mrf.mxu0
    %v3348 = vadd.f32 %v165, %v3347
    %3349 = vmatmul.f32.gmra.mxu0 %v329
    %v3350 = vpop.f32.mrf.mxu0
    %v3351 = vadd.f32 %v170, %v3350
    %3352 = vmatmul.f32.gmra.mxu0 %v332
    %v3353 = vpop.f32.mrf.mxu0
    %v3354 = vadd.f32 %v175, %v3353
    %3355 = vmatmul.f32.gmra.mxu0 %v335
    %v3356 = vpop.f32.mrf.mxu0
    %v3357 = vadd.f32 %v180, %v3356
    %3358 = vmatmul.f32.gmra.mxu0 %v338
    %v3359 = vpop.f32.mrf.mxu0
    %v3360 = vadd.f32 %v185, %v3359
    %3361 = vmatmul.f32.gmra.mxu0 %v341
    %v3362 = vpop.f32.mrf.mxu0
    %v3363 = vadd.f32 %v190, %v3362
    %3364 = vmatmul.f32.gmra.mxu0 %v344
    %v3365 = vpop.f32.mrf.mxu0
    %v3366 = vadd.f32 %v195, %v3365
    %3367 = vmatmul.f32.gmra.mxu0 %v347
    %v3368 = vpop.f32.mrf.mxu0
    %v3369 = vadd.f32 %v200, %v3368
    %3370 = vmatmul.f32.gmra.mxu0 %v350
    %v3371 = vpop.f32.mrf.mxu0
    %v3372 = vadd.f32 %v205, %v3371
    %3373 = vmatmul.f32.gmra.mxu0 %v353
    %v3374 = vpop.f32.mrf.mxu0
    %v3375 = vadd.f32 %v210, %v3374
    %3376 = vmatmul.f32.gmra.mxu0 %v356
    %v3377 = vpop.f32.mrf.mxu0
    %v3378 = vadd.f32 %v215, %v3377
    %3379 = vmatmul.f32.gmra.mxu0 %v359
    %v3380 = vpop.f32.mrf.mxu0
    %v3381 = vadd.f32 %v220, %v3380
    %3382 = vmatmul.f32.gmra.mxu0 %v362
    %v3383 = vpop.f32.mrf.mxu0
    %v3384 = vadd.f32 %v225, %v3383
    %3385 = vmatmul.f32.gmra.mxu0 %v365
    %v3386 = vpop.f32.mrf.mxu0
    %v3387 = vadd.f32 %v230, %v3386
    %3388 = vmatmul.f32.gmra.mxu0 %v368
    %v3389 = vpop.f32.mrf.mxu0
    %v3390 = vadd.f32 %v235, %v3389
    %3391 = vmatmul.f32.gmra.mxu0 %v371
    %v3392 = vpop.f32.mrf.mxu0
    %v3393 = vadd.f32 %v240, %v3392
    %3394 = vmatmul.f32.gmra.mxu0 %v374
    %v3395 = vpop.f32.mrf.mxu0
    %v3396 = vadd.f32 %v245, %v3395
    %3397 = vdwg.mxu0
    %v3398 = vxor.u32 %v3303, 2147483648
    %v3399 = vxor.u32 %v3306, 2147483648
    %v3400 = vxor.u32 %v3309, 2147483648
    %v3401 = vxor.u32 %v3312, 2147483648
    %v3402 = vmul.f32 %v3398, 1.442695
    %v3403 = vpow.pop %v3402
    %v3404 = vmul.f32 %v3399, 1.442695
    %v3405 = vpow.pop %v3404
    %v3406 = vmul.f32 %v3400, 1.442695
    %v3407 = vpow.pop %v3406
    %v3408 = vmul.f32 %v3401, 1.442695
    %v3409 = vpow.pop %v3408
    %v3410 = vadd.f32 %v3403, 1.0
    %v3411 = vadd.f32 %v3405, 1.0
    %v3412 = vadd.f32 %v3407, 1.0
    %v3413 = vadd.f32 %v3409, 1.0
    %v3414 = vrcp.pop %v3410
    %v3415 = vmul.f32 %v3410, %v3414
    %v3416 = vsub.f32 1.0, %v3415
    %v3417 = vmul.f32 %v3414, %v3416
    %v3418 = vadd.f32 %v3414, %v3417
    %vm3419 = vweird.f32 %v3410
    %vm3420 = vweird.f32 %v3414
    %vm3421 = vmor %vm3419, %vm3420
    %v3422 = vsel %vm3421, %v3414, %v3418
    %v3423 = vand.u32 2147483647, %v3410
    %vm3424 = vcmp.eq.f32.partialorder %v3423, 8.507059e+37
    %v3425 = vand.u32 %v3410, 2147483648
    %v3426 = vor.u32 1.1754944e-38, %v3425
    %v3427 = vsel %vm3424, %v3426, %v3422
    %v3428 = vmul.f32 1.0, %v3427
    %v3429 = vrcp.pop %v3411
    %v3430 = vmul.f32 %v3411, %v3429
    %v3431 = vsub.f32 1.0, %v3430
    %v3432 = vmul.f32 %v3429, %v3431
    %v3433 = vadd.f32 %v3429, %v3432
    %vm3434 = vweird.f32 %v3411
    %vm3435 = vweird.f32 %v3429
    %vm3436 = vmor %vm3434, %vm3435
    %v3437 = vsel %vm3436, %v3429, %v3433
    %v3438 = vand.u32 2147483647, %v3411
    %vm3439 = vcmp.eq.f32.partialorder %v3438, 8.507059e+37
    %v3440 = vand.u32 %v3411, 2147483648
    %v3441 = vor.u32 1.1754944e-38, %v3440
    %v3442 = vsel %vm3439, %v3441, %v3437
    %v3443 = vmul.f32 1.0, %v3442
    %v3444 = vrcp.pop %v3412
    %v3445 = vmul.f32 %v3412, %v3444
    %v3446 = vsub.f32 1.0, %v3445
    %v3447 = vmul.f32 %v3444, %v3446
    %v3448 = vadd.f32 %v3444, %v3447
    %vm3449 = vweird.f32 %v3412
    %vm3450 = vweird.f32 %v3444
    %vm3451 = vmor %vm3449, %vm3450
    %v3452 = vsel %vm3451, %v3444, %v3448
    %v3453 = vand.u32 2147483647, %v3412
    %vm3454 = vcmp.eq.f32.partialorder %v3453, 8.507059e+37
    %v3455 = vand.u32 %v3412, 2147483648
    %v3456 = vor.u32 1.1754944e-38, %v3455
    %v3457 = vsel %vm3454, %v3456, %v3452
    %v3458 = vmul.f32 1.0, %v3457
    %v3459 = vrcp.pop %v3413
    %v3460 = vmul.f32 %v3413, %v3459
    %v3461 = vsub.f32 1.0, %v3460
    %v3462 = vmul.f32 %v3459, %v3461
    %v3463 = vadd.f32 %v3459, %v3462
    %vm3464 = vweird.f32 %v3413
    %vm3465 = vweird.f32 %v3459
    %vm3466 = vmor %vm3464, %vm3465
    %v3467 = vsel %vm3466, %v3459, %v3463
    %v3468 = vand.u32 2147483647, %v3413
    %vm3469 = vcmp.eq.f32.partialorder %v3468, 8.507059e+37
    %v3470 = vand.u32 %v3413, 2147483648
    %v3471 = vor.u32 1.1754944e-38, %v3470
    %v3472 = vsel %vm3469, %v3471, %v3467
    %v3473 = vmul.f32 1.0, %v3472
    %v3474 = vxor.u32 %v3315, 2147483648
    %v3475 = vxor.u32 %v3318, 2147483648
    %v3476 = vxor.u32 %v3321, 2147483648
    %v3477 = vxor.u32 %v3324, 2147483648
    %v3478 = vmul.f32 %v3474, 1.442695
    %v3479 = vpow.pop %v3478
    %v3480 = vmul.f32 %v3475, 1.442695
    %v3481 = vpow.pop %v3480
    %v3482 = vmul.f32 %v3476, 1.442695
    %v3483 = vpow.pop %v3482
    %v3484 = vmul.f32 %v3477, 1.442695
    %v3485 = vpow.pop %v3484
    %v3486 = vadd.f32 %v3479, 1.0
    %v3487 = vadd.f32 %v3481, 1.0
    %v3488 = vadd.f32 %v3483, 1.0
    %v3489 = vadd.f32 %v3485, 1.0
    %v3490 = vrcp.pop %v3486
    %v3491 = vmul.f32 %v3486, %v3490
    %v3492 = vsub.f32 1.0, %v3491
    %v3493 = vmul.f32 %v3490, %v3492
    %v3494 = vadd.f32 %v3490, %v3493
    %vm3495 = vweird.f32 %v3486
    %vm3496 = vweird.f32 %v3490
    %vm3497 = vmor %vm3495, %vm3496
    %v3498 = vsel %vm3497, %v3490, %v3494
    %v3499 = vand.u32 2147483647, %v3486
    %vm3500 = vcmp.eq.f32.partialorder %v3499, 8.507059e+37
    %v3501 = vand.u32 %v3486, 2147483648
    %v3502 = vor.u32 1.1754944e-38, %v3501
    %v3503 = vsel %vm3500, %v3502, %v3498
    %v3504 = vmul.f32 1.0, %v3503
    %v3505 = vrcp.pop %v3487
    %v3506 = vmul.f32 %v3487, %v3505
    %v3507 = vsub.f32 1.0, %v3506
    %v3508 = vmul.f32 %v3505, %v3507
    %v3509 = vadd.f32 %v3505, %v3508
    %vm3510 = vweird.f32 %v3487
    %vm3511 = vweird.f32 %v3505
    %vm3512 = vmor %vm3510, %vm3511
    %v3513 = vsel %vm3512, %v3505, %v3509
    %v3514 = vand.u32 2147483647, %v3487
    %vm3515 = vcmp.eq.f32.partialorder %v3514, 8.507059e+37
    %v3516 = vand.u32 %v3487, 2147483648
    %v3517 = vor.u32 1.1754944e-38, %v3516
    %v3518 = vsel %vm3515, %v3517, %v3513
    %v3519 = vmul.f32 1.0, %v3518
    %v3520 = vrcp.pop %v3488
    %v3521 = vmul.f32 %v3488, %v3520
    %v3522 = vsub.f32 1.0, %v3521
    %v3523 = vmul.f32 %v3520, %v3522
    %v3524 = vadd.f32 %v3520, %v3523
    %vm3525 = vweird.f32 %v3488
    %vm3526 = vweird.f32 %v3520
    %vm3527 = vmor %vm3525, %vm3526
    %v3528 = vsel %vm3527, %v3520, %v3524
    %v3529 = vand.u32 2147483647, %v3488
    %vm3530 = vcmp.eq.f32.partialorder %v3529, 8.507059e+37
    %v3531 = vand.u32 %v3488, 2147483648
    %v3532 = vor.u32 1.1754944e-38, %v3531
    %v3533 = vsel %vm3530, %v3532, %v3528
    %v3534 = vmul.f32 1.0, %v3533
    %v3535 = vrcp.pop %v3489
    %v3536 = vmul.f32 %v3489, %v3535
    %v3537 = vsub.f32 1.0, %v3536
    %v3538 = vmul.f32 %v3535, %v3537
    %v3539 = vadd.f32 %v3535, %v3538
    %vm3540 = vweird.f32 %v3489
    %vm3541 = vweird.f32 %v3535
    %vm3542 = vmor %vm3540, %vm3541
    %v3543 = vsel %vm3542, %v3535, %v3539
    %v3544 = vand.u32 2147483647, %v3489
    %vm3545 = vcmp.eq.f32.partialorder %v3544, 8.507059e+37
    %v3546 = vand.u32 %v3489, 2147483648
    %v3547 = vor.u32 1.1754944e-38, %v3546
    %v3548 = vsel %vm3545, %v3547, %v3543
    %v3549 = vmul.f32 1.0, %v3548
    %v3550 = vtanh.pop %v3327
    %v3551 = vtanh.pop %v3330
    %v3552 = vtanh.pop %v3333
    %v3553 = vtanh.pop %v3336
    %v3554 = vxor.u32 %v3339, 2147483648
    %v3555 = vxor.u32 %v3342, 2147483648
    %v3556 = vxor.u32 %v3345, 2147483648
    %v3557 = vxor.u32 %v3348, 2147483648
    %v3558 = vmul.f32 %v3554, 1.442695
    %v3559 = vpow.pop %v3558
    %v3560 = vmul.f32 %v3555, 1.442695
    %v3561 = vpow.pop %v3560
    %v3562 = vmul.f32 %v3556, 1.442695
    %v3563 = vpow.pop %v3562
    %v3564 = vmul.f32 %v3557, 1.442695
    %v3565 = vpow.pop %v3564
    %v3566 = vadd.f32 %v3559, 1.0
    %v3567 = vadd.f32 %v3561, 1.0
    %v3568 = vadd.f32 %v3563, 1.0
    %v3569 = vadd.f32 %v3565, 1.0
    %v3570 = vrcp.pop %v3566
    %v3571 = vmul.f32 %v3566, %v3570
    %v3572 = vsub.f32 1.0, %v3571
    %v3573 = vmul.f32 %v3570, %v3572
    %v3574 = vadd.f32 %v3570, %v3573
    %vm3575 = vweird.f32 %v3566
    %vm3576 = vweird.f32 %v3570
    %vm3577 = vmor %vm3575, %vm3576
    %v3578 = vsel %vm3577, %v3570, %v3574
    %v3579 = vand.u32 2147483647, %v3566
    %vm3580 = vcmp.eq.f32.partialorder %v3579, 8.507059e+37
    %v3581 = vand.u32 %v3566, 2147483648
    %v3582 = vor.u32 1.1754944e-38, %v3581
    %v3583 = vsel %vm3580, %v3582, %v3578
    %v3584 = vmul.f32 1.0, %v3583
    %v3585 = vrcp.pop %v3567
    %v3586 = vmul.f32 %v3567, %v3585
    %v3587 = vsub.f32 1.0, %v3586
    %v3588 = vmul.f32 %v3585, %v3587
    %v3589 = vadd.f32 %v3585, %v3588
    %vm3590 = vweird.f32 %v3567
    %vm3591 = vweird.f32 %v3585
    %vm3592 = vmor %vm3590, %vm3591
    %v3593 = vsel %vm3592, %v3585, %v3589
    %v3594 = vand.u32 2147483647, %v3567
    %vm3595 = vcmp.eq.f32.partialorder %v3594, 8.507059e+37
    %v3596 = vand.u32 %v3567, 2147483648
    %v3597 = vor.u32 1.1754944e-38, %v3596
    %v3598 = vsel %vm3595, %v3597, %v3593
    %v3599 = vmul.f32 1.0, %v3598
    %v3600 = vrcp.pop %v3568
    %v3601 = vmul.f32 %v3568, %v3600
    %v3602 = vsub.f32 1.0, %v3601
    %v3603 = vmul.f32 %v3600, %v3602
    %v3604 = vadd.f32 %v3600, %v3603
    %vm3605 = vweird.f32 %v3568
    %vm3606 = vweird.f32 %v3600
    %vm3607 = vmor %vm3605, %vm3606
    %v3608 = vsel %vm3607, %v3600, %v3604
    %v3609 = vand.u32 2147483647, %v3568
    %vm3610 = vcmp.eq.f32.partialorder %v3609, 8.507059e+37
    %v3611 = vand.u32 %v3568, 2147483648
    %v3612 = vor.u32 1.1754944e-38, %v3611
    %v3613 = vsel %vm3610, %v3612, %v3608
    %v3614 = vmul.f32 1.0, %v3613
    %v3615 = vrcp.pop %v3569
    %v3616 = vmul.f32 %v3569, %v3615
    %v3617 = vsub.f32 1.0, %v3616
    %v3618 = vmul.f32 %v3615, %v3617
    %v3619 = vadd.f32 %v3615, %v3618
    %vm3620 = vweird.f32 %v3569
    %vm3621 = vweird.f32 %v3615
    %vm3622 = vmor %vm3620, %vm3621
    %v3623 = vsel %vm3622, %v3615, %v3619
    %v3624 = vand.u32 2147483647, %v3569
    %vm3625 = vcmp.eq.f32.partialorder %v3624, 8.507059e+37
    %v3626 = vand.u32 %v3569, 2147483648
    %v3627 = vor.u32 1.1754944e-38, %v3626
    %v3628 = vsel %vm3625, %v3627, %v3623
    %v3629 = vmul.f32 1.0, %v3628
    %v3630 = vmul.f32 %v3504, %v2999
    %v3631 = vmul.f32 %v3519, %v3000
    %v3632 = vmul.f32 %v3534, %v3001
    %v3633 = vmul.f32 %v3549, %v3002
    %v3634 = vmul.f32 %v3428, %v3550
    %v3635 = vmul.f32 %v3443, %v3551
    %v3636 = vmul.f32 %v3458, %v3552
    %v3637 = vmul.f32 %v3473, %v3553
    %v3638 = vadd.f32 %v3630, %v3634
    %v3639 = vadd.f32 %v3631, %v3635
    %v3640 = vadd.f32 %v3632, %v3636
    %v3641 = vadd.f32 %v3633, %v3637
    %v3642 = vtanh.pop %v3638
    %v3643 = vtanh.pop %v3639
    %v3644 = vtanh.pop %v3640
    %v3645 = vtanh.pop %v3641
    %v3646 = vmul.f32 %v3584, %v3642
    %v3647 = vmul.f32 %v3599, %v3643
    %v3648 = vmul.f32 %v3614, %v3644
    %v3649 = vmul.f32 %v3629, %v3645
    %v3650 = vxor.u32 %v3351, 2147483648
    %v3651 = vxor.u32 %v3354, 2147483648
    %v3652 = vxor.u32 %v3357, 2147483648
    %v3653 = vxor.u32 %v3360, 2147483648
    %v3654 = vmul.f32 %v3650, 1.442695
    %v3655 = vpow.pop %v3654
    %v3656 = vmul.f32 %v3651, 1.442695
    %v3657 = vpow.pop %v3656
    %v3658 = vmul.f32 %v3652, 1.442695
    %v3659 = vpow.pop %v3658
    %v3660 = vmul.f32 %v3653, 1.442695
    %v3661 = vpow.pop %v3660
    %v3662 = vadd.f32 %v3655, 1.0
    %v3663 = vadd.f32 %v3657, 1.0
    %v3664 = vadd.f32 %v3659, 1.0
    %v3665 = vadd.f32 %v3661, 1.0
    %v3666 = vrcp.pop %v3662
    %v3667 = vmul.f32 %v3662, %v3666
    %v3668 = vsub.f32 1.0, %v3667
    %v3669 = vmul.f32 %v3666, %v3668
    %v3670 = vadd.f32 %v3666, %v3669
    %vm3671 = vweird.f32 %v3662
    %vm3672 = vweird.f32 %v3666
    %vm3673 = vmor %vm3671, %vm3672
    %v3674 = vsel %vm3673, %v3666, %v3670
    %v3675 = vand.u32 2147483647, %v3662
    %vm3676 = vcmp.eq.f32.partialorder %v3675, 8.507059e+37
    %v3677 = vand.u32 %v3662, 2147483648
    %v3678 = vor.u32 1.1754944e-38, %v3677
    %v3679 = vsel %vm3676, %v3678, %v3674
    %v3680 = vmul.f32 1.0, %v3679
    %v3681 = vrcp.pop %v3663
    %v3682 = vmul.f32 %v3663, %v3681
    %v3683 = vsub.f32 1.0, %v3682
    %v3684 = vmul.f32 %v3681, %v3683
    %v3685 = vadd.f32 %v3681, %v3684
    %vm3686 = vweird.f32 %v3663
    %vm3687 = vweird.f32 %v3681
    %vm3688 = vmor %vm3686, %vm3687
    %v3689 = vsel %vm3688, %v3681, %v3685
    %v3690 = vand.u32 2147483647, %v3663
    %vm3691 = vcmp.eq.f32.partialorder %v3690, 8.507059e+37
    %v3692 = vand.u32 %v3663, 2147483648
    %v3693 = vor.u32 1.1754944e-38, %v3692
    %v3694 = vsel %vm3691, %v3693, %v3689
    %v3695 = vmul.f32 1.0, %v3694
    %v3696 = vrcp.pop %v3664
    %v3697 = vmul.f32 %v3664, %v3696
    %v3698 = vsub.f32 1.0, %v3697
    %v3699 = vmul.f32 %v3696, %v3698
    %v3700 = vadd.f32 %v3696, %v3699
    %vm3701 = vweird.f32 %v3664
    %vm3702 = vweird.f32 %v3696
    %vm3703 = vmor %vm3701, %vm3702
    %v3704 = vsel %vm3703, %v3696, %v3700
    %v3705 = vand.u32 2147483647, %v3664
    %vm3706 = vcmp.eq.f32.partialorder %v3705, 8.507059e+37
    %v3707 = vand.u32 %v3664, 2147483648
    %v3708 = vor.u32 1.1754944e-38, %v3707
    %v3709 = vsel %vm3706, %v3708, %v3704
    %v3710 = vmul.f32 1.0, %v3709
    %v3711 = vrcp.pop %v3665
    %v3712 = vmul.f32 %v3665, %v3711
    %v3713 = vsub.f32 1.0, %v3712
    %v3714 = vmul.f32 %v3711, %v3713
    %v3715 = vadd.f32 %v3711, %v3714
    %vm3716 = vweird.f32 %v3665
    %vm3717 = vweird.f32 %v3711
    %vm3718 = vmor %vm3716, %vm3717
    %v3719 = vsel %vm3718, %v3711, %v3715
    %v3720 = vand.u32 2147483647, %v3665
    %vm3721 = vcmp.eq.f32.partialorder %v3720, 8.507059e+37
    %v3722 = vand.u32 %v3665, 2147483648
    %v3723 = vor.u32 1.1754944e-38, %v3722
    %v3724 = vsel %vm3721, %v3723, %v3719
    %v3725 = vmul.f32 1.0, %v3724
    %v3726 = vxor.u32 %v3363, 2147483648
    %v3727 = vxor.u32 %v3366, 2147483648
    %v3728 = vxor.u32 %v3369, 2147483648
    %v3729 = vxor.u32 %v3372, 2147483648
    %v3730 = vmul.f32 %v3726, 1.442695
    %v3731 = vpow.pop %v3730
    %v3732 = vmul.f32 %v3727, 1.442695
    %v3733 = vpow.pop %v3732
    %v3734 = vmul.f32 %v3728, 1.442695
    %v3735 = vpow.pop %v3734
    %v3736 = vmul.f32 %v3729, 1.442695
    %v3737 = vpow.pop %v3736
    %v3738 = vadd.f32 %v3731, 1.0
    %v3739 = vadd.f32 %v3733, 1.0
    %v3740 = vadd.f32 %v3735, 1.0
    %v3741 = vadd.f32 %v3737, 1.0
    %v3742 = vrcp.pop %v3738
    %v3743 = vmul.f32 %v3738, %v3742
    %v3744 = vsub.f32 1.0, %v3743
    %v3745 = vmul.f32 %v3742, %v3744
    %v3746 = vadd.f32 %v3742, %v3745
    %vm3747 = vweird.f32 %v3738
    %vm3748 = vweird.f32 %v3742
    %vm3749 = vmor %vm3747, %vm3748
    %v3750 = vsel %vm3749, %v3742, %v3746
    %v3751 = vand.u32 2147483647, %v3738
    %vm3752 = vcmp.eq.f32.partialorder %v3751, 8.507059e+37
    %v3753 = vand.u32 %v3738, 2147483648
    %v3754 = vor.u32 1.1754944e-38, %v3753
    %v3755 = vsel %vm3752, %v3754, %v3750
    %v3756 = vmul.f32 1.0, %v3755
    %v3757 = vrcp.pop %v3739
    %v3758 = vmul.f32 %v3739, %v3757
    %v3759 = vsub.f32 1.0, %v3758
    %v3760 = vmul.f32 %v3757, %v3759
    %v3761 = vadd.f32 %v3757, %v3760
    %vm3762 = vweird.f32 %v3739
    %vm3763 = vweird.f32 %v3757
    %vm3764 = vmor %vm3762, %vm3763
    %v3765 = vsel %vm3764, %v3757, %v3761
    %v3766 = vand.u32 2147483647, %v3739
    %vm3767 = vcmp.eq.f32.partialorder %v3766, 8.507059e+37
    %v3768 = vand.u32 %v3739, 2147483648
    %v3769 = vor.u32 1.1754944e-38, %v3768
    %v3770 = vsel %vm3767, %v3769, %v3765
    %v3771 = vmul.f32 1.0, %v3770
    %v3772 = vrcp.pop %v3740
    %v3773 = vmul.f32 %v3740, %v3772
    %v3774 = vsub.f32 1.0, %v3773
    %v3775 = vmul.f32 %v3772, %v3774
    %v3776 = vadd.f32 %v3772, %v3775
    %vm3777 = vweird.f32 %v3740
    %vm3778 = vweird.f32 %v3772
    %vm3779 = vmor %vm3777, %vm3778
    %v3780 = vsel %vm3779, %v3772, %v3776
    %v3781 = vand.u32 2147483647, %v3740
    %vm3782 = vcmp.eq.f32.partialorder %v3781, 8.507059e+37
    %v3783 = vand.u32 %v3740, 2147483648
    %v3784 = vor.u32 1.1754944e-38, %v3783
    %v3785 = vsel %vm3782, %v3784, %v3780
    %v3786 = vmul.f32 1.0, %v3785
    %v3787 = vrcp.pop %v3741
    %v3788 = vmul.f32 %v3741, %v3787
    %v3789 = vsub.f32 1.0, %v3788
    %v3790 = vmul.f32 %v3787, %v3789
    %v3791 = vadd.f32 %v3787, %v3790
    %vm3792 = vweird.f32 %v3741
    %vm3793 = vweird.f32 %v3787
    %vm3794 = vmor %vm3792, %vm3793
    %v3795 = vsel %vm3794, %v3787, %v3791
    %v3796 = vand.u32 2147483647, %v3741
    %vm3797 = vcmp.eq.f32.partialorder %v3796, 8.507059e+37
    %v3798 = vand.u32 %v3741, 2147483648
    %v3799 = vor.u32 1.1754944e-38, %v3798
    %v3800 = vsel %vm3797, %v3799, %v3795
    %v3801 = vmul.f32 1.0, %v3800
    %v3802 = vtanh.pop %v3375
    %v3803 = vtanh.pop %v3378
    %v3804 = vtanh.pop %v3381
    %v3805 = vtanh.pop %v3384
    %v3806 = vxor.u32 %v3387, 2147483648
    %v3807 = vxor.u32 %v3390, 2147483648
    %v3808 = vxor.u32 %v3393, 2147483648
    %v3809 = vxor.u32 %v3396, 2147483648
    %v3810 = vmul.f32 %v3806, 1.442695
    %v3811 = vpow.pop %v3810
    %v3812 = vmul.f32 %v3807, 1.442695
    %v3813 = vpow.pop %v3812
    %v3814 = vmul.f32 %v3808, 1.442695
    %v3815 = vpow.pop %v3814
    %v3816 = vmul.f32 %v3809, 1.442695
    %v3817 = vpow.pop %v3816
    %v3818 = vadd.f32 %v3811, 1.0
    %v3819 = vadd.f32 %v3813, 1.0
    %v3820 = vadd.f32 %v3815, 1.0
    %v3821 = vadd.f32 %v3817, 1.0
    %v3822 = vrcp.pop %v3818
    %v3823 = vmul.f32 %v3818, %v3822
    %v3824 = vsub.f32 1.0, %v3823
    %v3825 = vmul.f32 %v3822, %v3824
    %v3826 = vadd.f32 %v3822, %v3825
    %vm3827 = vweird.f32 %v3818
    %vm3828 = vweird.f32 %v3822
    %vm3829 = vmor %vm3827, %vm3828
    %v3830 = vsel %vm3829, %v3822, %v3826
    %v3831 = vand.u32 2147483647, %v3818
    %vm3832 = vcmp.eq.f32.partialorder %v3831, 8.507059e+37
    %v3833 = vand.u32 %v3818, 2147483648
    %v3834 = vor.u32 1.1754944e-38, %v3833
    %v3835 = vsel %vm3832, %v3834, %v3830
    %v3836 = vmul.f32 1.0, %v3835
    %v3837 = vrcp.pop %v3819
    %v3838 = vmul.f32 %v3819, %v3837
    %v3839 = vsub.f32 1.0, %v3838
    %v3840 = vmul.f32 %v3837, %v3839
    %v3841 = vadd.f32 %v3837, %v3840
    %vm3842 = vweird.f32 %v3819
    %vm3843 = vweird.f32 %v3837
    %vm3844 = vmor %vm3842, %vm3843
    %v3845 = vsel %vm3844, %v3837, %v3841
    %v3846 = vand.u32 2147483647, %v3819
    %vm3847 = vcmp.eq.f32.partialorder %v3846, 8.507059e+37
    %v3848 = vand.u32 %v3819, 2147483648
    %v3849 = vor.u32 1.1754944e-38, %v3848
    %v3850 = vsel %vm3847, %v3849, %v3845
    %v3851 = vmul.f32 1.0, %v3850
    %v3852 = vrcp.pop %v3820
    %v3853 = vmul.f32 %v3820, %v3852
    %v3854 = vsub.f32 1.0, %v3853
    %v3855 = vmul.f32 %v3852, %v3854
    %v3856 = vadd.f32 %v3852, %v3855
    %vm3857 = vweird.f32 %v3820
    %vm3858 = vweird.f32 %v3852
    %vm3859 = vmor %vm3857, %vm3858
    %v3860 = vsel %vm3859, %v3852, %v3856
    %v3861 = vand.u32 2147483647, %v3820
    %vm3862 = vcmp.eq.f32.partialorder %v3861, 8.507059e+37
    %v3863 = vand.u32 %v3820, 2147483648
    %v3864 = vor.u32 1.1754944e-38, %v3863
    %v3865 = vsel %vm3862, %v3864, %v3860
    %v3866 = vmul.f32 1.0, %v3865
    %v3867 = vrcp.pop %v3821
    %v3868 = vmul.f32 %v3821, %v3867
    %v3869 = vsub.f32 1.0, %v3868
    %v3870 = vmul.f32 %v3867, %v3869
    %v3871 = vadd.f32 %v3867, %v3870
    %vm3872 = vweird.f32 %v3821
    %vm3873 = vweird.f32 %v3867
    %vm3874 = vmor %vm3872, %vm3873
    %v3875 = vsel %vm3874, %v3867, %v3871
    %v3876 = vand.u32 2147483647, %v3821
    %vm3877 = vcmp.eq.f32.partialorder %v3876, 8.507059e+37
    %v3878 = vand.u32 %v3821, 2147483648
    %v3879 = vor.u32 1.1754944e-38, %v3878
    %v3880 = vsel %vm3877, %v3879, %v3875
    %v3881 = vmul.f32 1.0, %v3880
    %v3882 = vmul.f32 %v3756, %v3251
    %v3883 = vmul.f32 %v3771, %v3252
    %v3884 = vmul.f32 %v3786, %v3253
    %v3885 = vmul.f32 %v3801, %v3254
    %v3886 = vmul.f32 %v3680, %v3802
    %v3887 = vmul.f32 %v3695, %v3803
    %v3888 = vmul.f32 %v3710, %v3804
    %v3889 = vmul.f32 %v3725, %v3805
    %v3890 = vadd.f32 %v3882, %v3886
    %v3891 = vadd.f32 %v3883, %v3887
    %v3892 = vadd.f32 %v3884, %v3888
    %v3893 = vadd.f32 %v3885, %v3889
    %v3894 = vtanh.pop %v3890
    %v3895 = vtanh.pop %v3891
    %v3896 = vtanh.pop %v3892
    %v3897 = vtanh.pop %v3893
    %v3898 = vmul.f32 %v3836, %v3894
    %v3899 = vmul.f32 %v3851, %v3895
    %v3900 = vmul.f32 %v3866, %v3896
    %v3901 = vmul.f32 %v3881, %v3897
    %v3902 = vmul.f32 %v3898, %v254
    %v3903 = vmul.f32 %v3899, %v259
    %v3904 = vmul.f32 %v3900, %v264
    %v3905 = vmul.f32 %v3901, %v269
    %v3906 = vsel %vm1348, %v3902, 0.0
    %v3907 = vsel %vm1348, %v3903, 0.0
    %v3908 = vadd.f32 %v3906, %v3907
    %v3909 = vsel %vm1348, %v3904, 0.0
    %v3910 = vadd.f32 %v3908, %v3909
    %v3911 = vsel %vm1348, %v3905, 0.0
    %v3912 = vadd.f32 %v3910, %v3911
    %v3913 = vrot.slane %v3912, 4
    %v3914 = vadd.f32 %v3912, %v3913
    %v3915 = vrot.slane %v3914, 2
    %v3916 = vadd.f32 %v3914, %v3915
    %v3917 = vrot.slane %v3916, 1
    %v3918 = vadd.f32 %v3916, %v3917
    %v3919 = vadd.f32 %v3918, %v277
    %v3920 = vmax.f32 %v3919, 0.0
    %3921 = vst.msk [vmem:[#allocation3 + $0x4] sm:$0x1] %vm1364, %v3920
    %s3922 = scalar_lea.vmem %s0, 48
    %v3923 = vld [vmem:[%s3922] sm:$0xff]
    %3924 = vmatpush.msra.mxu0 0.0
    %3925 = vmatpush.msra.mxu0 0.0
    %3926 = vmatpush.msra.mxu0 0.0
    %3927 = vmatpush.msra.mxu0 0.0
    %3928 = vmatpush.msra.mxu0 0.0
    %3929 = vmatpush.msra.mxu0 0.0
    %3930 = vmatpush.msra.mxu0 0.0
    %3931 = vmatpush.msra.mxu0 %v3901
    %3932 = vmatpush.msra.mxu0 %v3900
    %3933 = vmatpush.msra.mxu0 %v3899
    %3934 = vmatpush.msra.mxu0 %v3898
    %3935 = vmatpush.msra.mxu0 %v3649
    %3936 = vmatpush.msra.mxu0 %v3648
    %3937 = vmatpush.msra.mxu0 %v3647
    %3938 = vmatpush.msra.mxu0 %v3646
    %3939 = vmatpush.msra.mxu0 %v3923
    %3940 = vmatmul.f32.gmra.mxu0 %v281
    %v3941 = vpop.f32.mrf.mxu0
    %v3942 = vadd.f32 %v90, %v3941
    %3943 = vmatmul.f32.gmra.mxu0 %v284
    %v3944 = vpop.f32.mrf.mxu0
    %v3945 = vadd.f32 %v95, %v3944
    %3946 = vmatmul.f32.gmra.mxu0 %v287
    %v3947 = vpop.f32.mrf.mxu0
    %v3948 = vadd.f32 %v100, %v3947
    %3949 = vmatmul.f32.gmra.mxu0 %v290
    %v3950 = vpop.f32.mrf.mxu0
    %v3951 = vadd.f32 %v105, %v3950
    %3952 = vmatmul.f32.gmra.mxu0 %v293
    %v3953 = vpop.f32.mrf.mxu0
    %v3954 = vadd.f32 %v110, %v3953
    %3955 = vmatmul.f32.gmra.mxu0 %v296
    %v3956 = vpop.f32.mrf.mxu0
    %v3957 = vadd.f32 %v115, %v3956
    %3958 = vmatmul.f32.gmra.mxu0 %v299
    %v3959 = vpop.f32.mrf.mxu0
    %v3960 = vadd.f32 %v120, %v3959
    %3961 = vmatmul.f32.gmra.mxu0 %v302
    %v3962 = vpop.f32.mrf.mxu0
    %v3963 = vadd.f32 %v125, %v3962
    %3964 = vmatmul.f32.gmra.mxu0 %v305
    %v3965 = vpop.f32.mrf.mxu0
    %v3966 = vadd.f32 %v130, %v3965
    %3967 = vmatmul.f32.gmra.mxu0 %v308
    %v3968 = vpop.f32.mrf.mxu0
    %v3969 = vadd.f32 %v135, %v3968
    %3970 = vmatmul.f32.gmra.mxu0 %v311
    %v3971 = vpop.f32.mrf.mxu0
    %v3972 = vadd.f32 %v140, %v3971
    %3973 = vmatmul.f32.gmra.mxu0 %v314
    %v3974 = vpop.f32.mrf.mxu0
    %v3975 = vadd.f32 %v145, %v3974
    %3976 = vmatmul.f32.gmra.mxu0 %v317
    %v3977 = vpop.f32.mrf.mxu0
    %v3978 = vadd.f32 %v150, %v3977
    %3979 = vmatmul.f32.gmra.mxu0 %v320
    %v3980 = vpop.f32.mrf.mxu0
    %v3981 = vadd.f32 %v155, %v3980
    %3982 = vmatmul.f32.gmra.mxu0 %v323
    %v3983 = vpop.f32.mrf.mxu0
    %v3984 = vadd.f32 %v160, %v3983
    %3985 = vmatmul.f32.gmra.mxu0 %v326
    %v3986 = vpop.f32.mrf.mxu0
    %v3987 = vadd.f32 %v165, %v3986
    %3988 = vmatmul.f32.gmra.mxu0 %v329
    %v3989 = vpop.f32.mrf.mxu0
    %v3990 = vadd.f32 %v170, %v3989
    %3991 = vmatmul.f32.gmra.mxu0 %v332
    %v3992 = vpop.f32.mrf.mxu0
    %v3993 = vadd.f32 %v175, %v3992
    %3994 = vmatmul.f32.gmra.mxu0 %v335
    %v3995 = vpop.f32.mrf.mxu0
    %v3996 = vadd.f32 %v180, %v3995
    %3997 = vmatmul.f32.gmra.mxu0 %v338
    %v3998 = vpop.f32.mrf.mxu0
    %v3999 = vadd.f32 %v185, %v3998
    %4000 = vmatmul.f32.gmra.mxu0 %v341
    %v4001 = vpop.f32.mrf.mxu0
    %v4002 = vadd.f32 %v190, %v4001
    %4003 = vmatmul.f32.gmra.mxu0 %v344
    %v4004 = vpop.f32.mrf.mxu0
    %v4005 = vadd.f32 %v195, %v4004
    %4006 = vmatmul.f32.gmra.mxu0 %v347
    %v4007 = vpop.f32.mrf.mxu0
    %v4008 = vadd.f32 %v200, %v4007
    %4009 = vmatmul.f32.gmra.mxu0 %v350
    %v4010 = vpop.f32.mrf.mxu0
    %v4011 = vadd.f32 %v205, %v4010
    %4012 = vmatmul.f32.gmra.mxu0 %v353
    %v4013 = vpop.f32.mrf.mxu0
    %v4014 = vadd.f32 %v210, %v4013
    %4015 = vmatmul.f32.gmra.mxu0 %v356
    %v4016 = vpop.f32.mrf.mxu0
    %v4017 = vadd.f32 %v215, %v4016
    %4018 = vmatmul.f32.gmra.mxu0 %v359
    %v4019 = vpop.f32.mrf.mxu0
    %v4020 = vadd.f32 %v220, %v4019
    %4021 = vmatmul.f32.gmra.mxu0 %v362
    %v4022 = vpop.f32.mrf.mxu0
    %v4023 = vadd.f32 %v225, %v4022
    %4024 = vmatmul.f32.gmra.mxu0 %v365
    %v4025 = vpop.f32.mrf.mxu0
    %v4026 = vadd.f32 %v230, %v4025
    %4027 = vmatmul.f32.gmra.mxu0 %v368
    %v4028 = vpop.f32.mrf.mxu0
    %v4029 = vadd.f32 %v235, %v4028
    %4030 = vmatmul.f32.gmra.mxu0 %v371
    %v4031 = vpop.f32.mrf.mxu0
    %v4032 = vadd.f32 %v240, %v4031
    %4033 = vmatmul.f32.gmra.mxu0 %v374
    %v4034 = vpop.f32.mrf.mxu0
    %v4035 = vadd.f32 %v245, %v4034
    %4036 = vdwg.mxu0
    %v4037 = vxor.u32 %v3942, 2147483648
    %v4038 = vxor.u32 %v3945, 2147483648
    %v4039 = vxor.u32 %v3948, 2147483648
    %v4040 = vxor.u32 %v3951, 2147483648
    %v4041 = vmul.f32 %v4037, 1.442695
    %v4042 = vpow.pop %v4041
    %v4043 = vmul.f32 %v4038, 1.442695
    %v4044 = vpow.pop %v4043
    %v4045 = vmul.f32 %v4039, 1.442695
    %v4046 = vpow.pop %v4045
    %v4047 = vmul.f32 %v4040, 1.442695
    %v4048 = vpow.pop %v4047
    %v4049 = vadd.f32 %v4042, 1.0
    %v4050 = vadd.f32 %v4044, 1.0
    %v4051 = vadd.f32 %v4046, 1.0
    %v4052 = vadd.f32 %v4048, 1.0
    %v4053 = vrcp.pop %v4049
    %v4054 = vmul.f32 %v4049, %v4053
    %v4055 = vsub.f32 1.0, %v4054
    %v4056 = vmul.f32 %v4053, %v4055
    %v4057 = vadd.f32 %v4053, %v4056
    %vm4058 = vweird.f32 %v4049
    %vm4059 = vweird.f32 %v4053
    %vm4060 = vmor %vm4058, %vm4059
    %v4061 = vsel %vm4060, %v4053, %v4057
    %v4062 = vand.u32 2147483647, %v4049
    %vm4063 = vcmp.eq.f32.partialorder %v4062, 8.507059e+37
    %v4064 = vand.u32 %v4049, 2147483648
    %v4065 = vor.u32 1.1754944e-38, %v4064
    %v4066 = vsel %vm4063, %v4065, %v4061
    %v4067 = vmul.f32 1.0, %v4066
    %v4068 = vrcp.pop %v4050
    %v4069 = vmul.f32 %v4050, %v4068
    %v4070 = vsub.f32 1.0, %v4069
    %v4071 = vmul.f32 %v4068, %v4070
    %v4072 = vadd.f32 %v4068, %v4071
    %vm4073 = vweird.f32 %v4050
    %vm4074 = vweird.f32 %v4068
    %vm4075 = vmor %vm4073, %vm4074
    %v4076 = vsel %vm4075, %v4068, %v4072
    %v4077 = vand.u32 2147483647, %v4050
    %vm4078 = vcmp.eq.f32.partialorder %v4077, 8.507059e+37
    %v4079 = vand.u32 %v4050, 2147483648
    %v4080 = vor.u32 1.1754944e-38, %v4079
    %v4081 = vsel %vm4078, %v4080, %v4076
    %v4082 = vmul.f32 1.0, %v4081
    %v4083 = vrcp.pop %v4051
    %v4084 = vmul.f32 %v4051, %v4083
    %v4085 = vsub.f32 1.0, %v4084
    %v4086 = vmul.f32 %v4083, %v4085
    %v4087 = vadd.f32 %v4083, %v4086
    %vm4088 = vweird.f32 %v4051
    %vm4089 = vweird.f32 %v4083
    %vm4090 = vmor %vm4088, %vm4089
    %v4091 = vsel %vm4090, %v4083, %v4087
    %v4092 = vand.u32 2147483647, %v4051
    %vm4093 = vcmp.eq.f32.partialorder %v4092, 8.507059e+37
    %v4094 = vand.u32 %v4051, 2147483648
    %v4095 = vor.u32 1.1754944e-38, %v4094
    %v4096 = vsel %vm4093, %v4095, %v4091
    %v4097 = vmul.f32 1.0, %v4096
    %v4098 = vrcp.pop %v4052
    %v4099 = vmul.f32 %v4052, %v4098
    %v4100 = vsub.f32 1.0, %v4099
    %v4101 = vmul.f32 %v4098, %v4100
    %v4102 = vadd.f32 %v4098, %v4101
    %vm4103 = vweird.f32 %v4052
    %vm4104 = vweird.f32 %v4098
    %vm4105 = vmor %vm4103, %vm4104
    %v4106 = vsel %vm4105, %v4098, %v4102
    %v4107 = vand.u32 2147483647, %v4052
    %vm4108 = vcmp.eq.f32.partialorder %v4107, 8.507059e+37
    %v4109 = vand.u32 %v4052, 2147483648
    %v4110 = vor.u32 1.1754944e-38, %v4109
    %v4111 = vsel %vm4108, %v4110, %v4106
    %v4112 = vmul.f32 1.0, %v4111
    %v4113 = vxor.u32 %v3954, 2147483648
    %v4114 = vxor.u32 %v3957, 2147483648
    %v4115 = vxor.u32 %v3960, 2147483648
    %v4116 = vxor.u32 %v3963, 2147483648
    %v4117 = vmul.f32 %v4113, 1.442695
    %v4118 = vpow.pop %v4117
    %v4119 = vmul.f32 %v4114, 1.442695
    %v4120 = vpow.pop %v4119
    %v4121 = vmul.f32 %v4115, 1.442695
    %v4122 = vpow.pop %v4121
    %v4123 = vmul.f32 %v4116, 1.442695
    %v4124 = vpow.pop %v4123
    %v4125 = vadd.f32 %v4118, 1.0
    %v4126 = vadd.f32 %v4120, 1.0
    %v4127 = vadd.f32 %v4122, 1.0
    %v4128 = vadd.f32 %v4124, 1.0
    %v4129 = vrcp.pop %v4125
    %v4130 = vmul.f32 %v4125, %v4129
    %v4131 = vsub.f32 1.0, %v4130
    %v4132 = vmul.f32 %v4129, %v4131
    %v4133 = vadd.f32 %v4129, %v4132
    %vm4134 = vweird.f32 %v4125
    %vm4135 = vweird.f32 %v4129
    %vm4136 = vmor %vm4134, %vm4135
    %v4137 = vsel %vm4136, %v4129, %v4133
    %v4138 = vand.u32 2147483647, %v4125
    %vm4139 = vcmp.eq.f32.partialorder %v4138, 8.507059e+37
    %v4140 = vand.u32 %v4125, 2147483648
    %v4141 = vor.u32 1.1754944e-38, %v4140
    %v4142 = vsel %vm4139, %v4141, %v4137
    %v4143 = vmul.f32 1.0, %v4142
    %v4144 = vrcp.pop %v4126
    %v4145 = vmul.f32 %v4126, %v4144
    %v4146 = vsub.f32 1.0, %v4145
    %v4147 = vmul.f32 %v4144, %v4146
    %v4148 = vadd.f32 %v4144, %v4147
    %vm4149 = vweird.f32 %v4126
    %vm4150 = vweird.f32 %v4144
    %vm4151 = vmor %vm4149, %vm4150
    %v4152 = vsel %vm4151, %v4144, %v4148
    %v4153 = vand.u32 2147483647, %v4126
    %vm4154 = vcmp.eq.f32.partialorder %v4153, 8.507059e+37
    %v4155 = vand.u32 %v4126, 2147483648
    %v4156 = vor.u32 1.1754944e-38, %v4155
    %v4157 = vsel %vm4154, %v4156, %v4152
    %v4158 = vmul.f32 1.0, %v4157
    %v4159 = vrcp.pop %v4127
    %v4160 = vmul.f32 %v4127, %v4159
    %v4161 = vsub.f32 1.0, %v4160
    %v4162 = vmul.f32 %v4159, %v4161
    %v4163 = vadd.f32 %v4159, %v4162
    %vm4164 = vweird.f32 %v4127
    %vm4165 = vweird.f32 %v4159
    %vm4166 = vmor %vm4164, %vm4165
    %v4167 = vsel %vm4166, %v4159, %v4163
    %v4168 = vand.u32 2147483647, %v4127
    %vm4169 = vcmp.eq.f32.partialorder %v4168, 8.507059e+37
    %v4170 = vand.u32 %v4127, 2147483648
    %v4171 = vor.u32 1.1754944e-38, %v4170
    %v4172 = vsel %vm4169, %v4171, %v4167
    %v4173 = vmul.f32 1.0, %v4172
    %v4174 = vrcp.pop %v4128
    %v4175 = vmul.f32 %v4128, %v4174
    %v4176 = vsub.f32 1.0, %v4175
    %v4177 = vmul.f32 %v4174, %v4176
    %v4178 = vadd.f32 %v4174, %v4177
    %vm4179 = vweird.f32 %v4128
    %vm4180 = vweird.f32 %v4174
    %vm4181 = vmor %vm4179, %vm4180
    %v4182 = vsel %vm4181, %v4174, %v4178
    %v4183 = vand.u32 2147483647, %v4128
    %vm4184 = vcmp.eq.f32.partialorder %v4183, 8.507059e+37
    %v4185 = vand.u32 %v4128, 2147483648
    %v4186 = vor.u32 1.1754944e-38, %v4185
    %v4187 = vsel %vm4184, %v4186, %v4182
    %v4188 = vmul.f32 1.0, %v4187
    %v4189 = vtanh.pop %v3966
    %v4190 = vtanh.pop %v3969
    %v4191 = vtanh.pop %v3972
    %v4192 = vtanh.pop %v3975
    %v4193 = vxor.u32 %v3978, 2147483648
    %v4194 = vxor.u32 %v3981, 2147483648
    %v4195 = vxor.u32 %v3984, 2147483648
    %v4196 = vxor.u32 %v3987, 2147483648
    %v4197 = vmul.f32 %v4193, 1.442695
    %v4198 = vpow.pop %v4197
    %v4199 = vmul.f32 %v4194, 1.442695
    %v4200 = vpow.pop %v4199
    %v4201 = vmul.f32 %v4195, 1.442695
    %v4202 = vpow.pop %v4201
    %v4203 = vmul.f32 %v4196, 1.442695
    %v4204 = vpow.pop %v4203
    %v4205 = vadd.f32 %v4198, 1.0
    %v4206 = vadd.f32 %v4200, 1.0
    %v4207 = vadd.f32 %v4202, 1.0
    %v4208 = vadd.f32 %v4204, 1.0
    %v4209 = vrcp.pop %v4205
    %v4210 = vmul.f32 %v4205, %v4209
    %v4211 = vsub.f32 1.0, %v4210
    %v4212 = vmul.f32 %v4209, %v4211
    %v4213 = vadd.f32 %v4209, %v4212
    %vm4214 = vweird.f32 %v4205
    %vm4215 = vweird.f32 %v4209
    %vm4216 = vmor %vm4214, %vm4215
    %v4217 = vsel %vm4216, %v4209, %v4213
    %v4218 = vand.u32 2147483647, %v4205
    %vm4219 = vcmp.eq.f32.partialorder %v4218, 8.507059e+37
    %v4220 = vand.u32 %v4205, 2147483648
    %v4221 = vor.u32 1.1754944e-38, %v4220
    %v4222 = vsel %vm4219, %v4221, %v4217
    %v4223 = vmul.f32 1.0, %v4222
    %v4224 = vrcp.pop %v4206
    %v4225 = vmul.f32 %v4206, %v4224
    %v4226 = vsub.f32 1.0, %v4225
    %v4227 = vmul.f32 %v4224, %v4226
    %v4228 = vadd.f32 %v4224, %v4227
    %vm4229 = vweird.f32 %v4206
    %vm4230 = vweird.f32 %v4224
    %vm4231 = vmor %vm4229, %vm4230
    %v4232 = vsel %vm4231, %v4224, %v4228
    %v4233 = vand.u32 2147483647, %v4206
    %vm4234 = vcmp.eq.f32.partialorder %v4233, 8.507059e+37
    %v4235 = vand.u32 %v4206, 2147483648
    %v4236 = vor.u32 1.1754944e-38, %v4235
    %v4237 = vsel %vm4234, %v4236, %v4232
    %v4238 = vmul.f32 1.0, %v4237
    %v4239 = vrcp.pop %v4207
    %v4240 = vmul.f32 %v4207, %v4239
    %v4241 = vsub.f32 1.0, %v4240
    %v4242 = vmul.f32 %v4239, %v4241
    %v4243 = vadd.f32 %v4239, %v4242
    %vm4244 = vweird.f32 %v4207
    %vm4245 = vweird.f32 %v4239
    %vm4246 = vmor %vm4244, %vm4245
    %v4247 = vsel %vm4246, %v4239, %v4243
    %v4248 = vand.u32 2147483647, %v4207
    %vm4249 = vcmp.eq.f32.partialorder %v4248, 8.507059e+37
    %v4250 = vand.u32 %v4207, 2147483648
    %v4251 = vor.u32 1.1754944e-38, %v4250
    %v4252 = vsel %vm4249, %v4251, %v4247
    %v4253 = vmul.f32 1.0, %v4252
    %v4254 = vrcp.pop %v4208
    %v4255 = vmul.f32 %v4208, %v4254
    %v4256 = vsub.f32 1.0, %v4255
    %v4257 = vmul.f32 %v4254, %v4256
    %v4258 = vadd.f32 %v4254, %v4257
    %vm4259 = vweird.f32 %v4208
    %vm4260 = vweird.f32 %v4254
    %vm4261 = vmor %vm4259, %vm4260
    %v4262 = vsel %vm4261, %v4254, %v4258
    %v4263 = vand.u32 2147483647, %v4208
    %vm4264 = vcmp.eq.f32.partialorder %v4263, 8.507059e+37
    %v4265 = vand.u32 %v4208, 2147483648
    %v4266 = vor.u32 1.1754944e-38, %v4265
    %v4267 = vsel %vm4264, %v4266, %v4262
    %v4268 = vmul.f32 1.0, %v4267
    %v4269 = vmul.f32 %v4143, %v3638
    %v4270 = vmul.f32 %v4158, %v3639
    %v4271 = vmul.f32 %v4173, %v3640
    %v4272 = vmul.f32 %v4188, %v3641
    %v4273 = vmul.f32 %v4067, %v4189
    %v4274 = vmul.f32 %v4082, %v4190
    %v4275 = vmul.f32 %v4097, %v4191
    %v4276 = vmul.f32 %v4112, %v4192
    %v4277 = vadd.f32 %v4269, %v4273
    %v4278 = vadd.f32 %v4270, %v4274
    %v4279 = vadd.f32 %v4271, %v4275
    %v4280 = vadd.f32 %v4272, %v4276
    %v4281 = vtanh.pop %v4277
    %v4282 = vtanh.pop %v4278
    %v4283 = vtanh.pop %v4279
    %v4284 = vtanh.pop %v4280
    %v4285 = vmul.f32 %v4223, %v4281
    %v4286 = vmul.f32 %v4238, %v4282
    %v4287 = vmul.f32 %v4253, %v4283
    %v4288 = vmul.f32 %v4268, %v4284
    %v4289 = vxor.u32 %v3990, 2147483648
    %v4290 = vxor.u32 %v3993, 2147483648
    %v4291 = vxor.u32 %v3996, 2147483648
    %v4292 = vxor.u32 %v3999, 2147483648
    %v4293 = vmul.f32 %v4289, 1.442695
    %v4294 = vpow.pop %v4293
    %v4295 = vmul.f32 %v4290, 1.442695
    %v4296 = vpow.pop %v4295
    %v4297 = vmul.f32 %v4291, 1.442695
    %v4298 = vpow.pop %v4297
    %v4299 = vmul.f32 %v4292, 1.442695
    %v4300 = vpow.pop %v4299
    %v4301 = vadd.f32 %v4294, 1.0
    %v4302 = vadd.f32 %v4296, 1.0
    %v4303 = vadd.f32 %v4298, 1.0
    %v4304 = vadd.f32 %v4300, 1.0
    %v4305 = vrcp.pop %v4301
    %v4306 = vmul.f32 %v4301, %v4305
    %v4307 = vsub.f32 1.0, %v4306
    %v4308 = vmul.f32 %v4305, %v4307
    %v4309 = vadd.f32 %v4305, %v4308
    %vm4310 = vweird.f32 %v4301
    %vm4311 = vweird.f32 %v4305
    %vm4312 = vmor %vm4310, %vm4311
    %v4313 = vsel %vm4312, %v4305, %v4309
    %v4314 = vand.u32 2147483647, %v4301
    %vm4315 = vcmp.eq.f32.partialorder %v4314, 8.507059e+37
    %v4316 = vand.u32 %v4301, 2147483648
    %v4317 = vor.u32 1.1754944e-38, %v4316
    %v4318 = vsel %vm4315, %v4317, %v4313
    %v4319 = vmul.f32 1.0, %v4318
    %v4320 = vrcp.pop %v4302
    %v4321 = vmul.f32 %v4302, %v4320
    %v4322 = vsub.f32 1.0, %v4321
    %v4323 = vmul.f32 %v4320, %v4322
    %v4324 = vadd.f32 %v4320, %v4323
    %vm4325 = vweird.f32 %v4302
    %vm4326 = vweird.f32 %v4320
    %vm4327 = vmor %vm4325, %vm4326
    %v4328 = vsel %vm4327, %v4320, %v4324
    %v4329 = vand.u32 2147483647, %v4302
    %vm4330 = vcmp.eq.f32.partialorder %v4329, 8.507059e+37
    %v4331 = vand.u32 %v4302, 2147483648
    %v4332 = vor.u32 1.1754944e-38, %v4331
    %v4333 = vsel %vm4330, %v4332, %v4328
    %v4334 = vmul.f32 1.0, %v4333
    %v4335 = vrcp.pop %v4303
    %v4336 = vmul.f32 %v4303, %v4335
    %v4337 = vsub.f32 1.0, %v4336
    %v4338 = vmul.f32 %v4335, %v4337
    %v4339 = vadd.f32 %v4335, %v4338
    %vm4340 = vweird.f32 %v4303
    %vm4341 = vweird.f32 %v4335
    %vm4342 = vmor %vm4340, %vm4341
    %v4343 = vsel %vm4342, %v4335, %v4339
    %v4344 = vand.u32 2147483647, %v4303
    %vm4345 = vcmp.eq.f32.partialorder %v4344, 8.507059e+37
    %v4346 = vand.u32 %v4303, 2147483648
    %v4347 = vor.u32 1.1754944e-38, %v4346
    %v4348 = vsel %vm4345, %v4347, %v4343
    %v4349 = vmul.f32 1.0, %v4348
    %v4350 = vrcp.pop %v4304
    %v4351 = vmul.f32 %v4304, %v4350
    %v4352 = vsub.f32 1.0, %v4351
    %v4353 = vmul.f32 %v4350, %v4352
    %v4354 = vadd.f32 %v4350, %v4353
    %vm4355 = vweird.f32 %v4304
    %vm4356 = vweird.f32 %v4350
    %vm4357 = vmor %vm4355, %vm4356
    %v4358 = vsel %vm4357, %v4350, %v4354
    %v4359 = vand.u32 2147483647, %v4304
    %vm4360 = vcmp.eq.f32.partialorder %v4359, 8.507059e+37
    %v4361 = vand.u32 %v4304, 2147483648
    %v4362 = vor.u32 1.1754944e-38, %v4361
    %v4363 = vsel %vm4360, %v4362, %v4358
    %v4364 = vmul.f32 1.0, %v4363
    %v4365 = vxor.u32 %v4002, 2147483648
    %v4366 = vxor.u32 %v4005, 2147483648
    %v4367 = vxor.u32 %v4008, 2147483648
    %v4368 = vxor.u32 %v4011, 2147483648
    %v4369 = vmul.f32 %v4365, 1.442695
    %v4370 = vpow.pop %v4369
    %v4371 = vmul.f32 %v4366, 1.442695
    %v4372 = vpow.pop %v4371
    %v4373 = vmul.f32 %v4367, 1.442695
    %v4374 = vpow.pop %v4373
    %v4375 = vmul.f32 %v4368, 1.442695
    %v4376 = vpow.pop %v4375
    %v4377 = vadd.f32 %v4370, 1.0
    %v4378 = vadd.f32 %v4372, 1.0
    %v4379 = vadd.f32 %v4374, 1.0
    %v4380 = vadd.f32 %v4376, 1.0
    %v4381 = vrcp.pop %v4377
    %v4382 = vmul.f32 %v4377, %v4381
    %v4383 = vsub.f32 1.0, %v4382
    %v4384 = vmul.f32 %v4381, %v4383
    %v4385 = vadd.f32 %v4381, %v4384
    %vm4386 = vweird.f32 %v4377
    %vm4387 = vweird.f32 %v4381
    %vm4388 = vmor %vm4386, %vm4387
    %v4389 = vsel %vm4388, %v4381, %v4385
    %v4390 = vand.u32 2147483647, %v4377
    %vm4391 = vcmp.eq.f32.partialorder %v4390, 8.507059e+37
    %v4392 = vand.u32 %v4377, 2147483648
    %v4393 = vor.u32 1.1754944e-38, %v4392
    %v4394 = vsel %vm4391, %v4393, %v4389
    %v4395 = vmul.f32 1.0, %v4394
    %v4396 = vrcp.pop %v4378
    %v4397 = vmul.f32 %v4378, %v4396
    %v4398 = vsub.f32 1.0, %v4397
    %v4399 = vmul.f32 %v4396, %v4398
    %v4400 = vadd.f32 %v4396, %v4399
    %vm4401 = vweird.f32 %v4378
    %vm4402 = vweird.f32 %v4396
    %vm4403 = vmor %vm4401, %vm4402
    %v4404 = vsel %vm4403, %v4396, %v4400
    %v4405 = vand.u32 2147483647, %v4378
    %vm4406 = vcmp.eq.f32.partialorder %v4405, 8.507059e+37
    %v4407 = vand.u32 %v4378, 2147483648
    %v4408 = vor.u32 1.1754944e-38, %v4407
    %v4409 = vsel %vm4406, %v4408, %v4404
    %v4410 = vmul.f32 1.0, %v4409
    %v4411 = vrcp.pop %v4379
    %v4412 = vmul.f32 %v4379, %v4411
    %v4413 = vsub.f32 1.0, %v4412
    %v4414 = vmul.f32 %v4411, %v4413
    %v4415 = vadd.f32 %v4411, %v4414
    %vm4416 = vweird.f32 %v4379
    %vm4417 = vweird.f32 %v4411
    %vm4418 = vmor %vm4416, %vm4417
    %v4419 = vsel %vm4418, %v4411, %v4415
    %v4420 = vand.u32 2147483647, %v4379
    %vm4421 = vcmp.eq.f32.partialorder %v4420, 8.507059e+37
    %v4422 = vand.u32 %v4379, 2147483648
    %v4423 = vor.u32 1.1754944e-38, %v4422
    %v4424 = vsel %vm4421, %v4423, %v4419
    %v4425 = vmul.f32 1.0, %v4424
    %v4426 = vrcp.pop %v4380
    %v4427 = vmul.f32 %v4380, %v4426
    %v4428 = vsub.f32 1.0, %v4427
    %v4429 = vmul.f32 %v4426, %v4428
    %v4430 = vadd.f32 %v4426, %v4429
    %vm4431 = vweird.f32 %v4380
    %vm4432 = vweird.f32 %v4426
    %vm4433 = vmor %vm4431, %vm4432
    %v4434 = vsel %vm4433, %v4426, %v4430
    %v4435 = vand.u32 2147483647, %v4380
    %vm4436 = vcmp.eq.f32.partialorder %v4435, 8.507059e+37
    %v4437 = vand.u32 %v4380, 2147483648
    %v4438 = vor.u32 1.1754944e-38, %v4437
    %v4439 = vsel %vm4436, %v4438, %v4434
    %v4440 = vmul.f32 1.0, %v4439
    %v4441 = vtanh.pop %v4014
    %v4442 = vtanh.pop %v4017
    %v4443 = vtanh.pop %v4020
    %v4444 = vtanh.pop %v4023
    %v4445 = vxor.u32 %v4026, 2147483648
    %v4446 = vxor.u32 %v4029, 2147483648
    %v4447 = vxor.u32 %v4032, 2147483648
    %v4448 = vxor.u32 %v4035, 2147483648
    %v4449 = vmul.f32 %v4445, 1.442695
    %v4450 = vpow.pop %v4449
    %v4451 = vmul.f32 %v4446, 1.442695
    %v4452 = vpow.pop %v4451
    %v4453 = vmul.f32 %v4447, 1.442695
    %v4454 = vpow.pop %v4453
    %v4455 = vmul.f32 %v4448, 1.442695
    %v4456 = vpow.pop %v4455
    %v4457 = vadd.f32 %v4450, 1.0
    %v4458 = vadd.f32 %v4452, 1.0
    %v4459 = vadd.f32 %v4454, 1.0
    %v4460 = vadd.f32 %v4456, 1.0
    %v4461 = vrcp.pop %v4457
    %v4462 = vmul.f32 %v4457, %v4461
    %v4463 = vsub.f32 1.0, %v4462
    %v4464 = vmul.f32 %v4461, %v4463
    %v4465 = vadd.f32 %v4461, %v4464
    %vm4466 = vweird.f32 %v4457
    %vm4467 = vweird.f32 %v4461
    %vm4468 = vmor %vm4466, %vm4467
    %v4469 = vsel %vm4468, %v4461, %v4465
    %v4470 = vand.u32 2147483647, %v4457
    %vm4471 = vcmp.eq.f32.partialorder %v4470, 8.507059e+37
    %v4472 = vand.u32 %v4457, 2147483648
    %v4473 = vor.u32 1.1754944e-38, %v4472
    %v4474 = vsel %vm4471, %v4473, %v4469
    %v4475 = vmul.f32 1.0, %v4474
    %v4476 = vrcp.pop %v4458
    %v4477 = vmul.f32 %v4458, %v4476
    %v4478 = vsub.f32 1.0, %v4477
    %v4479 = vmul.f32 %v4476, %v4478
    %v4480 = vadd.f32 %v4476, %v4479
    %vm4481 = vweird.f32 %v4458
    %vm4482 = vweird.f32 %v4476
    %vm4483 = vmor %vm4481, %vm4482
    %v4484 = vsel %vm4483, %v4476, %v4480
    %v4485 = vand.u32 2147483647, %v4458
    %vm4486 = vcmp.eq.f32.partialorder %v4485, 8.507059e+37
    %v4487 = vand.u32 %v4458, 2147483648
    %v4488 = vor.u32 1.1754944e-38, %v4487
    %v4489 = vsel %vm4486, %v4488, %v4484
    %v4490 = vmul.f32 1.0, %v4489
    %v4491 = vrcp.pop %v4459
    %v4492 = vmul.f32 %v4459, %v4491
    %v4493 = vsub.f32 1.0, %v4492
    %v4494 = vmul.f32 %v4491, %v4493
    %v4495 = vadd.f32 %v4491, %v4494
    %vm4496 = vweird.f32 %v4459
    %vm4497 = vweird.f32 %v4491
    %vm4498 = vmor %vm4496, %vm4497
    %v4499 = vsel %vm4498, %v4491, %v4495
    %v4500 = vand.u32 2147483647, %v4459
    %vm4501 = vcmp.eq.f32.partialorder %v4500, 8.507059e+37
    %v4502 = vand.u32 %v4459, 2147483648
    %v4503 = vor.u32 1.1754944e-38, %v4502
    %v4504 = vsel %vm4501, %v4503, %v4499
    %v4505 = vmul.f32 1.0, %v4504
    %v4506 = vrcp.pop %v4460
    %v4507 = vmul.f32 %v4460, %v4506
    %v4508 = vsub.f32 1.0, %v4507
    %v4509 = vmul.f32 %v4506, %v4508
    %v4510 = vadd.f32 %v4506, %v4509
    %vm4511 = vweird.f32 %v4460
    %vm4512 = vweird.f32 %v4506
    %vm4513 = vmor %vm4511, %vm4512
    %v4514 = vsel %vm4513, %v4506, %v4510
    %v4515 = vand.u32 2147483647, %v4460
    %vm4516 = vcmp.eq.f32.partialorder %v4515, 8.507059e+37
    %v4517 = vand.u32 %v4460, 2147483648
    %v4518 = vor.u32 1.1754944e-38, %v4517
    %v4519 = vsel %vm4516, %v4518, %v4514
    %v4520 = vmul.f32 1.0, %v4519
    %v4521 = vmul.f32 %v4395, %v3890
    %v4522 = vmul.f32 %v4410, %v3891
    %v4523 = vmul.f32 %v4425, %v3892
    %v4524 = vmul.f32 %v4440, %v3893
    %v4525 = vmul.f32 %v4319, %v4441
    %v4526 = vmul.f32 %v4334, %v4442
    %v4527 = vmul.f32 %v4349, %v4443
    %v4528 = vmul.f32 %v4364, %v4444
    %v4529 = vadd.f32 %v4521, %v4525
    %v4530 = vadd.f32 %v4522, %v4526
    %v4531 = vadd.f32 %v4523, %v4527
    %v4532 = vadd.f32 %v4524, %v4528
    %v4533 = vtanh.pop %v4529
    %v4534 = vtanh.pop %v4530
    %v4535 = vtanh.pop %v4531
    %v4536 = vtanh.pop %v4532
    %v4537 = vmul.f32 %v4475, %v4533
    %v4538 = vmul.f32 %v4490, %v4534
    %v4539 = vmul.f32 %v4505, %v4535
    %v4540 = vmul.f32 %v4520, %v4536
    %v4541 = vmul.f32 %v4537, %v254
    %v4542 = vmul.f32 %v4538, %v259
    %v4543 = vmul.f32 %v4539, %v264
    %v4544 = vmul.f32 %v4540, %v269
    %v4545 = vsel %vm1348, %v4541, 0.0
    %v4546 = vsel %vm1348, %v4542, 0.0
    %v4547 = vadd.f32 %v4545, %v4546
    %v4548 = vsel %vm1348, %v4543, 0.0
    %v4549 = vadd.f32 %v4547, %v4548
    %v4550 = vsel %vm1348, %v4544, 0.0
    %v4551 = vadd.f32 %v4549, %v4550
    %v4552 = vrot.slane %v4551, 4
    %v4553 = vadd.f32 %v4551, %v4552
    %v4554 = vrot.slane %v4553, 2
    %v4555 = vadd.f32 %v4553, %v4554
    %v4556 = vrot.slane %v4555, 1
    %v4557 = vadd.f32 %v4555, %v4556
    %v4558 = vadd.f32 %v4557, %v277
    %v4559 = vmax.f32 %v4558, 0.0
    %4560 = vst.msk [vmem:[#allocation3 + $0x5] sm:$0x1] %vm1364, %v4559
    %s4561 = scalar_lea.vmem %s0, 56
    %v4562 = vld [vmem:[%s4561] sm:$0xff]
    %4563 = vmatpush.msra.mxu0 0.0
    %4564 = vmatpush.msra.mxu0 0.0
    %4565 = vmatpush.msra.mxu0 0.0
    %4566 = vmatpush.msra.mxu0 0.0
    %4567 = vmatpush.msra.mxu0 0.0
    %4568 = vmatpush.msra.mxu0 0.0
    %4569 = vmatpush.msra.mxu0 0.0
    %4570 = vmatpush.msra.mxu0 %v4540
    %4571 = vmatpush.msra.mxu0 %v4539
    %4572 = vmatpush.msra.mxu0 %v4538
    %4573 = vmatpush.msra.mxu0 %v4537
    %4574 = vmatpush.msra.mxu0 %v4288
    %4575 = vmatpush.msra.mxu0 %v4287
    %4576 = vmatpush.msra.mxu0 %v4286
    %4577 = vmatpush.msra.mxu0 %v4285
    %4578 = vmatpush.msra.mxu0 %v4562
    %4579 = vmatmul.f32.gmra.mxu0 %v281
    %v4580 = vpop.f32.mrf.mxu0
    %v4581 = vadd.f32 %v90, %v4580
    %4582 = vmatmul.f32.gmra.mxu0 %v284
    %v4583 = vpop.f32.mrf.mxu0
    %v4584 = vadd.f32 %v95, %v4583
    %4585 = vmatmul.f32.gmra.mxu0 %v287
    %v4586 = vpop.f32.mrf.mxu0
    %v4587 = vadd.f32 %v100, %v4586
    %4588 = vmatmul.f32.gmra.mxu0 %v290
    %v4589 = vpop.f32.mrf.mxu0
    %v4590 = vadd.f32 %v105, %v4589
    %4591 = vmatmul.f32.gmra.mxu0 %v293
    %v4592 = vpop.f32.mrf.mxu0
    %v4593 = vadd.f32 %v110, %v4592
    %4594 = vmatmul.f32.gmra.mxu0 %v296
    %v4595 = vpop.f32.mrf.mxu0
    %v4596 = vadd.f32 %v115, %v4595
    %4597 = vmatmul.f32.gmra.mxu0 %v299
    %v4598 = vpop.f32.mrf.mxu0
    %v4599 = vadd.f32 %v120, %v4598
    %4600 = vmatmul.f32.gmra.mxu0 %v302
    %v4601 = vpop.f32.mrf.mxu0
    %v4602 = vadd.f32 %v125, %v4601
    %4603 = vmatmul.f32.gmra.mxu0 %v305
    %v4604 = vpop.f32.mrf.mxu0
    %v4605 = vadd.f32 %v130, %v4604
    %4606 = vmatmul.f32.gmra.mxu0 %v308
    %v4607 = vpop.f32.mrf.mxu0
    %v4608 = vadd.f32 %v135, %v4607
    %4609 = vmatmul.f32.gmra.mxu0 %v311
    %v4610 = vpop.f32.mrf.mxu0
    %v4611 = vadd.f32 %v140, %v4610
    %4612 = vmatmul.f32.gmra.mxu0 %v314
    %v4613 = vpop.f32.mrf.mxu0
    %v4614 = vadd.f32 %v145, %v4613
    %4615 = vmatmul.f32.gmra.mxu0 %v317
    %v4616 = vpop.f32.mrf.mxu0
    %v4617 = vadd.f32 %v150, %v4616
    %4618 = vmatmul.f32.gmra.mxu0 %v320
    %v4619 = vpop.f32.mrf.mxu0
    %v4620 = vadd.f32 %v155, %v4619
    %4621 = vmatmul.f32.gmra.mxu0 %v323
    %v4622 = vpop.f32.mrf.mxu0
    %v4623 = vadd.f32 %v160, %v4622
    %4624 = vmatmul.f32.gmra.mxu0 %v326
    %v4625 = vpop.f32.mrf.mxu0
    %v4626 = vadd.f32 %v165, %v4625
    %4627 = vmatmul.f32.gmra.mxu0 %v329
    %v4628 = vpop.f32.mrf.mxu0
    %v4629 = vadd.f32 %v170, %v4628
    %4630 = vmatmul.f32.gmra.mxu0 %v332
    %v4631 = vpop.f32.mrf.mxu0
    %v4632 = vadd.f32 %v175, %v4631
    %4633 = vmatmul.f32.gmra.mxu0 %v335
    %v4634 = vpop.f32.mrf.mxu0
    %v4635 = vadd.f32 %v180, %v4634
    %4636 = vmatmul.f32.gmra.mxu0 %v338
    %v4637 = vpop.f32.mrf.mxu0
    %v4638 = vadd.f32 %v185, %v4637
    %4639 = vmatmul.f32.gmra.mxu0 %v341
    %v4640 = vpop.f32.mrf.mxu0
    %v4641 = vadd.f32 %v190, %v4640
    %4642 = vmatmul.f32.gmra.mxu0 %v344
    %v4643 = vpop.f32.mrf.mxu0
    %v4644 = vadd.f32 %v195, %v4643
    %4645 = vmatmul.f32.gmra.mxu0 %v347
    %v4646 = vpop.f32.mrf.mxu0
    %v4647 = vadd.f32 %v200, %v4646
    %4648 = vmatmul.f32.gmra.mxu0 %v350
    %v4649 = vpop.f32.mrf.mxu0
    %v4650 = vadd.f32 %v205, %v4649
    %4651 = vmatmul.f32.gmra.mxu0 %v353
    %v4652 = vpop.f32.mrf.mxu0
    %v4653 = vadd.f32 %v210, %v4652
    %4654 = vmatmul.f32.gmra.mxu0 %v356
    %v4655 = vpop.f32.mrf.mxu0
    %v4656 = vadd.f32 %v215, %v4655
    %4657 = vmatmul.f32.gmra.mxu0 %v359
    %v4658 = vpop.f32.mrf.mxu0
    %v4659 = vadd.f32 %v220, %v4658
    %4660 = vmatmul.f32.gmra.mxu0 %v362
    %v4661 = vpop.f32.mrf.mxu0
    %v4662 = vadd.f32 %v225, %v4661
    %4663 = vmatmul.f32.gmra.mxu0 %v365
    %v4664 = vpop.f32.mrf.mxu0
    %v4665 = vadd.f32 %v230, %v4664
    %4666 = vmatmul.f32.gmra.mxu0 %v368
    %v4667 = vpop.f32.mrf.mxu0
    %v4668 = vadd.f32 %v235, %v4667
    %4669 = vmatmul.f32.gmra.mxu0 %v371
    %v4670 = vpop.f32.mrf.mxu0
    %v4671 = vadd.f32 %v240, %v4670
    %4672 = vmatmul.f32.gmra.mxu0 %v374
    %v4673 = vpop.f32.mrf.mxu0
    %v4674 = vadd.f32 %v245, %v4673
    %4675 = vdwg.mxu0
    %v4676 = vxor.u32 %v4581, 2147483648
    %v4677 = vxor.u32 %v4584, 2147483648
    %v4678 = vxor.u32 %v4587, 2147483648
    %v4679 = vxor.u32 %v4590, 2147483648
    %v4680 = vmul.f32 %v4676, 1.442695
    %v4681 = vpow.pop %v4680
    %v4682 = vmul.f32 %v4677, 1.442695
    %v4683 = vpow.pop %v4682
    %v4684 = vmul.f32 %v4678, 1.442695
    %v4685 = vpow.pop %v4684
    %v4686 = vmul.f32 %v4679, 1.442695
    %v4687 = vpow.pop %v4686
    %v4688 = vadd.f32 %v4681, 1.0
    %v4689 = vadd.f32 %v4683, 1.0
    %v4690 = vadd.f32 %v4685, 1.0
    %v4691 = vadd.f32 %v4687, 1.0
    %v4692 = vrcp.pop %v4688
    %v4693 = vmul.f32 %v4688, %v4692
    %v4694 = vsub.f32 1.0, %v4693
    %v4695 = vmul.f32 %v4692, %v4694
    %v4696 = vadd.f32 %v4692, %v4695
    %vm4697 = vweird.f32 %v4688
    %vm4698 = vweird.f32 %v4692
    %vm4699 = vmor %vm4697, %vm4698
    %v4700 = vsel %vm4699, %v4692, %v4696
    %v4701 = vand.u32 2147483647, %v4688
    %vm4702 = vcmp.eq.f32.partialorder %v4701, 8.507059e+37
    %v4703 = vand.u32 %v4688, 2147483648
    %v4704 = vor.u32 1.1754944e-38, %v4703
    %v4705 = vsel %vm4702, %v4704, %v4700
    %v4706 = vmul.f32 1.0, %v4705
    %v4707 = vrcp.pop %v4689
    %v4708 = vmul.f32 %v4689, %v4707
    %v4709 = vsub.f32 1.0, %v4708
    %v4710 = vmul.f32 %v4707, %v4709
    %v4711 = vadd.f32 %v4707, %v4710
    %vm4712 = vweird.f32 %v4689
    %vm4713 = vweird.f32 %v4707
    %vm4714 = vmor %vm4712, %vm4713
    %v4715 = vsel %vm4714, %v4707, %v4711
    %v4716 = vand.u32 2147483647, %v4689
    %vm4717 = vcmp.eq.f32.partialorder %v4716, 8.507059e+37
    %v4718 = vand.u32 %v4689, 2147483648
    %v4719 = vor.u32 1.1754944e-38, %v4718
    %v4720 = vsel %vm4717, %v4719, %v4715
    %v4721 = vmul.f32 1.0, %v4720
    %v4722 = vrcp.pop %v4690
    %v4723 = vmul.f32 %v4690, %v4722
    %v4724 = vsub.f32 1.0, %v4723
    %v4725 = vmul.f32 %v4722, %v4724
    %v4726 = vadd.f32 %v4722, %v4725
    %vm4727 = vweird.f32 %v4690
    %vm4728 = vweird.f32 %v4722
    %vm4729 = vmor %vm4727, %vm4728
    %v4730 = vsel %vm4729, %v4722, %v4726
    %v4731 = vand.u32 2147483647, %v4690
    %vm4732 = vcmp.eq.f32.partialorder %v4731, 8.507059e+37
    %v4733 = vand.u32 %v4690, 2147483648
    %v4734 = vor.u32 1.1754944e-38, %v4733
    %v4735 = vsel %vm4732, %v4734, %v4730
    %v4736 = vmul.f32 1.0, %v4735
    %v4737 = vrcp.pop %v4691
    %v4738 = vmul.f32 %v4691, %v4737
    %v4739 = vsub.f32 1.0, %v4738
    %v4740 = vmul.f32 %v4737, %v4739
    %v4741 = vadd.f32 %v4737, %v4740
    %vm4742 = vweird.f32 %v4691
    %vm4743 = vweird.f32 %v4737
    %vm4744 = vmor %vm4742, %vm4743
    %v4745 = vsel %vm4744, %v4737, %v4741
    %v4746 = vand.u32 2147483647, %v4691
    %vm4747 = vcmp.eq.f32.partialorder %v4746, 8.507059e+37
    %v4748 = vand.u32 %v4691, 2147483648
    %v4749 = vor.u32 1.1754944e-38, %v4748
    %v4750 = vsel %vm4747, %v4749, %v4745
    %v4751 = vmul.f32 1.0, %v4750
    %v4752 = vxor.u32 %v4593, 2147483648
    %v4753 = vxor.u32 %v4596, 2147483648
    %v4754 = vxor.u32 %v4599, 2147483648
    %v4755 = vxor.u32 %v4602, 2147483648
    %v4756 = vmul.f32 %v4752, 1.442695
    %v4757 = vpow.pop %v4756
    %v4758 = vmul.f32 %v4753, 1.442695
    %v4759 = vpow.pop %v4758
    %v4760 = vmul.f32 %v4754, 1.442695
    %v4761 = vpow.pop %v4760
    %v4762 = vmul.f32 %v4755, 1.442695
    %v4763 = vpow.pop %v4762
    %v4764 = vadd.f32 %v4757, 1.0
    %v4765 = vadd.f32 %v4759, 1.0
    %v4766 = vadd.f32 %v4761, 1.0
    %v4767 = vadd.f32 %v4763, 1.0
    %v4768 = vrcp.pop %v4764
    %v4769 = vmul.f32 %v4764, %v4768
    %v4770 = vsub.f32 1.0, %v4769
    %v4771 = vmul.f32 %v4768, %v4770
    %v4772 = vadd.f32 %v4768, %v4771
    %vm4773 = vweird.f32 %v4764
    %vm4774 = vweird.f32 %v4768
    %vm4775 = vmor %vm4773, %vm4774
    %v4776 = vsel %vm4775, %v4768, %v4772
    %v4777 = vand.u32 2147483647, %v4764
    %vm4778 = vcmp.eq.f32.partialorder %v4777, 8.507059e+37
    %v4779 = vand.u32 %v4764, 2147483648
    %v4780 = vor.u32 1.1754944e-38, %v4779
    %v4781 = vsel %vm4778, %v4780, %v4776
    %v4782 = vmul.f32 1.0, %v4781
    %v4783 = vrcp.pop %v4765
    %v4784 = vmul.f32 %v4765, %v4783
    %v4785 = vsub.f32 1.0, %v4784
    %v4786 = vmul.f32 %v4783, %v4785
    %v4787 = vadd.f32 %v4783, %v4786
    %vm4788 = vweird.f32 %v4765
    %vm4789 = vweird.f32 %v4783
    %vm4790 = vmor %vm4788, %vm4789
    %v4791 = vsel %vm4790, %v4783, %v4787
    %v4792 = vand.u32 2147483647, %v4765
    %vm4793 = vcmp.eq.f32.partialorder %v4792, 8.507059e+37
    %v4794 = vand.u32 %v4765, 2147483648
    %v4795 = vor.u32 1.1754944e-38, %v4794
    %v4796 = vsel %vm4793, %v4795, %v4791
    %v4797 = vmul.f32 1.0, %v4796
    %v4798 = vrcp.pop %v4766
    %v4799 = vmul.f32 %v4766, %v4798
    %v4800 = vsub.f32 1.0, %v4799
    %v4801 = vmul.f32 %v4798, %v4800
    %v4802 = vadd.f32 %v4798, %v4801
    %vm4803 = vweird.f32 %v4766
    %vm4804 = vweird.f32 %v4798
    %vm4805 = vmor %vm4803, %vm4804
    %v4806 = vsel %vm4805, %v4798, %v4802
    %v4807 = vand.u32 2147483647, %v4766
    %vm4808 = vcmp.eq.f32.partialorder %v4807, 8.507059e+37
    %v4809 = vand.u32 %v4766, 2147483648
    %v4810 = vor.u32 1.1754944e-38, %v4809
    %v4811 = vsel %vm4808, %v4810, %v4806
    %v4812 = vmul.f32 1.0, %v4811
    %v4813 = vrcp.pop %v4767
    %v4814 = vmul.f32 %v4767, %v4813
    %v4815 = vsub.f32 1.0, %v4814
    %v4816 = vmul.f32 %v4813, %v4815
    %v4817 = vadd.f32 %v4813, %v4816
    %vm4818 = vweird.f32 %v4767
    %vm4819 = vweird.f32 %v4813
    %vm4820 = vmor %vm4818, %vm4819
    %v4821 = vsel %vm4820, %v4813, %v4817
    %v4822 = vand.u32 2147483647, %v4767
    %vm4823 = vcmp.eq.f32.partialorder %v4822, 8.507059e+37
    %v4824 = vand.u32 %v4767, 2147483648
    %v4825 = vor.u32 1.1754944e-38, %v4824
    %v4826 = vsel %vm4823, %v4825, %v4821
    %v4827 = vmul.f32 1.0, %v4826
    %v4828 = vtanh.pop %v4605
    %v4829 = vtanh.pop %v4608
    %v4830 = vtanh.pop %v4611
    %v4831 = vtanh.pop %v4614
    %v4832 = vxor.u32 %v4617, 2147483648
    %v4833 = vxor.u32 %v4620, 2147483648
    %v4834 = vxor.u32 %v4623, 2147483648
    %v4835 = vxor.u32 %v4626, 2147483648
    %v4836 = vmul.f32 %v4832, 1.442695
    %v4837 = vpow.pop %v4836
    %v4838 = vmul.f32 %v4833, 1.442695
    %v4839 = vpow.pop %v4838
    %v4840 = vmul.f32 %v4834, 1.442695
    %v4841 = vpow.pop %v4840
    %v4842 = vmul.f32 %v4835, 1.442695
    %v4843 = vpow.pop %v4842
    %v4844 = vadd.f32 %v4837, 1.0
    %v4845 = vadd.f32 %v4839, 1.0
    %v4846 = vadd.f32 %v4841, 1.0
    %v4847 = vadd.f32 %v4843, 1.0
    %v4848 = vrcp.pop %v4844
    %v4849 = vmul.f32 %v4844, %v4848
    %v4850 = vsub.f32 1.0, %v4849
    %v4851 = vmul.f32 %v4848, %v4850
    %v4852 = vadd.f32 %v4848, %v4851
    %vm4853 = vweird.f32 %v4844
    %vm4854 = vweird.f32 %v4848
    %vm4855 = vmor %vm4853, %vm4854
    %v4856 = vsel %vm4855, %v4848, %v4852
    %v4857 = vand.u32 2147483647, %v4844
    %vm4858 = vcmp.eq.f32.partialorder %v4857, 8.507059e+37
    %v4859 = vand.u32 %v4844, 2147483648
    %v4860 = vor.u32 1.1754944e-38, %v4859
    %v4861 = vsel %vm4858, %v4860, %v4856
    %v4862 = vmul.f32 1.0, %v4861
    %v4863 = vrcp.pop %v4845
    %v4864 = vmul.f32 %v4845, %v4863
    %v4865 = vsub.f32 1.0, %v4864
    %v4866 = vmul.f32 %v4863, %v4865
    %v4867 = vadd.f32 %v4863, %v4866
    %vm4868 = vweird.f32 %v4845
    %vm4869 = vweird.f32 %v4863
    %vm4870 = vmor %vm4868, %vm4869
    %v4871 = vsel %vm4870, %v4863, %v4867
    %v4872 = vand.u32 2147483647, %v4845
    %vm4873 = vcmp.eq.f32.partialorder %v4872, 8.507059e+37
    %v4874 = vand.u32 %v4845, 2147483648
    %v4875 = vor.u32 1.1754944e-38, %v4874
    %v4876 = vsel %vm4873, %v4875, %v4871
    %v4877 = vmul.f32 1.0, %v4876
    %v4878 = vrcp.pop %v4846
    %v4879 = vmul.f32 %v4846, %v4878
    %v4880 = vsub.f32 1.0, %v4879
    %v4881 = vmul.f32 %v4878, %v4880
    %v4882 = vadd.f32 %v4878, %v4881
    %vm4883 = vweird.f32 %v4846
    %vm4884 = vweird.f32 %v4878
    %vm4885 = vmor %vm4883, %vm4884
    %v4886 = vsel %vm4885, %v4878, %v4882
    %v4887 = vand.u32 2147483647, %v4846
    %vm4888 = vcmp.eq.f32.partialorder %v4887, 8.507059e+37
    %v4889 = vand.u32 %v4846, 2147483648
    %v4890 = vor.u32 1.1754944e-38, %v4889
    %v4891 = vsel %vm4888, %v4890, %v4886
    %v4892 = vmul.f32 1.0, %v4891
    %v4893 = vrcp.pop %v4847
    %v4894 = vmul.f32 %v4847, %v4893
    %v4895 = vsub.f32 1.0, %v4894
    %v4896 = vmul.f32 %v4893, %v4895
    %v4897 = vadd.f32 %v4893, %v4896
    %vm4898 = vweird.f32 %v4847
    %vm4899 = vweird.f32 %v4893
    %vm4900 = vmor %vm4898, %vm4899
    %v4901 = vsel %vm4900, %v4893, %v4897
    %v4902 = vand.u32 2147483647, %v4847
    %vm4903 = vcmp.eq.f32.partialorder %v4902, 8.507059e+37
    %v4904 = vand.u32 %v4847, 2147483648
    %v4905 = vor.u32 1.1754944e-38, %v4904
    %v4906 = vsel %vm4903, %v4905, %v4901
    %v4907 = vmul.f32 1.0, %v4906
    %v4908 = vmul.f32 %v4782, %v4277
    %v4909 = vmul.f32 %v4797, %v4278
    %v4910 = vmul.f32 %v4812, %v4279
    %v4911 = vmul.f32 %v4827, %v4280
    %v4912 = vmul.f32 %v4706, %v4828
    %v4913 = vmul.f32 %v4721, %v4829
    %v4914 = vmul.f32 %v4736, %v4830
    %v4915 = vmul.f32 %v4751, %v4831
    %v4916 = vadd.f32 %v4908, %v4912
    %v4917 = vadd.f32 %v4909, %v4913
    %v4918 = vadd.f32 %v4910, %v4914
    %v4919 = vadd.f32 %v4911, %v4915
    %v4920 = vtanh.pop %v4916
    %v4921 = vtanh.pop %v4917
    %v4922 = vtanh.pop %v4918
    %v4923 = vtanh.pop %v4919
    %v4924 = vmul.f32 %v4862, %v4920
    %v4925 = vmul.f32 %v4877, %v4921
    %v4926 = vmul.f32 %v4892, %v4922
    %v4927 = vmul.f32 %v4907, %v4923
    %v4928 = vxor.u32 %v4629, 2147483648
    %v4929 = vxor.u32 %v4632, 2147483648
    %v4930 = vxor.u32 %v4635, 2147483648
    %v4931 = vxor.u32 %v4638, 2147483648
    %v4932 = vmul.f32 %v4928, 1.442695
    %v4933 = vpow.pop %v4932
    %v4934 = vmul.f32 %v4929, 1.442695
    %v4935 = vpow.pop %v4934
    %v4936 = vmul.f32 %v4930, 1.442695
    %v4937 = vpow.pop %v4936
    %v4938 = vmul.f32 %v4931, 1.442695
    %v4939 = vpow.pop %v4938
    %v4940 = vadd.f32 %v4933, 1.0
    %v4941 = vadd.f32 %v4935, 1.0
    %v4942 = vadd.f32 %v4937, 1.0
    %v4943 = vadd.f32 %v4939, 1.0
    %v4944 = vrcp.pop %v4940
    %v4945 = vmul.f32 %v4940, %v4944
    %v4946 = vsub.f32 1.0, %v4945
    %v4947 = vmul.f32 %v4944, %v4946
    %v4948 = vadd.f32 %v4944, %v4947
    %vm4949 = vweird.f32 %v4940
    %vm4950 = vweird.f32 %v4944
    %vm4951 = vmor %vm4949, %vm4950
    %v4952 = vsel %vm4951, %v4944, %v4948
    %v4953 = vand.u32 2147483647, %v4940
    %vm4954 = vcmp.eq.f32.partialorder %v4953, 8.507059e+37
    %v4955 = vand.u32 %v4940, 2147483648
    %v4956 = vor.u32 1.1754944e-38, %v4955
    %v4957 = vsel %vm4954, %v4956, %v4952
    %v4958 = vmul.f32 1.0, %v4957
    %v4959 = vrcp.pop %v4941
    %v4960 = vmul.f32 %v4941, %v4959
    %v4961 = vsub.f32 1.0, %v4960
    %v4962 = vmul.f32 %v4959, %v4961
    %v4963 = vadd.f32 %v4959, %v4962
    %vm4964 = vweird.f32 %v4941
    %vm4965 = vweird.f32 %v4959
    %vm4966 = vmor %vm4964, %vm4965
    %v4967 = vsel %vm4966, %v4959, %v4963
    %v4968 = vand.u32 2147483647, %v4941
    %vm4969 = vcmp.eq.f32.partialorder %v4968, 8.507059e+37
    %v4970 = vand.u32 %v4941, 2147483648
    %v4971 = vor.u32 1.1754944e-38, %v4970
    %v4972 = vsel %vm4969, %v4971, %v4967
    %v4973 = vmul.f32 1.0, %v4972
    %v4974 = vrcp.pop %v4942
    %v4975 = vmul.f32 %v4942, %v4974
    %v4976 = vsub.f32 1.0, %v4975
    %v4977 = vmul.f32 %v4974, %v4976
    %v4978 = vadd.f32 %v4974, %v4977
    %vm4979 = vweird.f32 %v4942
    %vm4980 = vweird.f32 %v4974
    %vm4981 = vmor %vm4979, %vm4980
    %v4982 = vsel %vm4981, %v4974, %v4978
    %v4983 = vand.u32 2147483647, %v4942
    %vm4984 = vcmp.eq.f32.partialorder %v4983, 8.507059e+37
    %v4985 = vand.u32 %v4942, 2147483648
    %v4986 = vor.u32 1.1754944e-38, %v4985
    %v4987 = vsel %vm4984, %v4986, %v4982
    %v4988 = vmul.f32 1.0, %v4987
    %v4989 = vrcp.pop %v4943
    %v4990 = vmul.f32 %v4943, %v4989
    %v4991 = vsub.f32 1.0, %v4990
    %v4992 = vmul.f32 %v4989, %v4991
    %v4993 = vadd.f32 %v4989, %v4992
    %vm4994 = vweird.f32 %v4943
    %vm4995 = vweird.f32 %v4989
    %vm4996 = vmor %vm4994, %vm4995
    %v4997 = vsel %vm4996, %v4989, %v4993
    %v4998 = vand.u32 2147483647, %v4943
    %vm4999 = vcmp.eq.f32.partialorder %v4998, 8.507059e+37
    %v5000 = vand.u32 %v4943, 2147483648
    %v5001 = vor.u32 1.1754944e-38, %v5000
    %v5002 = vsel %vm4999, %v5001, %v4997
    %v5003 = vmul.f32 1.0, %v5002
    %v5004 = vxor.u32 %v4641, 2147483648
    %v5005 = vxor.u32 %v4644, 2147483648
    %v5006 = vxor.u32 %v4647, 2147483648
    %v5007 = vxor.u32 %v4650, 2147483648
    %v5008 = vmul.f32 %v5004, 1.442695
    %v5009 = vpow.pop %v5008
    %v5010 = vmul.f32 %v5005, 1.442695
    %v5011 = vpow.pop %v5010
    %v5012 = vmul.f32 %v5006, 1.442695
    %v5013 = vpow.pop %v5012
    %v5014 = vmul.f32 %v5007, 1.442695
    %v5015 = vpow.pop %v5014
    %v5016 = vadd.f32 %v5009, 1.0
    %v5017 = vadd.f32 %v5011, 1.0
    %v5018 = vadd.f32 %v5013, 1.0
    %v5019 = vadd.f32 %v5015, 1.0
    %v5020 = vrcp.pop %v5016
    %v5021 = vmul.f32 %v5016, %v5020
    %v5022 = vsub.f32 1.0, %v5021
    %v5023 = vmul.f32 %v5020, %v5022
    %v5024 = vadd.f32 %v5020, %v5023
    %vm5025 = vweird.f32 %v5016
    %vm5026 = vweird.f32 %v5020
    %vm5027 = vmor %vm5025, %vm5026
    %v5028 = vsel %vm5027, %v5020, %v5024
    %v5029 = vand.u32 2147483647, %v5016
    %vm5030 = vcmp.eq.f32.partialorder %v5029, 8.507059e+37
    %v5031 = vand.u32 %v5016, 2147483648
    %v5032 = vor.u32 1.1754944e-38, %v5031
    %v5033 = vsel %vm5030, %v5032, %v5028
    %v5034 = vmul.f32 1.0, %v5033
    %v5035 = vrcp.pop %v5017
    %v5036 = vmul.f32 %v5017, %v5035
    %v5037 = vsub.f32 1.0, %v5036
    %v5038 = vmul.f32 %v5035, %v5037
    %v5039 = vadd.f32 %v5035, %v5038
    %vm5040 = vweird.f32 %v5017
    %vm5041 = vweird.f32 %v5035
    %vm5042 = vmor %vm5040, %vm5041
    %v5043 = vsel %vm5042, %v5035, %v5039
    %v5044 = vand.u32 2147483647, %v5017
    %vm5045 = vcmp.eq.f32.partialorder %v5044, 8.507059e+37
    %v5046 = vand.u32 %v5017, 2147483648
    %v5047 = vor.u32 1.1754944e-38, %v5046
    %v5048 = vsel %vm5045, %v5047, %v5043
    %v5049 = vmul.f32 1.0, %v5048
    %v5050 = vrcp.pop %v5018
    %v5051 = vmul.f32 %v5018, %v5050
    %v5052 = vsub.f32 1.0, %v5051
    %v5053 = vmul.f32 %v5050, %v5052
    %v5054 = vadd.f32 %v5050, %v5053
    %vm5055 = vweird.f32 %v5018
    %vm5056 = vweird.f32 %v5050
    %vm5057 = vmor %vm5055, %vm5056
    %v5058 = vsel %vm5057, %v5050, %v5054
    %v5059 = vand.u32 2147483647, %v5018
    %vm5060 = vcmp.eq.f32.partialorder %v5059, 8.507059e+37
    %v5061 = vand.u32 %v5018, 2147483648
    %v5062 = vor.u32 1.1754944e-38, %v5061
    %v5063 = vsel %vm5060, %v5062, %v5058
    %v5064 = vmul.f32 1.0, %v5063
    %v5065 = vrcp.pop %v5019
    %v5066 = vmul.f32 %v5019, %v5065
    %v5067 = vsub.f32 1.0, %v5066
    %v5068 = vmul.f32 %v5065, %v5067
    %v5069 = vadd.f32 %v5065, %v5068
    %vm5070 = vweird.f32 %v5019
    %vm5071 = vweird.f32 %v5065
    %vm5072 = vmor %vm5070, %vm5071
    %v5073 = vsel %vm5072, %v5065, %v5069
    %v5074 = vand.u32 2147483647, %v5019
    %vm5075 = vcmp.eq.f32.partialorder %v5074, 8.507059e+37
    %v5076 = vand.u32 %v5019, 2147483648
    %v5077 = vor.u32 1.1754944e-38, %v5076
    %v5078 = vsel %vm5075, %v5077, %v5073
    %v5079 = vmul.f32 1.0, %v5078
    %v5080 = vtanh.pop %v4653
    %v5081 = vtanh.pop %v4656
    %v5082 = vtanh.pop %v4659
    %v5083 = vtanh.pop %v4662
    %v5084 = vxor.u32 %v4665, 2147483648
    %v5085 = vxor.u32 %v4668, 2147483648
    %v5086 = vxor.u32 %v4671, 2147483648
    %v5087 = vxor.u32 %v4674, 2147483648
    %v5088 = vmul.f32 %v5084, 1.442695
    %v5089 = vpow.pop %v5088
    %v5090 = vmul.f32 %v5085, 1.442695
    %v5091 = vpow.pop %v5090
    %v5092 = vmul.f32 %v5086, 1.442695
    %v5093 = vpow.pop %v5092
    %v5094 = vmul.f32 %v5087, 1.442695
    %v5095 = vpow.pop %v5094
    %v5096 = vadd.f32 %v5089, 1.0
    %v5097 = vadd.f32 %v5091, 1.0
    %v5098 = vadd.f32 %v5093, 1.0
    %v5099 = vadd.f32 %v5095, 1.0
    %v5100 = vrcp.pop %v5096
    %v5101 = vmul.f32 %v5096, %v5100
    %v5102 = vsub.f32 1.0, %v5101
    %v5103 = vmul.f32 %v5100, %v5102
    %v5104 = vadd.f32 %v5100, %v5103
    %vm5105 = vweird.f32 %v5096
    %vm5106 = vweird.f32 %v5100
    %vm5107 = vmor %vm5105, %vm5106
    %v5108 = vsel %vm5107, %v5100, %v5104
    %v5109 = vand.u32 2147483647, %v5096
    %vm5110 = vcmp.eq.f32.partialorder %v5109, 8.507059e+37
    %v5111 = vand.u32 %v5096, 2147483648
    %v5112 = vor.u32 1.1754944e-38, %v5111
    %v5113 = vsel %vm5110, %v5112, %v5108
    %v5114 = vmul.f32 1.0, %v5113
    %v5115 = vrcp.pop %v5097
    %v5116 = vmul.f32 %v5097, %v5115
    %v5117 = vsub.f32 1.0, %v5116
    %v5118 = vmul.f32 %v5115, %v5117
    %v5119 = vadd.f32 %v5115, %v5118
    %vm5120 = vweird.f32 %v5097
    %vm5121 = vweird.f32 %v5115
    %vm5122 = vmor %vm5120, %vm5121
    %v5123 = vsel %vm5122, %v5115, %v5119
    %v5124 = vand.u32 2147483647, %v5097
    %vm5125 = vcmp.eq.f32.partialorder %v5124, 8.507059e+37
    %v5126 = vand.u32 %v5097, 2147483648
    %v5127 = vor.u32 1.1754944e-38, %v5126
    %v5128 = vsel %vm5125, %v5127, %v5123
    %v5129 = vmul.f32 1.0, %v5128
    %v5130 = vrcp.pop %v5098
    %v5131 = vmul.f32 %v5098, %v5130
    %v5132 = vsub.f32 1.0, %v5131
    %v5133 = vmul.f32 %v5130, %v5132
    %v5134 = vadd.f32 %v5130, %v5133
    %vm5135 = vweird.f32 %v5098
    %vm5136 = vweird.f32 %v5130
    %vm5137 = vmor %vm5135, %vm5136
    %v5138 = vsel %vm5137, %v5130, %v5134
    %v5139 = vand.u32 2147483647, %v5098
    %vm5140 = vcmp.eq.f32.partialorder %v5139, 8.507059e+37
    %v5141 = vand.u32 %v5098, 2147483648
    %v5142 = vor.u32 1.1754944e-38, %v5141
    %v5143 = vsel %vm5140, %v5142, %v5138
    %v5144 = vmul.f32 1.0, %v5143
    %v5145 = vrcp.pop %v5099
    %v5146 = vmul.f32 %v5099, %v5145
    %v5147 = vsub.f32 1.0, %v5146
    %v5148 = vmul.f32 %v5145, %v5147
    %v5149 = vadd.f32 %v5145, %v5148
    %vm5150 = vweird.f32 %v5099
    %vm5151 = vweird.f32 %v5145
    %vm5152 = vmor %vm5150, %vm5151
    %v5153 = vsel %vm5152, %v5145, %v5149
    %v5154 = vand.u32 2147483647, %v5099
    %vm5155 = vcmp.eq.f32.partialorder %v5154, 8.507059e+37
    %v5156 = vand.u32 %v5099, 2147483648
    %v5157 = vor.u32 1.1754944e-38, %v5156
    %v5158 = vsel %vm5155, %v5157, %v5153
    %v5159 = vmul.f32 1.0, %v5158
    %v5160 = vmul.f32 %v5034, %v4529
    %v5161 = vmul.f32 %v5049, %v4530
    %v5162 = vmul.f32 %v5064, %v4531
    %v5163 = vmul.f32 %v5079, %v4532
    %v5164 = vmul.f32 %v4958, %v5080
    %v5165 = vmul.f32 %v4973, %v5081
    %v5166 = vmul.f32 %v4988, %v5082
    %v5167 = vmul.f32 %v5003, %v5083
    %v5168 = vadd.f32 %v5160, %v5164
    %v5169 = vadd.f32 %v5161, %v5165
    %v5170 = vadd.f32 %v5162, %v5166
    %v5171 = vadd.f32 %v5163, %v5167
    %v5172 = vtanh.pop %v5168
    %v5173 = vtanh.pop %v5169
    %v5174 = vtanh.pop %v5170
    %v5175 = vtanh.pop %v5171
    %v5176 = vmul.f32 %v5114, %v5172
    %v5177 = vmul.f32 %v5129, %v5173
    %v5178 = vmul.f32 %v5144, %v5174
    %v5179 = vmul.f32 %v5159, %v5175
    %v5180 = vmul.f32 %v5176, %v254
    %v5181 = vmul.f32 %v5177, %v259
    %v5182 = vmul.f32 %v5178, %v264
    %v5183 = vmul.f32 %v5179, %v269
    %v5184 = vsel %vm1348, %v5180, 0.0
    %v5185 = vsel %vm1348, %v5181, 0.0
    %v5186 = vadd.f32 %v5184, %v5185
    %v5187 = vsel %vm1348, %v5182, 0.0
    %v5188 = vadd.f32 %v5186, %v5187
    %v5189 = vsel %vm1348, %v5183, 0.0
    %v5190 = vadd.f32 %v5188, %v5189
    %v5191 = vrot.slane %v5190, 4
    %v5192 = vadd.f32 %v5190, %v5191
    %v5193 = vrot.slane %v5192, 2
    %v5194 = vadd.f32 %v5192, %v5193
    %v5195 = vrot.slane %v5194, 1
    %v5196 = vadd.f32 %v5194, %v5195
    %v5197 = vadd.f32 %v5196, %v277
    %v5198 = vmax.f32 %v5197, 0.0
    %5199 = vst.msk [vmem:[#allocation3 + $0x6] sm:$0x1] %vm1364, %v5198
    %5200 = vmatpush.msra.mxu0 0.0
    %5201 = vmatpush.msra.mxu0 0.0
    %5202 = vmatpush.msra.mxu0 0.0
    %5203 = vmatpush.msra.mxu0 0.0
    %5204 = vmatpush.msra.mxu0 0.0
    %5205 = vmatpush.msra.mxu0 0.0
    %5206 = vmatpush.msra.mxu0 0.0
    %5207 = vmatpush.msra.mxu0 %v5179
    %5208 = vmatpush.msra.mxu0 %v5178
    %5209 = vmatpush.msra.mxu0 %v5177
    %5210 = vmatpush.msra.mxu0 %v5176
    %5211 = vmatpush.msra.mxu0 %v4927
    %5212 = vmatpush.msra.mxu0 %v4926
    %5213 = vmatpush.msra.mxu0 %v4925
    %5214 = vmatpush.msra.mxu0 %v4924
    %5215 = vmatpush.msra.mxu0 0.0
    %5216 = vmatmul.f32.gmra.mxu0 %v281
    %v5217 = vpop.f32.mrf.mxu0
    %5218 = vmatmul.f32.gmra.mxu0 %v284
    %v5219 = vpop.f32.mrf.mxu0
    %5220 = vmatmul.f32.gmra.mxu0 %v287
    %v5221 = vpop.f32.mrf.mxu0
    %5222 = vmatmul.f32.gmra.mxu0 %v290
    %v5223 = vpop.f32.mrf.mxu0
    %5224 = vmatmul.f32.gmra.mxu0 %v293
    %v5225 = vpop.f32.mrf.mxu0
    %5226 = vmatmul.f32.gmra.mxu0 %v296
    %v5227 = vpop.f32.mrf.mxu0
    %5228 = vmatmul.f32.gmra.mxu0 %v299
    %v5229 = vpop.f32.mrf.mxu0
    %5230 = vmatmul.f32.gmra.mxu0 %v302
    %v5231 = vpop.f32.mrf.mxu0
    %5232 = vmatmul.f32.gmra.mxu0 %v305
    %v5233 = vpop.f32.mrf.mxu0
    %5234 = vmatmul.f32.gmra.mxu0 %v308
    %v5235 = vpop.f32.mrf.mxu0
    %5236 = vmatmul.f32.gmra.mxu0 %v311
    %v5237 = vpop.f32.mrf.mxu0
    %5238 = vmatmul.f32.gmra.mxu0 %v314
    %v5239 = vpop.f32.mrf.mxu0
    %5240 = vmatmul.f32.gmra.mxu0 %v317
    %v5241 = vpop.f32.mrf.mxu0
    %5242 = vmatmul.f32.gmra.mxu0 %v320
    %v5243 = vpop.f32.mrf.mxu0
    %5244 = vmatmul.f32.gmra.mxu0 %v323
    %v5245 = vpop.f32.mrf.mxu0
    %5246 = vmatmul.f32.gmra.mxu0 %v326
    %v5247 = vpop.f32.mrf.mxu0
    %5248 = vmatmul.f32.gmra.mxu0 %v329
    %v5249 = vpop.f32.mrf.mxu0
    %v5250 = vadd.f32 %v170, %v5249
    %5251 = vmatmul.f32.gmra.mxu0 %v332
    %v5252 = vpop.f32.mrf.mxu0
    %v5253 = vadd.f32 %v175, %v5252
    %5254 = vmatmul.f32.gmra.mxu0 %v335
    %v5255 = vpop.f32.mrf.mxu0
    %v5256 = vadd.f32 %v180, %v5255
    %5257 = vmatmul.f32.gmra.mxu0 %v338
    %v5258 = vpop.f32.mrf.mxu0
    %v5259 = vadd.f32 %v185, %v5258
    %5260 = vmatmul.f32.gmra.mxu0 %v341
    %v5261 = vpop.f32.mrf.mxu0
    %v5262 = vadd.f32 %v190, %v5261
    %5263 = vmatmul.f32.gmra.mxu0 %v344
    %v5264 = vpop.f32.mrf.mxu0
    %v5265 = vadd.f32 %v195, %v5264
    %5266 = vmatmul.f32.gmra.mxu0 %v347
    %v5267 = vpop.f32.mrf.mxu0
    %v5268 = vadd.f32 %v200, %v5267
    %5269 = vmatmul.f32.gmra.mxu0 %v350
    %v5270 = vpop.f32.mrf.mxu0
    %v5271 = vadd.f32 %v205, %v5270
    %5272 = vmatmul.f32.gmra.mxu0 %v353
    %v5273 = vpop.f32.mrf.mxu0
    %v5274 = vadd.f32 %v210, %v5273
    %5275 = vmatmul.f32.gmra.mxu0 %v356
    %v5276 = vpop.f32.mrf.mxu0
    %v5277 = vadd.f32 %v215, %v5276
    %5278 = vmatmul.f32.gmra.mxu0 %v359
    %v5279 = vpop.f32.mrf.mxu0
    %v5280 = vadd.f32 %v220, %v5279
    %5281 = vmatmul.f32.gmra.mxu0 %v362
    %v5282 = vpop.f32.mrf.mxu0
    %v5283 = vadd.f32 %v225, %v5282
    %5284 = vmatmul.f32.gmra.mxu0 %v365
    %v5285 = vpop.f32.mrf.mxu0
    %v5286 = vadd.f32 %v230, %v5285
    %5287 = vmatmul.f32.gmra.mxu0 %v368
    %v5288 = vpop.f32.mrf.mxu0
    %v5289 = vadd.f32 %v235, %v5288
    %5290 = vmatmul.f32.gmra.mxu0 %v371
    %v5291 = vpop.f32.mrf.mxu0
    %v5292 = vadd.f32 %v240, %v5291
    %5293 = vmatmul.f32.gmra.mxu0 %v374
    %v5294 = vpop.f32.mrf.mxu0
    %v5295 = vadd.f32 %v245, %v5294
    %5296 = vdwg.mxu0
    %v5297 = vxor.u32 %v5250, 2147483648
    %v5298 = vxor.u32 %v5253, 2147483648
    %v5299 = vxor.u32 %v5256, 2147483648
    %v5300 = vxor.u32 %v5259, 2147483648
    %v5301 = vmul.f32 %v5297, 1.442695
    %v5302 = vpow.pop %v5301
    %v5303 = vmul.f32 %v5298, 1.442695
    %v5304 = vpow.pop %v5303
    %v5305 = vmul.f32 %v5299, 1.442695
    %v5306 = vpow.pop %v5305
    %v5307 = vmul.f32 %v5300, 1.442695
    %v5308 = vpow.pop %v5307
    %v5309 = vadd.f32 %v5302, 1.0
    %v5310 = vadd.f32 %v5304, 1.0
    %v5311 = vadd.f32 %v5306, 1.0
    %v5312 = vadd.f32 %v5308, 1.0
    %v5313 = vrcp.pop %v5309
    %v5314 = vmul.f32 %v5309, %v5313
    %v5315 = vsub.f32 1.0, %v5314
    %v5316 = vmul.f32 %v5313, %v5315
    %v5317 = vadd.f32 %v5313, %v5316
    %vm5318 = vweird.f32 %v5309
    %vm5319 = vweird.f32 %v5313
    %vm5320 = vmor %vm5318, %vm5319
    %v5321 = vsel %vm5320, %v5313, %v5317
    %v5322 = vand.u32 2147483647, %v5309
    %vm5323 = vcmp.eq.f32.partialorder %v5322, 8.507059e+37
    %v5324 = vand.u32 %v5309, 2147483648
    %v5325 = vor.u32 1.1754944e-38, %v5324
    %v5326 = vsel %vm5323, %v5325, %v5321
    %v5327 = vmul.f32 1.0, %v5326
    %v5328 = vrcp.pop %v5310
    %v5329 = vmul.f32 %v5310, %v5328
    %v5330 = vsub.f32 1.0, %v5329
    %v5331 = vmul.f32 %v5328, %v5330
    %v5332 = vadd.f32 %v5328, %v5331
    %vm5333 = vweird.f32 %v5310
    %vm5334 = vweird.f32 %v5328
    %vm5335 = vmor %vm5333, %vm5334
    %v5336 = vsel %vm5335, %v5328, %v5332
    %v5337 = vand.u32 2147483647, %v5310
    %vm5338 = vcmp.eq.f32.partialorder %v5337, 8.507059e+37
    %v5339 = vand.u32 %v5310, 2147483648
    %v5340 = vor.u32 1.1754944e-38, %v5339
    %v5341 = vsel %vm5338, %v5340, %v5336
    %v5342 = vmul.f32 1.0, %v5341
    %v5343 = vrcp.pop %v5311
    %v5344 = vmul.f32 %v5311, %v5343
    %v5345 = vsub.f32 1.0, %v5344
    %v5346 = vmul.f32 %v5343, %v5345
    %v5347 = vadd.f32 %v5343, %v5346
    %vm5348 = vweird.f32 %v5311
    %vm5349 = vweird.f32 %v5343
    %vm5350 = vmor %vm5348, %vm5349
    %v5351 = vsel %vm5350, %v5343, %v5347
    %v5352 = vand.u32 2147483647, %v5311
    %vm5353 = vcmp.eq.f32.partialorder %v5352, 8.507059e+37
    %v5354 = vand.u32 %v5311, 2147483648
    %v5355 = vor.u32 1.1754944e-38, %v5354
    %v5356 = vsel %vm5353, %v5355, %v5351
    %v5357 = vmul.f32 1.0, %v5356
    %v5358 = vrcp.pop %v5312
    %v5359 = vmul.f32 %v5312, %v5358
    %v5360 = vsub.f32 1.0, %v5359
    %v5361 = vmul.f32 %v5358, %v5360
    %v5362 = vadd.f32 %v5358, %v5361
    %vm5363 = vweird.f32 %v5312
    %vm5364 = vweird.f32 %v5358
    %vm5365 = vmor %vm5363, %vm5364
    %v5366 = vsel %vm5365, %v5358, %v5362
    %v5367 = vand.u32 2147483647, %v5312
    %vm5368 = vcmp.eq.f32.partialorder %v5367, 8.507059e+37
    %v5369 = vand.u32 %v5312, 2147483648
    %v5370 = vor.u32 1.1754944e-38, %v5369
    %v5371 = vsel %vm5368, %v5370, %v5366
    %v5372 = vmul.f32 1.0, %v5371
    %v5373 = vxor.u32 %v5262, 2147483648
    %v5374 = vxor.u32 %v5265, 2147483648
    %v5375 = vxor.u32 %v5268, 2147483648
    %v5376 = vxor.u32 %v5271, 2147483648
    %v5377 = vmul.f32 %v5373, 1.442695
    %v5378 = vpow.pop %v5377
    %v5379 = vmul.f32 %v5374, 1.442695
    %v5380 = vpow.pop %v5379
    %v5381 = vmul.f32 %v5375, 1.442695
    %v5382 = vpow.pop %v5381
    %v5383 = vmul.f32 %v5376, 1.442695
    %v5384 = vpow.pop %v5383
    %v5385 = vadd.f32 %v5378, 1.0
    %v5386 = vadd.f32 %v5380, 1.0
    %v5387 = vadd.f32 %v5382, 1.0
    %v5388 = vadd.f32 %v5384, 1.0
    %v5389 = vrcp.pop %v5385
    %v5390 = vmul.f32 %v5385, %v5389
    %v5391 = vsub.f32 1.0, %v5390
    %v5392 = vmul.f32 %v5389, %v5391
    %v5393 = vadd.f32 %v5389, %v5392
    %vm5394 = vweird.f32 %v5385
    %vm5395 = vweird.f32 %v5389
    %vm5396 = vmor %vm5394, %vm5395
    %v5397 = vsel %vm5396, %v5389, %v5393
    %v5398 = vand.u32 2147483647, %v5385
    %vm5399 = vcmp.eq.f32.partialorder %v5398, 8.507059e+37
    %v5400 = vand.u32 %v5385, 2147483648
    %v5401 = vor.u32 1.1754944e-38, %v5400
    %v5402 = vsel %vm5399, %v5401, %v5397
    %v5403 = vmul.f32 1.0, %v5402
    %v5404 = vrcp.pop %v5386
    %v5405 = vmul.f32 %v5386, %v5404
    %v5406 = vsub.f32 1.0, %v5405
    %v5407 = vmul.f32 %v5404, %v5406
    %v5408 = vadd.f32 %v5404, %v5407
    %vm5409 = vweird.f32 %v5386
    %vm5410 = vweird.f32 %v5404
    %vm5411 = vmor %vm5409, %vm5410
    %v5412 = vsel %vm5411, %v5404, %v5408
    %v5413 = vand.u32 2147483647, %v5386
    %vm5414 = vcmp.eq.f32.partialorder %v5413, 8.507059e+37
    %v5415 = vand.u32 %v5386, 2147483648
    %v5416 = vor.u32 1.1754944e-38, %v5415
    %v5417 = vsel %vm5414, %v5416, %v5412
    %v5418 = vmul.f32 1.0, %v5417
    %v5419 = vrcp.pop %v5387
    %v5420 = vmul.f32 %v5387, %v5419
    %v5421 = vsub.f32 1.0, %v5420
    %v5422 = vmul.f32 %v5419, %v5421
    %v5423 = vadd.f32 %v5419, %v5422
    %vm5424 = vweird.f32 %v5387
    %vm5425 = vweird.f32 %v5419
    %vm5426 = vmor %vm5424, %vm5425
    %v5427 = vsel %vm5426, %v5419, %v5423
    %v5428 = vand.u32 2147483647, %v5387
    %vm5429 = vcmp.eq.f32.partialorder %v5428, 8.507059e+37
    %v5430 = vand.u32 %v5387, 2147483648
    %v5431 = vor.u32 1.1754944e-38, %v5430
    %v5432 = vsel %vm5429, %v5431, %v5427
    %v5433 = vmul.f32 1.0, %v5432
    %v5434 = vrcp.pop %v5388
    %v5435 = vmul.f32 %v5388, %v5434
    %v5436 = vsub.f32 1.0, %v5435
    %v5437 = vmul.f32 %v5434, %v5436
    %v5438 = vadd.f32 %v5434, %v5437
    %vm5439 = vweird.f32 %v5388
    %vm5440 = vweird.f32 %v5434
    %vm5441 = vmor %vm5439, %vm5440
    %v5442 = vsel %vm5441, %v5434, %v5438
    %v5443 = vand.u32 2147483647, %v5388
    %vm5444 = vcmp.eq.f32.partialorder %v5443, 8.507059e+37
    %v5445 = vand.u32 %v5388, 2147483648
    %v5446 = vor.u32 1.1754944e-38, %v5445
    %v5447 = vsel %vm5444, %v5446, %v5442
    %v5448 = vmul.f32 1.0, %v5447
    %v5449 = vtanh.pop %v5274
    %v5450 = vtanh.pop %v5277
    %v5451 = vtanh.pop %v5280
    %v5452 = vtanh.pop %v5283
    %v5453 = vxor.u32 %v5286, 2147483648
    %v5454 = vxor.u32 %v5289, 2147483648
    %v5455 = vxor.u32 %v5292, 2147483648
    %v5456 = vxor.u32 %v5295, 2147483648
    %v5457 = vmul.f32 %v5453, 1.442695
    %v5458 = vpow.pop %v5457
    %v5459 = vmul.f32 %v5454, 1.442695
    %v5460 = vpow.pop %v5459
    %v5461 = vmul.f32 %v5455, 1.442695
    %v5462 = vpow.pop %v5461
    %v5463 = vmul.f32 %v5456, 1.442695
    %v5464 = vpow.pop %v5463
    %v5465 = vadd.f32 %v5458, 1.0
    %v5466 = vadd.f32 %v5460, 1.0
    %v5467 = vadd.f32 %v5462, 1.0
    %v5468 = vadd.f32 %v5464, 1.0
    %v5469 = vrcp.pop %v5465
    %v5470 = vmul.f32 %v5465, %v5469
    %v5471 = vsub.f32 1.0, %v5470
    %v5472 = vmul.f32 %v5469, %v5471
    %v5473 = vadd.f32 %v5469, %v5472
    %vm5474 = vweird.f32 %v5465
    %vm5475 = vweird.f32 %v5469
    %vm5476 = vmor %vm5474, %vm5475
    %v5477 = vsel %vm5476, %v5469, %v5473
    %v5478 = vand.u32 2147483647, %v5465
    %vm5479 = vcmp.eq.f32.partialorder %v5478, 8.507059e+37
    %v5480 = vand.u32 %v5465, 2147483648
    %v5481 = vor.u32 1.1754944e-38, %v5480
    %v5482 = vsel %vm5479, %v5481, %v5477
    %v5483 = vmul.f32 1.0, %v5482
    %v5484 = vrcp.pop %v5466
    %v5485 = vmul.f32 %v5466, %v5484
    %v5486 = vsub.f32 1.0, %v5485
    %v5487 = vmul.f32 %v5484, %v5486
    %v5488 = vadd.f32 %v5484, %v5487
    %vm5489 = vweird.f32 %v5466
    %vm5490 = vweird.f32 %v5484
    %vm5491 = vmor %vm5489, %vm5490
    %v5492 = vsel %vm5491, %v5484, %v5488
    %v5493 = vand.u32 2147483647, %v5466
    %vm5494 = vcmp.eq.f32.partialorder %v5493, 8.507059e+37
    %v5495 = vand.u32 %v5466, 2147483648
    %v5496 = vor.u32 1.1754944e-38, %v5495
    %v5497 = vsel %vm5494, %v5496, %v5492
    %v5498 = vmul.f32 1.0, %v5497
    %v5499 = vrcp.pop %v5467
    %v5500 = vmul.f32 %v5467, %v5499
    %v5501 = vsub.f32 1.0, %v5500
    %v5502 = vmul.f32 %v5499, %v5501
    %v5503 = vadd.f32 %v5499, %v5502
    %vm5504 = vweird.f32 %v5467
    %vm5505 = vweird.f32 %v5499
    %vm5506 = vmor %vm5504, %vm5505
    %v5507 = vsel %vm5506, %v5499, %v5503
    %v5508 = vand.u32 2147483647, %v5467
    %vm5509 = vcmp.eq.f32.partialorder %v5508, 8.507059e+37
    %v5510 = vand.u32 %v5467, 2147483648
    %v5511 = vor.u32 1.1754944e-38, %v5510
    %v5512 = vsel %vm5509, %v5511, %v5507
    %v5513 = vmul.f32 1.0, %v5512
    %v5514 = vrcp.pop %v5468
    %v5515 = vmul.f32 %v5468, %v5514
    %v5516 = vsub.f32 1.0, %v5515
    %v5517 = vmul.f32 %v5514, %v5516
    %v5518 = vadd.f32 %v5514, %v5517
    %vm5519 = vweird.f32 %v5468
    %vm5520 = vweird.f32 %v5514
    %vm5521 = vmor %vm5519, %vm5520
    %v5522 = vsel %vm5521, %v5514, %v5518
    %v5523 = vand.u32 2147483647, %v5468
    %vm5524 = vcmp.eq.f32.partialorder %v5523, 8.507059e+37
    %v5525 = vand.u32 %v5468, 2147483648
    %v5526 = vor.u32 1.1754944e-38, %v5525
    %v5527 = vsel %vm5524, %v5526, %v5522
    %v5528 = vmul.f32 1.0, %v5527
    %v5529 = vmul.f32 %v5403, %v5168
    %v5530 = vmul.f32 %v5418, %v5169
    %v5531 = vmul.f32 %v5433, %v5170
    %v5532 = vmul.f32 %v5448, %v5171
    %v5533 = vmul.f32 %v5327, %v5449
    %v5534 = vmul.f32 %v5342, %v5450
    %v5535 = vmul.f32 %v5357, %v5451
    %v5536 = vmul.f32 %v5372, %v5452
    %v5537 = vadd.f32 %v5529, %v5533
    %v5538 = vadd.f32 %v5530, %v5534
    %v5539 = vadd.f32 %v5531, %v5535
    %v5540 = vadd.f32 %v5532, %v5536
    %v5541 = vtanh.pop %v5537
    %v5542 = vtanh.pop %v5538
    %v5543 = vtanh.pop %v5539
    %v5544 = vtanh.pop %v5540
    %v5545 = vmul.f32 %v5483, %v5541
    %v5546 = vmul.f32 %v5498, %v5542
    %v5547 = vmul.f32 %v5513, %v5543
    %v5548 = vmul.f32 %v5528, %v5544
    %v5549 = vmul.f32 %v5545, %v254
    %v5550 = vmul.f32 %v5546, %v259
    %v5551 = vmul.f32 %v5547, %v264
    %v5552 = vmul.f32 %v5548, %v269
    %v5553 = vsel %vm1348, %v5549, 0.0
    %v5554 = vsel %vm1348, %v5550, 0.0
    %v5555 = vadd.f32 %v5553, %v5554
    %v5556 = vsel %vm1348, %v5551, 0.0
    %v5557 = vadd.f32 %v5555, %v5556
    %v5558 = vsel %vm1348, %v5552, 0.0
    %v5559 = vadd.f32 %v5557, %v5558
    %v5560 = vrot.slane %v5559, 4
    %v5561 = vadd.f32 %v5559, %v5560
    %v5562 = vrot.slane %v5561, 2
    %v5563 = vadd.f32 %v5561, %v5562
    %v5564 = vrot.slane %v5563, 1
    %v5565 = vadd.f32 %v5563, %v5564
    %v5566 = vadd.f32 %v5565, %v277
    %v5567 = vmax.f32 %v5566, 0.0
    %5568 = vst.msk [vmem:[#allocation3 + $0x7] sm:$0x1] %vm1364, %v5567
    // Predicated region
    $region22: #{lstm_model_forward.1} parent=1 // pred_check
      _
    $region23: #{lstm_model_forward.1} parent=1 // pred_check_branch
      %5570 = sbr.rel (0) target = $region25
    $region24: #{lstm_model_forward.1} parent=1 // pred_region
      %5572 = vsyncadd [#allocation4], 0
      %s5574 = sshll.u32 [#allocation3], 4
      %s5575 = int_to_ptr.vmem [resolvable:$true] %s5574
      %s5576 = sshll.u32 %s5, 4
      %s5577 = int_to_ptr.hbm [resolvable:$true] %s5576
      %5579 = dma.vmem_to_hbm [thread:$0]  %s5575, 128, %s5577, [#allocation4]
    $region25: #{lstm_model_forward.1} parent=1 // pred_fallthru
      _
    // Predicated region
    $region26: #{lstm_model_forward.1} parent=1 // pred_check
      _
    $region27: #{lstm_model_forward.1} parent=1 // pred_check_branch
      %5581 = sbr.rel (0) target = $region29
    $region28: #{lstm_model_forward.1} parent=1 // pred_region
      %5583 = dma.done [#allocation4], 128
    $region29: #{lstm_model_forward.1} parent=1 // pred_fallthru
      _
    %5584 = vsyncpa [#allocation4], 1

</llo_original>
